<compile_context>
chip_gen: v6e
topology: v6e:2x2x1
jax: 0.10.0
libtpu: 0.0.40
codegen_flags: <defaults>
</compile_context>

<pallas_src>
import functools

import jax
import jax.numpy as jnp
from jax import lax
from jax.experimental import pallas as pl
from jax.experimental.pallas import tpu as pltpu


_LANE = 128


def _round_up(v, m):
    return ((v + m - 1) // m) * m


def _choose_block_rows(n, requested=None, *, bytes_per_row_elem=2, target_bytes=4 << 20):
    """Row-tile size: a multiple of 128 dividing n, keeping a row tile <= target_bytes."""
    if requested is not None:
        if n % requested != 0:
            raise ValueError(f"block_rows={requested} must divide N={n}")
        return requested
    if n % _LANE != 0:
        return n  # monolithic fallback: full-dim blocks always satisfy tiling rules
    cap = max(_LANE, (target_bytes // max(1, n * bytes_per_row_elem)) // _LANE * _LANE)
    best = _LANE
    t = _LANE
    while t <= min(n, cap):
        if n % t == 0:
            best = t
        t += _LANE
    return best


# ----------------------------------------------------------------------------
# Kernel 1: fused degrees + (adj + I) downcast.
#   Streams f32 adj row blocks once; emits
#     - A' = adj + I in bf16 (streamed back, lane-dense row blocks)
#     - d_row = rsqrt(rowsum(A'))          (exact, f32)
#     - d_col = rsqrt(colsum(A'))          (MXU ones-matmul, accumulated)
#   Grid axis is "arbitrary" because the colsum output accumulates across blocks.
# ----------------------------------------------------------------------------
def _degree_augment_kernel(adj_ref, adji_ref, drow_ref, dcol_ref):
    i = pl.program_id(0)
    bm = adj_ref.shape[0]

    a = adj_ref[...]                                           # (bm, N) f32
    # Fused +I: add 1.0 on the diagonal entries belonging to this row block.
    rows = lax.broadcasted_iota(jnp.int32, a.shape, 0) + i * bm
    cols = lax.broadcasted_iota(jnp.int32, a.shape, 1)
    a = jnp.where(rows == cols, a + 1.0, a)                    # A' block, f32
    a_lo = a.astype(adji_ref.dtype)                            # bf16 copy
    adji_ref[...] = a_lo

    # Row degrees: exact f32 lane reduction (XLU slot; kernel is HBM-bound).
    rowsum = jnp.sum(a, axis=1, keepdims=True)
    drow_ref[...] = jnp.where(rowsum > 0.0, lax.rsqrt(rowsum), 0.0)

    # Column degrees: ones-row matmul on the MXU, accumulated into the
    # resident (8, N) output block across row blocks.
    @pl.when(i == 0)
    def _init():
        dcol_ref[...] = jnp.zeros_like(dcol_ref)

    ones_rows = jnp.ones((8, bm), dtype=a_lo.dtype)
    dcol_ref[...] += jnp.dot(ones_rows, a_lo, preferred_element_type=jnp.float32)

    @pl.when(i == pl.num_programs(0) - 1)
    def _finalize():
        colsum = dcol_ref[...]
        dcol_ref[...] = jnp.where(colsum > 0.0, lax.rsqrt(colsum), 0.0)


def _degrees_and_augment(adj_f32, block_rows, compute_dtype):
    n = adj_f32.shape[0]
    nb = n // block_rows
    return pl.pallas_call(
        _degree_augment_kernel,
        out_shape=(jax.ShapeDtypeStruct((n, n), compute_dtype),
                   jax.ShapeDtypeStruct((n, 1), jnp.float32),
                   jax.ShapeDtypeStruct((8, n), jnp.float32)),
        grid=(nb,),
        in_specs=[pl.BlockSpec((block_rows, n), lambda i: (i, 0))],
        out_specs=(pl.BlockSpec((block_rows, n), lambda i: (i, 0)),
                   pl.BlockSpec((block_rows, 1), lambda i: (i, 0)),
                   pl.BlockSpec((8, n), lambda i: (0, 0))),
        compiler_params=pltpu.CompilerParams(
            dimension_semantics=("arbitrary",)),
    )(adj_f32)


# ----------------------------------------------------------------------------
# Kernel 2: projection.  out = d_col * (feat @ W)   (rows scaled by d_col)
# ----------------------------------------------------------------------------
def _project_kernel(x_ref, w_ref, scale_ref, out_ref):
    s = jnp.dot(x_ref[...], w_ref[...], preferred_element_type=jnp.float32)
    out_ref[...] = (scale_ref[...] * s).astype(out_ref.dtype)


def _project(feat, w_pad, scale, block_rows, out_dtype):
    n, f = feat.shape
    p = w_pad.shape[1]
    nb = n // block_rows
    return pl.pallas_call(
        _project_kernel,
        out_shape=jax.ShapeDtypeStruct((n, p), out_dtype),
        grid=(nb,),
        in_specs=[pl.BlockSpec((block_rows, f), lambda i: (i, 0)),
                  pl.BlockSpec((f, p), lambda i: (0, 0)),           # weights resident
                  pl.BlockSpec((block_rows, 1), lambda i: (i, 0))],
        out_specs=pl.BlockSpec((block_rows, p), lambda i: (i, 0)),
        compiler_params=pltpu.CompilerParams(
            dimension_semantics=("parallel",)),
    )(feat, w_pad, scale)


# ----------------------------------------------------------------------------
# Kernel 3: propagation.  out = d_row * (A' @ S')  with S' = d_col * S.
#   A' row blocks stream from HBM (bf16, includes +I); S' stays resident.
# ----------------------------------------------------------------------------
def _propagate_kernel(adji_ref, sc_ref, drow_ref, out_ref):
    acc = jnp.dot(adji_ref[...], sc_ref[...],
                  preferred_element_type=jnp.float32)           # MXU, f32 accumulate
    out_ref[...] = (drow_ref[...] * acc).astype(out_ref.dtype)


def _propagate(adj_aug, s_c, d_row, block_rows, out_dtype=jnp.float32):
    n = adj_aug.shape[0]
    p = s_c.shape[1]
    nb = n // block_rows
    return pl.pallas_call(
        _propagate_kernel,
        out_shape=jax.ShapeDtypeStruct((n, p), out_dtype),
        grid=(nb,),
        in_specs=[pl.BlockSpec((block_rows, n), lambda i: (i, 0)),   # A' row block (streams)
                  pl.BlockSpec((n, p), lambda i: (0, 0)),            # d_col*S, resident
                  pl.BlockSpec((block_rows, 1), lambda i: (i, 0))],  # d_row rows
        out_specs=pl.BlockSpec((block_rows, p), lambda i: (i, 0)),
        compiler_params=pltpu.CompilerParams(
            dimension_semantics=("parallel",)),                      # megacore on v7x
    )(adj_aug, s_c, d_row)


# ----------------------------------------------------------------------------
# Forward wrapper
# ----------------------------------------------------------------------------
def gcn_decor_forward(adj, x, w1, w2, *, compute_dtype=jnp.bfloat16, block_rows=None):
    """GCNDecor.forward hot path.  w1: [hid, in], w2: [n_classes, hid] (torch Linear)."""
    n = adj.shape[0]
    f = x.shape[1]
    hid = w1.shape[0]
    ncls = w2.shape[0]
    p_h = _round_up(hid, _LANE)
    p_c = _round_up(ncls, _LANE)

    # Zero-pad hidden/class dims to 128 lanes -> lane-dense kernel outputs.
    w1t = jnp.zeros((f, p_h), jnp.float32).at[:, :hid].set(w1.T.astype(jnp.float32))
    w2t = jnp.zeros((p_h, p_c), jnp.float32).at[:hid, :ncls].set(w2.T.astype(jnp.float32))

    lo_bytes = jnp.dtype(compute_dtype).itemsize
    # Degree/cast kernel holds an f32 input tile and a bf16 output tile.
    bm_deg = _choose_block_rows(n, block_rows, bytes_per_row_elem=4 + lo_bytes)
    # Propagation kernels stream only the bf16 A' tile.
    bm_prop = _choose_block_rows(n, block_rows, bytes_per_row_elem=lo_bytes)

    adj_aug, d_row, d_col8 = _degrees_and_augment(
        adj.astype(jnp.float32), bm_deg, compute_dtype)          # (N,N) bf16, (N,1), (8,N)
    d_col = d_col8[0].reshape(n, 1)                              # (N,1) f32

    s1c = _project(x.astype(jnp.float32), w1t, d_col, bm_prop, compute_dtype)  # d_col*(x@W1^T)
    h = _propagate(adj_aug, s1c, d_row, bm_prop)                                # layer-1, f32
    # TODO(synk): training-mode dropout(0.5) between layers (identity under net.eval()).
    s2c = _project(h, w2t, d_col, bm_prop, compute_dtype)                       # d_col*(h@W2^T)
    out = _propagate(adj_aug, s2c, d_row, bm_prop)                              # layer-2, f32
    return out[:, :ncls]


# ----------------------------------------------------------------------------
# Dead-code branch of the original forward (adj_mask): its result never feeds
# the returned output, so it is NOT executed by default.
# TODO(synk): the `MLP` class is undefined in the source file; assumed
#             Linear(3, mlp_width) -> ReLU -> Linear(mlp_width, 2).
# ----------------------------------------------------------------------------
def adj_mask_branch(adj, xdeg, ydeg, m1, b1, m2, b2):
    feats = jnp.stack(
        [adj.reshape(-1), xdeg.reshape(-1), ydeg.reshape(-1)], axis=1)  # [N*N, 3]
    hh = jax.nn.relu(feats @ m1.T + b1)
    logits = hh @ m2.T + b2
    vals = jax.nn.softmax(logits, axis=-1)[:, 1]
    return jnp.where(adj.reshape(-1) != 0, vals, 0.0).reshape(adj.shape)


# ----------------------------------------------------------------------------
# Pure-JAX f32 reference for correctness checking
# ----------------------------------------------------------------------------
def gcn_decor_ref(adj, x, w1, w2):
    n = adj.shape[0]
    a = adj + jnp.eye(n, dtype=adj.dtype)
    rowsum = jnp.sum(a, axis=1)
    colsum = jnp.sum(a, axis=0)
    d_row = jnp.where(rowsum > 0, rowsum ** -0.5, 0.0)
    d_col = jnp.where(colsum > 0, colsum ** -0.5, 0.0)
    a_norm = d_row[:, None] * a * d_col[None, :]
    h = a_norm @ (x @ w1.T)
    return a_norm @ (h @ w2.T)


if __name__ == "__main__":
    # Small shapes consistent with the module; N=512 with 128-row tiles so the
    # pipelined multi-block path (grid=(4,)) and colsum accumulation are exercised.
    N, IN_DIM, HID_DIM, N_CLASSES = 512, 16, 32, 8

    key = jax.random.PRNGKey(0)
    k_adj, k_x, k_w1, k_w2 = jax.random.split(key, 4)

    # symmetric binary adjacency, no self loops (forward adds +I itself)
    upper = (jax.random.uniform(k_adj, (N, N)) < 0.05).astype(jnp.float32)
    adj = jnp.triu(upper, 1)
    adj = adj + adj.T

    x = jax.random.normal(k_x, (N, IN_DIM), dtype=jnp.float32)
    w1 = jax.random.normal(k_w1, (HID_DIM, IN_DIM), dtype=jnp.float32) * 0.1
    w2 = jax.random.normal(k_w2, (N_CLASSES, HID_DIM), dtype=jnp.float32) * 0.1

    fwd = jax.jit(functools.partial(gcn_decor_forward, block_rows=128))
    out = jax.block_until_ready(fwd(adj, x, w1, w2))

    ref = gcn_decor_ref(adj, x, w1, w2)
    assert out.shape == (N, N_CLASSES)
    rel_err = jnp.linalg.norm(out - ref) / jnp.linalg.norm(ref)
    assert rel_err < 2e-2, f"relative error too large: {rel_err}"

    print("KERNEL_OK")
</pallas_src>

<mosaic_0001>
module attributes {stable_mosaic.version = 11 : i64} {
  func.func @_degree_augment_kernel(%arg0: i32, %arg1: memref<128x512xf32, #tpu.memory_space<vmem>>, %arg2: memref<128x512xbf16, #tpu.memory_space<vmem>>, %arg3: memref<128x1xf32, #tpu.memory_space<vmem>>, %arg4: memref<8x512xf32, #tpu.memory_space<vmem>>) attributes {dimension_semantics = [#tpu.dimension_semantics<arbitrary>], iteration_bounds = array<i64: 4>, scalar_prefetch = 0 : i64, scratch_operands = 0 : i64, tpu.core_type = #tpu.core_type<tc>, window_params = [{transform_indices = @transform_0, window_bounds = array<i64: 128, 512>}, {transform_indices = @transform_1, window_bounds = array<i64: 128, 512>}, {transform_indices = @transform_2, window_bounds = array<i64: 128, 1>}, {pipeline_mode = #tpu.pipeline_mode<synchronous>, transform_indices = @transform_3, window_bounds = array<i64: 8, 512>}]} {
    %c0 = arith.constant 0 : index
    %c0_0 = arith.constant 0 : index
    %0 = vector.load %arg1[%c0, %c0_0] : memref<128x512xf32, #tpu.memory_space<vmem>>, vector<128x512xf32>
    %1 = tpu.iota {dimensions = array<i32: 0>} : vector<128x512xi32>
    %c128_i32 = arith.constant 128 : i32
    %2 = arith.muli %arg0, %c128_i32 : i32
    %3 = vector.broadcast %2 : i32 to vector<128x512xi32>
    %4 = arith.addi %1, %3 : vector<128x512xi32>
    %5 = tpu.iota {dimensions = array<i32: 1>} : vector<128x512xi32>
    %6 = arith.cmpi eq, %4, %5 : vector<128x512xi32>
    %cst = arith.constant 1.000000e+00 : f32
    %7 = vector.broadcast %cst : f32 to vector<128x512xf32>
    %8 = arith.addf %0, %7 : vector<128x512xf32>
    %9 = arith.select %6, %8, %0 : vector<128x512xi1>, vector<128x512xf32>
    %10 = arith.truncf %9 : vector<128x512xf32> to vector<128x512xbf16>
    %c0_1 = arith.constant 0 : index
    %c0_2 = arith.constant 0 : index
    %11 = vector.load %arg2[%c0_1, %c0_2] : memref<128x512xbf16, #tpu.memory_space<vmem>>, vector<128x512xbf16>
    tpu.vector_store %arg2[%c0_1, %c0_2], %10 {strides = array<i32>} : memref<128x512xbf16, #tpu.memory_space<vmem>>, vector<128x512xbf16>,
    %cst_3 = arith.constant dense<0.000000e+00> : vector<128xf32>
    %12 = vector.multi_reduction <add>, %9, %cst_3 [1] : vector<128x512xf32> to vector<128xf32>
    %13 = vector.shape_cast %12 : vector<128xf32> to vector<128x1xf32>
    %cst_4 = arith.constant 0.000000e+00 : f32
    %14 = vector.broadcast %cst_4 : f32 to vector<128x1xf32>
    %15 = arith.cmpf ogt, %13, %14 : vector<128x1xf32>
    %16 = math.rsqrt %13 : vector<128x1xf32>
    %cst_5 = arith.constant 0.000000e+00 : f32
    %17 = vector.broadcast %cst_5 : f32 to vector<128x1xf32>
    %18 = arith.select %15, %16, %17 : vector<128x1xi1>, vector<128x1xf32>
    %c0_6 = arith.constant 0 : index
    %c0_7 = arith.constant 0 : index
    %19 = vector.load %arg3[%c0_6, %c0_7] : memref<128x1xf32, #tpu.memory_space<vmem>>, vector<128x1xf32>
    tpu.vector_store %arg3[%c0_6, %c0_7], %18 {strides = array<i32>} : memref<128x1xf32, #tpu.memory_space<vmem>>, vector<128x1xf32>,
    %c0_i32 = arith.constant 0 : i32
    %20 = arith.cmpi eq, %arg0, %c0_i32 : i32
    %21 = arith.extui %20 : i1 to i32
    %c0_i32_8 = arith.constant 0 : i32
    %22 = arith.cmpi ne, %21, %c0_i32_8 : i32
    scf.if %22 {
      %cst_16 = arith.constant 0.000000e+00 : f32
      %31 = vector.broadcast %cst_16 : f32 to vector<8x512xf32>
      %c0_17 = arith.constant 0 : index
      %c0_18 = arith.constant 0 : index
      %32 = vector.load %arg4[%c0_17, %c0_18] : memref<8x512xf32, #tpu.memory_space<vmem>>, vector<8x512xf32>
      tpu.vector_store %arg4[%c0_17, %c0_18], %31 {strides = array<i32>} : memref<8x512xf32, #tpu.memory_space<vmem>>, vector<8x512xf32>,
    } else {
    }
    %cst_9 = arith.constant 1.000000e+00 : bf16
    %23 = vector.broadcast %cst_9 : bf16 to vector<8x128xbf16>
    %c0_10 = arith.constant 0 : index
    %c0_11 = arith.constant 0 : index
    %24 = vector.load %arg4[%c0_10, %c0_11] : memref<8x512xf32, #tpu.memory_space<vmem>>, vector<8x512xf32>
    %cst_12 = arith.constant dense<0.000000e+00> : vector<8x512xf32>
    %25 = tpu.matmul %23, %10, %cst_12 {dimension_numbers = #tpu.dot_dimension_numbers<[1], [0], [0], [1], [0, 0, 1, 1], [], []>} : vector<8x128xbf16>, vector<128x512xbf16>, vector<8x512xf32> -> vector<8x512xf32>
    %26 = arith.addf %24, %25 : vector<8x512xf32>
    %c0_13 = arith.constant 0 : index
    %c0_14 = arith.constant 0 : index
    %27 = vector.load %arg4[%c0_13, %c0_14] : memref<8x512xf32, #tpu.memory_space<vmem>>, vector<8x512xf32>
    tpu.vector_store %arg4[%c0_13, %c0_14], %26 {strides = array<i32>} : memref<8x512xf32, #tpu.memory_space<vmem>>, vector<8x512xf32>,
    %c3_i32 = arith.constant 3 : i32
    %28 = arith.cmpi eq, %arg0, %c3_i32 : i32
    %29 = arith.extui %28 : i1 to i32
    %c0_i32_15 = arith.constant 0 : i32
    %30 = arith.cmpi ne, %29, %c0_i32_15 : i32
    scf.if %30 {
      %c0_16 = arith.constant 0 : index
      %c0_17 = arith.constant 0 : index
      %31 = vector.load %arg4[%c0_16, %c0_17] : memref<8x512xf32, #tpu.memory_space<vmem>>, vector<8x512xf32>
      %cst_18 = arith.constant 0.000000e+00 : f32
      %32 = vector.broadcast %cst_18 : f32 to vector<8x512xf32>
      %33 = arith.cmpf ogt, %31, %32 : vector<8x512xf32>
      %34 = math.rsqrt %31 : vector<8x512xf32>
      %cst_19 = arith.constant 0.000000e+00 : f32
      %35 = vector.broadcast %cst_19 : f32 to vector<8x512xf32>
      %36 = arith.select %33, %34, %35 : vector<8x512xi1>, vector<8x512xf32>
      %c0_20 = arith.constant 0 : index
      %c0_21 = arith.constant 0 : index
      %37 = vector.load %arg4[%c0_20, %c0_21] : memref<8x512xf32, #tpu.memory_space<vmem>>, vector<8x512xf32>
      tpu.vector_store %arg4[%c0_20, %c0_21], %36 {strides = array<i32>} : memref<8x512xf32, #tpu.memory_space<vmem>>, vector<8x512xf32>,
    } else {
    }
    return
  }
  func.func @transform_0(%arg0: i32) -> (i32, i32) {
    %c0_i32 = arith.constant 0 : i32
    %c0_i32_0 = arith.constant 0 : i32
    return %arg0, %c0_i32 : i32, i32
  }
  func.func @transform_1(%arg0: i32) -> (i32, i32) {
    %c0_i32 = arith.constant 0 : i32
    %c0_i32_0 = arith.constant 0 : i32
    return %arg0, %c0_i32 : i32, i32
  }
  func.func @transform_2(%arg0: i32) -> (i32, i32) {
    %c0_i32 = arith.constant 0 : i32
    %c0_i32_0 = arith.constant 0 : i32
    return %arg0, %c0_i32 : i32, i32
  }
  func.func @transform_3(%arg0: i32) -> (i32, i32) {
    %c0_i32 = arith.constant 0 : i32
    %c0_i32_0 = arith.constant 0 : i32
    %c0_i32_1 = arith.constant 0 : i32
    return %c0_i32, %c0_i32_0 : i32, i32
  }
}

module attributes {stable_mosaic.version = 11 : i64} {
  func.func @_propagate_kernel(%arg0: i32, %arg1: memref<128x512xbf16, #tpu.memory_space<vmem>>, %arg2: memref<512x128xbf16, #tpu.memory_space<vmem>>, %arg3: memref<128x1xf32, #tpu.memory_space<vmem>>, %arg4: memref<128x128xf32, #tpu.memory_space<vmem>>) attributes {dimension_semantics = [#tpu.dimension_semantics<parallel>], iteration_bounds = array<i64: 4>, scalar_prefetch = 0 : i64, scratch_operands = 0 : i64, tpu.core_type = #tpu.core_type<tc>, window_params = [{transform_indices = @transform_0, window_bounds = array<i64: 128, 512>}, {pipeline_mode = #tpu.pipeline_mode<synchronous>, transform_indices = @transform_1, window_bounds = array<i64: 512, 128>}, {transform_indices = @transform_2, window_bounds = array<i64: 128, 1>}, {transform_indices = @transform_3, window_bounds = array<i64: 128, 128>}]} {
    %c0 = arith.constant 0 : index
    %c0_0 = arith.constant 0 : index
    %0 = vector.load %arg1[%c0, %c0_0] : memref<128x512xbf16, #tpu.memory_space<vmem>>, vector<128x512xbf16>
    %c0_1 = arith.constant 0 : index
    %c0_2 = arith.constant 0 : index
    %1 = vector.load %arg2[%c0_1, %c0_2] : memref<512x128xbf16, #tpu.memory_space<vmem>>, vector<512x128xbf16>
    %cst = arith.constant dense<0.000000e+00> : vector<128x128xf32>
    %2 = tpu.matmul %0, %1, %cst {dimension_numbers = #tpu.dot_dimension_numbers<[1], [0], [0], [1], [0, 0, 1, 1], [], []>} : vector<128x512xbf16>, vector<512x128xbf16>, vector<128x128xf32> -> vector<128x128xf32>
    %c0_3 = arith.constant 0 : index
    %c0_4 = arith.constant 0 : index
    %3 = vector.load %arg3[%c0_3, %c0_4] : memref<128x1xf32, #tpu.memory_space<vmem>>, vector<128x1xf32>
    %4 = vector.broadcast %3 : vector<128x1xf32> to vector<128x128xf32>
    %5 = arith.mulf %4, %2 : vector<128x128xf32>
    %c0_5 = arith.constant 0 : index
    %c0_6 = arith.constant 0 : index
    %6 = vector.load %arg4[%c0_5, %c0_6] : memref<128x128xf32, #tpu.memory_space<vmem>>, vector<128x128xf32>
    tpu.vector_store %arg4[%c0_5, %c0_6], %5 {strides = array<i32>} : memref<128x128xf32, #tpu.memory_space<vmem>>, vector<128x128xf32>,
    return
  }
  func.func @transform_0(%arg0: i32) -> (i32, i32) {
    %c0_i32 = arith.constant 0 : i32
    %c0_i32_0 = arith.constant 0 : i32
    return %arg0, %c0_i32 : i32, i32
  }
  func.func @transform_1(%arg0: i32) -> (i32, i32) {
    %c0_i32 = arith.constant 0 : i32
    %c0_i32_0 = arith.constant 0 : i32
    %c0_i32_1 = arith.constant 0 : i32
    return %c0_i32, %c0_i32_0 : i32, i32
  }
  func.func @transform_2(%arg0: i32) -> (i32, i32) {
    %c0_i32 = arith.constant 0 : i32
    %c0_i32_0 = arith.constant 0 : i32
    return %arg0, %c0_i32 : i32, i32
  }
  func.func @transform_3(%arg0: i32) -> (i32, i32) {
    %c0_i32 = arith.constant 0 : i32
    %c0_i32_0 = arith.constant 0 : i32
    return %arg0, %c0_i32 : i32, i32
  }
}

module attributes {stable_mosaic.version = 11 : i64} {
  func.func @_project_kernel(%arg0: i32, %arg1: memref<128x16xf32, #tpu.memory_space<vmem>>, %arg2: memref<16x128xf32, #tpu.memory_space<vmem>>, %arg3: memref<128x1xf32, #tpu.memory_space<vmem>>, %arg4: memref<128x128xbf16, #tpu.memory_space<vmem>>) attributes {dimension_semantics = [#tpu.dimension_semantics<parallel>], iteration_bounds = array<i64: 4>, scalar_prefetch = 0 : i64, scratch_operands = 0 : i64, tpu.core_type = #tpu.core_type<tc>, window_params = [{transform_indices = @transform_0, window_bounds = array<i64: 128, 16>}, {pipeline_mode = #tpu.pipeline_mode<synchronous>, transform_indices = @transform_1, window_bounds = array<i64: 16, 128>}, {transform_indices = @transform_2, window_bounds = array<i64: 128, 1>}, {transform_indices = @transform_3, window_bounds = array<i64: 128, 128>}]} {
    %c0 = arith.constant 0 : index
    %c0_0 = arith.constant 0 : index
    %0 = vector.load %arg1[%c0, %c0_0] : memref<128x16xf32, #tpu.memory_space<vmem>>, vector<128x16xf32>
    %c0_1 = arith.constant 0 : index
    %c0_2 = arith.constant 0 : index
    %1 = vector.load %arg2[%c0_1, %c0_2] : memref<16x128xf32, #tpu.memory_space<vmem>>, vector<16x128xf32>
    %cst = arith.constant dense<0.000000e+00> : vector<128x128xf32>
    %2 = tpu.matmul %0, %1, %cst {dimension_numbers = #tpu.dot_dimension_numbers<[1], [0], [0], [1], [0, 0, 1, 1], [], []>} : vector<128x16xf32>, vector<16x128xf32>, vector<128x128xf32> -> vector<128x128xf32>
    %c0_3 = arith.constant 0 : index
    %c0_4 = arith.constant 0 : index
    %3 = vector.load %arg3[%c0_3, %c0_4] : memref<128x1xf32, #tpu.memory_space<vmem>>, vector<128x1xf32>
    %4 = vector.broadcast %3 : vector<128x1xf32> to vector<128x128xf32>
    %5 = arith.mulf %4, %2 : vector<128x128xf32>
    %6 = arith.truncf %5 : vector<128x128xf32> to vector<128x128xbf16>
    %c0_5 = arith.constant 0 : index
    %c0_6 = arith.constant 0 : index
    %7 = vector.load %arg4[%c0_5, %c0_6] : memref<128x128xbf16, #tpu.memory_space<vmem>>, vector<128x128xbf16>
    tpu.vector_store %arg4[%c0_5, %c0_6], %6 {strides = array<i32>} : memref<128x128xbf16, #tpu.memory_space<vmem>>, vector<128x128xbf16>,
    return
  }
  func.func @transform_0(%arg0: i32) -> (i32, i32) {
    %c0_i32 = arith.constant 0 : i32
    %c0_i32_0 = arith.constant 0 : i32
    return %arg0, %c0_i32 : i32, i32
  }
  func.func @transform_1(%arg0: i32) -> (i32, i32) {
    %c0_i32 = arith.constant 0 : i32
    %c0_i32_0 = arith.constant 0 : i32
    %c0_i32_1 = arith.constant 0 : i32
    return %c0_i32, %c0_i32_0 : i32, i32
  }
  func.func @transform_2(%arg0: i32) -> (i32, i32) {
    %c0_i32 = arith.constant 0 : i32
    %c0_i32_0 = arith.constant 0 : i32
    return %arg0, %c0_i32 : i32, i32
  }
  func.func @transform_3(%arg0: i32) -> (i32, i32) {
    %c0_i32 = arith.constant 0 : i32
    %c0_i32_0 = arith.constant 0 : i32
    return %arg0, %c0_i32 : i32, i32
  }
}

module attributes {stable_mosaic.version = 11 : i64} {
  func.func @_project_kernel(%arg0: i32, %arg1: memref<128x128xf32, #tpu.memory_space<vmem>>, %arg2: memref<128x128xf32, #tpu.memory_space<vmem>>, %arg3: memref<128x1xf32, #tpu.memory_space<vmem>>, %arg4: memref<128x128xbf16, #tpu.memory_space<vmem>>) attributes {dimension_semantics = [#tpu.dimension_semantics<parallel>], iteration_bounds = array<i64: 4>, scalar_prefetch = 0 : i64, scratch_operands = 0 : i64, tpu.core_type = #tpu.core_type<tc>, window_params = [{transform_indices = @transform_0, window_bounds = array<i64: 128, 128>}, {pipeline_mode = #tpu.pipeline_mode<synchronous>, transform_indices = @transform_1, window_bounds = array<i64: 128, 128>}, {transform_indices = @transform_2, window_bounds = array<i64: 128, 1>}, {transform_indices = @transform_3, window_bounds = array<i64: 128, 128>}]} {
    %c0 = arith.constant 0 : index
    %c0_0 = arith.constant 0 : index
    %0 = vector.load %arg1[%c0, %c0_0] : memref<128x128xf32, #tpu.memory_space<vmem>>, vector<128x128xf32>
    %c0_1 = arith.constant 0 : index
    %c0_2 = arith.constant 0 : index
    %1 = vector.load %arg2[%c0_1, %c0_2] : memref<128x128xf32, #tpu.memory_space<vmem>>, vector<128x128xf32>
    %cst = arith.constant dense<0.000000e+00> : vector<128x128xf32>
    %2 = tpu.matmul %0, %1, %cst {dimension_numbers = #tpu.dot_dimension_numbers<[1], [0], [0], [1], [0, 0, 1, 1], [], []>} : vector<128x128xf32>, vector<128x128xf32>, vector<128x128xf32> -> vector<128x128xf32>
    %c0_3 = arith.constant 0 : index
    %c0_4 = arith.constant 0 : index
    %3 = vector.load %arg3[%c0_3, %c0_4] : memref<128x1xf32, #tpu.memory_space<vmem>>, vector<128x1xf32>
    %4 = vector.broadcast %3 : vector<128x1xf32> to vector<128x128xf32>
    %5 = arith.mulf %4, %2 : vector<128x128xf32>
    %6 = arith.truncf %5 : vector<128x128xf32> to vector<128x128xbf16>
    %c0_5 = arith.constant 0 : index
    %c0_6 = arith.constant 0 : index
    %7 = vector.load %arg4[%c0_5, %c0_6] : memref<128x128xbf16, #tpu.memory_space<vmem>>, vector<128x128xbf16>
    tpu.vector_store %arg4[%c0_5, %c0_6], %6 {strides = array<i32>} : memref<128x128xbf16, #tpu.memory_space<vmem>>, vector<128x128xbf16>,
    return
  }
  func.func @transform_0(%arg0: i32) -> (i32, i32) {
    %c0_i32 = arith.constant 0 : i32
    %c0_i32_0 = arith.constant 0 : i32
    return %arg0, %c0_i32 : i32, i32
  }
  func.func @transform_1(%arg0: i32) -> (i32, i32) {
    %c0_i32 = arith.constant 0 : i32
    %c0_i32_0 = arith.constant 0 : i32
    %c0_i32_1 = arith.constant 0 : i32
    return %c0_i32, %c0_i32_0 : i32, i32
  }
  func.func @transform_2(%arg0: i32) -> (i32, i32) {
    %c0_i32 = arith.constant 0 : i32
    %c0_i32_0 = arith.constant 0 : i32
    return %arg0, %c0_i32 : i32, i32
  }
  func.func @transform_3(%arg0: i32) -> (i32, i32) {
    %c0_i32 = arith.constant 0 : i32
    %c0_i32_0 = arith.constant 0 : i32
    return %arg0, %c0_i32 : i32, i32
  }
}

</mosaic_0001>

<llo_original>
// kernel: gcn_decor_forward.6
$region0: #{gcn_decor_forward.6}
  #allocation0 [shape = 'u32[]', space=smem, size = 0x4, offset = 0x4, fixed_abs, tag = 'smem constant byte address 0x4 - core index']
  #allocation1 [shape = 'u32[144,128]{1,0:T(1,128)}', space=vmem, size = 0x12000, scoped, tag = 'internal scratch']
  %s0 = inlined_call_operand.vmem [shape: f32[512,16], index: 0, kind: input, shape index: {}]
  %s1 = inlined_call_operand.vmem [shape: f32[16,128], index: 1, kind: input, shape index: {}]
  %s2 = inlined_call_operand.vmem [shape: f32[512,1], index: 2, kind: input, shape index: {}]
  %s3 = inlined_call_operand.vmem [shape: bf16[512,128], index: 3, kind: output, shape index: {}]
  %s4 = sld [smem:[#allocation0]]
  $region45: #{gcn_decor_forward.6} parent=0
    _
  %s6 = ssub.s32 1, %s4
  %s7 = scalar_select 0, %s6, %s4
  loop: start=0, step=1, limit=6
  $region2: #{gcn_decor_forward.6} parent=0 // loop_pre_header
    _
  $region3: #{gcn_decor_forward.6} parent=0 // loop_header
    %s9 = sphi 0, %s13
    %p10 = scmp.ge.s32.totalorder %s9, 6
    %s19 = sphi 0, %s21
    %s22 = sphi 0, %s19
    %s23 = sphi 0, %s22
    %s39 = sphi 0, %s23
    %s43 = sphi 0, %s43
    %s45 = sphi 0, %s43
    %s46 = sphi 0, %s45
    %s60 = sphi 0, %s46
    %s66 = sphi 0, %s68
    %s69 = sphi 0, %s66
    %s70 = sphi 0, %s69
    %s86 = sphi 0, %s70
    %s92 = sphi 0, %s94
    %s95 = sphi 0, %s92
    %s96 = sphi 0, %s95
    %s112 = sphi 0, %s96
  $region4: #{gcn_decor_forward.6} parent=0 // loop_header_branch
    %12 = sbr.rel (%p10) target = $region8
  $region5: #{gcn_decor_forward.6} parent=0 // loop_body
    %s14 = ssub.s32 %s9, 1
    %s15 = ssub.s32 %s9, 2
    %s16 = sadd.s32 %s9, 1
    %s17 = ssub.s32 %s9, %s16
    %p18 = scmp.eq.s32.totalorder %s17, 0
    %s20 = sadd.s32 %s19, 1
    %s21 = scalar_select %p18, %s19, %s20
    %p24 = pneg %p18
    %p25 = scmp.eq.s32.totalorder %s9, 3
    %p26 = por %p24, %p25
    %p27 = scmp.ne.s32.totalorder %s19, %s22
    %p28 = scmp.eq.s32.totalorder %s9, 0
    %p29 = por %p27, %p28
    %p30 = scmp.ne.s32.totalorder %s19, %s22
    %p31 = scmp.eq.s32.totalorder %s14, 3
    %p32 = por %p30, %p31
    %p33 = scmp.ne.s32.totalorder %s22, %s23
    %p34 = scmp.eq.s32.totalorder %s14, 0
    %p35 = por %p33, %p34
    %p36 = scmp.ne.s32.totalorder %s22, %s23
    %p37 = scmp.eq.s32.totalorder %s15, 3
    %p38 = por %p36, %p37
    %p40 = scmp.ne.s32.totalorder %s23, %s39
    %p41 = scmp.eq.s32.totalorder %s15, 0
    %p42 = por %p40, %p41
    %s44 = sadd.s32 %s43, 1
    %p47 = scmp.eq.s32.totalorder %s9, 3
    %p48 = scmp.ne.s32.totalorder %s43, %s45
    %p49 = scmp.eq.s32.totalorder %s9, 0
    %p50 = por %p48, %p49
    %p51 = scmp.ne.s32.totalorder %s43, %s45
    %p52 = scmp.eq.s32.totalorder %s14, 3
    %p53 = por %p51, %p52
    %p54 = scmp.ne.s32.totalorder %s45, %s46
    %p55 = scmp.eq.s32.totalorder %s14, 0
    %p56 = por %p54, %p55
    %p57 = scmp.ne.s32.totalorder %s45, %s46
    %p58 = scmp.eq.s32.totalorder %s15, 3
    %p59 = por %p57, %p58
    %p61 = scmp.ne.s32.totalorder %s46, %s60
    %p62 = scmp.eq.s32.totalorder %s15, 0
    %p63 = por %p61, %p62
    %s64 = ssub.s32 %s9, %s16
    %p65 = scmp.eq.s32.totalorder %s64, 0
    %s67 = sadd.s32 %s66, 1
    %s68 = scalar_select %p65, %s66, %s67
    %p71 = pneg %p65
    %p72 = scmp.eq.s32.totalorder %s9, 3
    %p73 = por %p71, %p72
    %p74 = scmp.ne.s32.totalorder %s66, %s69
    %p75 = scmp.eq.s32.totalorder %s9, 0
    %p76 = por %p74, %p75
    %p77 = scmp.ne.s32.totalorder %s66, %s69
    %p78 = scmp.eq.s32.totalorder %s14, 3
    %p79 = por %p77, %p78
    %p80 = scmp.ne.s32.totalorder %s69, %s70
    %p81 = scmp.eq.s32.totalorder %s14, 0
    %p82 = por %p80, %p81
    %p83 = scmp.ne.s32.totalorder %s69, %s70
    %p84 = scmp.eq.s32.totalorder %s15, 3
    %p85 = por %p83, %p84
    %p87 = scmp.ne.s32.totalorder %s70, %s86
    %p88 = scmp.eq.s32.totalorder %s15, 0
    %p89 = por %p87, %p88
    %s90 = ssub.s32 %s9, %s16
    %p91 = scmp.eq.s32.totalorder %s90, 0
    %s93 = sadd.s32 %s92, 1
    %s94 = scalar_select %p91, %s92, %s93
    %p97 = pneg %p91
    %p98 = scmp.eq.s32.totalorder %s9, 3
    %p99 = por %p97, %p98
    %p100 = scmp.ne.s32.totalorder %s92, %s95
    %p101 = scmp.eq.s32.totalorder %s9, 0
    %p102 = por %p100, %p101
    %p103 = scmp.ne.s32.totalorder %s92, %s95
    %p104 = scmp.eq.s32.totalorder %s14, 3
    %p105 = por %p103, %p104
    %p106 = scmp.ne.s32.totalorder %s95, %s96
    %p107 = scmp.eq.s32.totalorder %s14, 0
    %p108 = por %p106, %p107
    %p109 = scmp.ne.s32.totalorder %s95, %s96
    %p110 = scmp.eq.s32.totalorder %s15, 3
    %p111 = por %p109, %p110
    %p113 = scmp.ne.s32.totalorder %s96, %s112
    %p114 = scmp.eq.s32.totalorder %s15, 0
    %p115 = por %p113, %p114
    %p116 = scmp.le.s32.totalorder 1, %s9
    %p117 = scmp.lt.s32.totalorder %s9, 5
    %p118 = pnand %p116, %p117
    %p119 = pneg %p118
    // Predicated region
    $region9: #{gcn_decor_forward.6} parent=5 // pred_check
      _
    $region10: #{gcn_decor_forward.6} parent=5 // pred_check_branch
      %121 = sbr.rel (%p118) target = $region12
    $region11: #{gcn_decor_forward.6} parent=5 // pred_region
      %s122 = ssub.s32 %s9, 1
      // Predicated region
      $region13: #{gcn_decor_forward.6} parent=11 // pred_check
        %p123 = pneg %p56
      $region14: #{gcn_decor_forward.6} parent=11 // pred_check_branch
        %125 = sbr.rel (%p123) target = $region16
      $region15: #{gcn_decor_forward.6} parent=11 // pred_region
        _
      $region16: #{gcn_decor_forward.6} parent=11 // pred_fallthru
        _
    $region12: #{gcn_decor_forward.6} parent=5 // pred_fallthru
      _
    %p126 = scmp.lt.s32.totalorder %s9, 4
    // Predicated region
    $region17: #{gcn_decor_forward.6} parent=5 // pred_check
      %p127 = pneg %p126
    $region18: #{gcn_decor_forward.6} parent=5 // pred_check_branch
      %129 = sbr.rel (%p127) target = $region20
    $region19: #{gcn_decor_forward.6} parent=5 // pred_region
      // Predicated region
      $region21: #{gcn_decor_forward.6} parent=19 // pred_check
        %p130 = pneg %p29
      $region22: #{gcn_decor_forward.6} parent=19 // pred_check_branch
        %132 = sbr.rel (%p130) target = $region24
      $region23: #{gcn_decor_forward.6} parent=19 // pred_region
        %s133 = smul.u32 16, %s9
        %p134 = scmp.lt.s32.totalorder %s133, 63
        %s135 = scalar_select %p134, %s133, 63
        %s136 = smul.addr %s135, 8
        %s137 = scalar_lea.vmem %s0, %s136
        %s138 = smul.u32 16, %s9
      $region24: #{gcn_decor_forward.6} parent=19 // pred_fallthru
        _
      // Predicated region
      $region25: #{gcn_decor_forward.6} parent=19 // pred_check
        %p139 = pneg %p76
      $region26: #{gcn_decor_forward.6} parent=19 // pred_check_branch
        %141 = sbr.rel (%p139) target = $region28
      $region27: #{gcn_decor_forward.6} parent=19 // pred_region
        %s142 = smul.u32 16, %s9
        %p143 = scmp.lt.s32.totalorder %s142, 63
        %s144 = scalar_select %p143, %s142, 63
        %s145 = smul.addr %s144, 8
        %s146 = scalar_lea.vmem %s2, %s145
        %s147 = smul.u32 16, %s9
      $region28: #{gcn_decor_forward.6} parent=19 // pred_fallthru
        _
    $region20: #{gcn_decor_forward.6} parent=5 // pred_fallthru
      _
    %p148 = scmp.le.s32.totalorder 1, %s9
    %p149 = scmp.lt.s32.totalorder %s9, 5
    %p150 = pnand %p148, %p149
    %p151 = pneg %p150
    // Predicated region
    $region29: #{gcn_decor_forward.6} parent=5 // pred_check
      _
    $region30: #{gcn_decor_forward.6} parent=5 // pred_check_branch
      %153 = sbr.rel (%p150) target = $region32
    $region31: #{gcn_decor_forward.6} parent=5 // pred_region
      %s154 = ssub.s32 %s9, 1
      %s155 = smul.u32 16, %s14
      %p156 = scmp.lt.s32.totalorder %s155, 63
      %s157 = scalar_select %p156, %s155, 63
      %s158 = smul.addr %s157, 8
      %s159 = scalar_lea.vmem %s0, %s158
      %p160 = pneg %p35
      %p161 = pneg %p32
      %p162 = pneg %p56
      %p163 = pneg %p53
      %s164 = smul.u32 16, %s14
      %p165 = scmp.lt.s32.totalorder %s164, 63
      %s166 = scalar_select %p165, %s164, 63
      %s167 = smul.addr %s166, 8
      %s168 = scalar_lea.vmem %s2, %s167
      %p169 = pneg %p82
      %p170 = pneg %p79
      %p171 = pneg %p108
      %p172 = pneg %p105
      %s173 = smul.u32 16, %s14
      %p174 = scmp.lt.s32.totalorder %s173, 63
      %s175 = scalar_select %p174, %s173, 63
      %s176 = smul.addr %s175, 4
      %s177 = scalar_lea.vmem %s3, %s176
      %s178 = smul.u32 16, %s14
      %p179 = scmp.lt.s32.totalorder %s178, 63
      %s180 = scalar_select %p179, %s178, 63
      %s181 = smul.addr %s180, 8
      %s182 = scalar_lea.vmem %s0, %s181
      %s183 = smul.u32 16, %s14
      %s184 = smul.u32 16, %s14
      %p185 = scmp.lt.s32.totalorder %s184, 63
      %s186 = scalar_select %p185, %s184, 63
      %s187 = smul.addr %s186, 8
      %s188 = scalar_lea.vmem %s2, %s187
      %s189 = smul.u32 16, %s14
      %s190 = smul.u32 16, %s14
      %p191 = scmp.lt.s32.totalorder %s190, 63
      %s192 = scalar_select %p191, %s190, 63
      %s193 = smul.addr %s192, 4
      %s194 = scalar_lea.vmem %s3, %s193
      %s195 = smul.u32 16, %s14
      %v196 = vld [vmem:[%s182] sm:$0xff]
      %v197 = vld [vmem:[%s182 + $0x8] sm:$0xff]
      %v198 = vld [vmem:[%s182 + $0x10] sm:$0xff]
      %v199 = vld [vmem:[%s182 + $0x18] sm:$0xff]
      %v200 = vld [vmem:[%s182 + $0x20] sm:$0xff]
      %v201 = vld [vmem:[%s182 + $0x28] sm:$0xff]
      %v202 = vld [vmem:[%s182 + $0x30] sm:$0xff]
      %v203 = vld [vmem:[%s182 + $0x38] sm:$0xff]
      %v204 = vld [vmem:[%s182 + $0x40] sm:$0xff]
      %v205 = vld [vmem:[%s182 + $0x48] sm:$0xff]
      %v206 = vld [vmem:[%s182 + $0x50] sm:$0xff]
      %v207 = vld [vmem:[%s182 + $0x58] sm:$0xff]
      %v208 = vld [vmem:[%s182 + $0x60] sm:$0xff]
      %v209 = vld [vmem:[%s182 + $0x68] sm:$0xff]
      %v210 = vld [vmem:[%s182 + $0x70] sm:$0xff]
      %v211 = vld [vmem:[%s182 + $0x78] sm:$0xff]
      %v212 = vld [vmem:[%s1] sm:$0xff]
      %v213 = vld [vmem:[%s1 + $0x8] sm:$0xff]
      %vm214 = vcmask 130048
      %v216 = vsel %vm214, %v196, 0
      %v219 = vsel %vm214, %v197, 0
      %v222 = vsel %vm214, %v198, 0
      %v225 = vsel %vm214, %v199, 0
      %v228 = vsel %vm214, %v200, 0
      %v231 = vsel %vm214, %v201, 0
      %v234 = vsel %vm214, %v202, 0
      %v237 = vsel %vm214, %v203, 0
      %v240 = vsel %vm214, %v204, 0
      %v243 = vsel %vm214, %v205, 0
      %v246 = vsel %vm214, %v206, 0
      %v249 = vsel %vm214, %v207, 0
      %v252 = vsel %vm214, %v208, 0
      %v255 = vsel %vm214, %v209, 0
      %v258 = vsel %vm214, %v210, 0
      %v261 = vsel %vm214, %v211, 0
      %263 = vmatprep.subr.mxu0 0.0
      %264 = vmatpush1.msra.mxu0 0.0
      %265 = vmatprep.subr.mxu0 0.0
      %266 = vmatpush1.msra.mxu0 0.0
      %267 = vmatprep.subr.mxu0 0.0
      %268 = vmatpush1.msra.mxu0 0.0
      %269 = vmatprep.subr.mxu0 0.0
      %270 = vmatpush1.msra.mxu0 0.0
      %271 = vmatprep.subr.mxu0 0.0
      %272 = vmatpush1.msra.mxu0 0.0
      %273 = vmatprep.subr.mxu0 0.0
      %274 = vmatpush1.msra.mxu0 0.0
      %275 = vmatprep.subr.mxu0 0.0
      %276 = vmatpush1.msra.mxu0 0.0
      %277 = vmatprep.subr.mxu0 0.0
      %278 = vmatpush1.msra.mxu0 0.0
      %279 = vmatprep.subr.mxu0 0.0
      %280 = vmatpush1.msra.mxu0 0.0
      %281 = vmatprep.subr.mxu0 0.0
      %282 = vmatpush1.msra.mxu0 0.0
      %283 = vmatprep.subr.mxu0 0.0
      %284 = vmatpush1.msra.mxu0 0.0
      %285 = vmatprep.subr.mxu0 0.0
      %286 = vmatpush1.msra.mxu0 0.0
      %287 = vmatprep.subr.mxu0 0.0
      %288 = vmatpush1.msra.mxu0 0.0
      %289 = vmatprep.subr.mxu0 0.0
      %290 = vmatpush1.msra.mxu0 0.0
      %291 = vmatprep.subr.mxu0 0.0
      %292 = vmatpush1.msra.mxu0 %v213
      %293 = vmatprep.subr.mxu0 0.0
      %294 = vmatpush1.msra.mxu0 %v212
      %295 = vmatprep.subr.mxu0 0.0
      %296 = vmatpush2.msra.mxu0 0.0
      %297 = vmatprep.subr.mxu0 0.0
      %298 = vmatpush2.msra.mxu0 0.0
      %299 = vmatprep.subr.mxu0 0.0
      %300 = vmatpush2.msra.mxu0 0.0
      %301 = vmatprep.subr.mxu0 0.0
      %302 = vmatpush2.msra.mxu0 0.0
      %303 = vmatprep.subr.mxu0 0.0
      %304 = vmatpush2.msra.mxu0 0.0
      %305 = vmatprep.subr.mxu0 0.0
      %306 = vmatpush2.msra.mxu0 0.0
      %307 = vmatprep.subr.mxu0 0.0
      %308 = vmatpush2.msra.mxu0 0.0
      %309 = vmatprep.subr.mxu0 0.0
      %310 = vmatpush2.msra.mxu0 0.0
      %311 = vmatprep.subr.mxu0 0.0
      %312 = vmatpush2.msra.mxu0 0.0
      %313 = vmatprep.subr.mxu0 0.0
      %314 = vmatpush2.msra.mxu0 0.0
      %315 = vmatprep.subr.mxu0 0.0
      %316 = vmatpush2.msra.mxu0 0.0
      %317 = vmatprep.subr.mxu0 0.0
      %318 = vmatpush2.msra.mxu0 0.0
      %319 = vmatprep.subr.mxu0 0.0
      %320 = vmatpush2.msra.mxu0 0.0
      %321 = vmatprep.subr.mxu0 0.0
      %322 = vmatpush2.msra.mxu0 0.0
      %323 = vmatprep.subr.mxu0 0.0
      %324 = vmatpush2.msra.mxu0 0.0
      %325 = vmatprep.subr.mxu0 0.0
      %326 = vmatpush2.msra.mxu0 0.0
      %327 = vmatprep.mubr.f32.mxu0 0.0
      %328 = vmatmul.mubr.f32.gmra.mxu0 %v216
      %v329 = vpop.f32.mrf.mxu0
      %v330 = vadd.f32 0.0, %v329
      %v331 = vpop.f32.mrf.mxu0
      %332 = vmatprep.mubr.f32.mxu0 0.0
      %333 = vmatmul.mubr.f32.gmra.mxu0 %v219
      %v334 = vpop.f32.mrf.mxu0
      %v335 = vadd.f32 0.0, %v334
      %v336 = vpop.f32.mrf.mxu0
      %337 = vmatprep.mubr.f32.mxu0 0.0
      %338 = vmatmul.mubr.f32.gmra.mxu0 %v222
      %v339 = vpop.f32.mrf.mxu0
      %v340 = vadd.f32 0.0, %v339
      %v341 = vpop.f32.mrf.mxu0
      %342 = vmatprep.mubr.f32.mxu0 0.0
      %343 = vmatmul.mubr.f32.gmra.mxu0 %v225
      %v344 = vpop.f32.mrf.mxu0
      %v345 = vadd.f32 0.0, %v344
      %v346 = vpop.f32.mrf.mxu0
      %347 = vmatprep.mubr.f32.mxu0 0.0
      %348 = vmatmul.mubr.f32.gmra.mxu0 %v228
      %v349 = vpop.f32.mrf.mxu0
      %v350 = vadd.f32 0.0, %v349
      %v351 = vpop.f32.mrf.mxu0
      %352 = vmatprep.mubr.f32.mxu0 0.0
      %353 = vmatmul.mubr.f32.gmra.mxu0 %v231
      %v354 = vpop.f32.mrf.mxu0
      %v355 = vadd.f32 0.0, %v354
      %v356 = vpop.f32.mrf.mxu0
      %357 = vmatprep.mubr.f32.mxu0 0.0
      %358 = vmatmul.mubr.f32.gmra.mxu0 %v234
      %v359 = vpop.f32.mrf.mxu0
      %v360 = vadd.f32 0.0, %v359
      %v361 = vpop.f32.mrf.mxu0
      %362 = vmatprep.mubr.f32.mxu0 0.0
      %363 = vmatmul.mubr.f32.gmra.mxu0 %v237
      %v364 = vpop.f32.mrf.mxu0
      %v365 = vadd.f32 0.0, %v364
      %v366 = vpop.f32.mrf.mxu0
      %367 = vmatprep.mubr.f32.mxu0 0.0
      %368 = vmatmul.mubr.f32.gmra.mxu0 %v240
      %v369 = vpop.f32.mrf.mxu0
      %v370 = vadd.f32 0.0, %v369
      %v371 = vpop.f32.mrf.mxu0
      %372 = vmatprep.mubr.f32.mxu0 0.0
      %373 = vmatmul.mubr.f32.gmra.mxu0 %v243
      %v374 = vpop.f32.mrf.mxu0
      %v375 = vadd.f32 0.0, %v374
      %v376 = vpop.f32.mrf.mxu0
      %377 = vmatprep.mubr.f32.mxu0 0.0
      %378 = vmatmul.mubr.f32.gmra.mxu0 %v246
      %v379 = vpop.f32.mrf.mxu0
      %v380 = vadd.f32 0.0, %v379
      %v381 = vpop.f32.mrf.mxu0
      %382 = vmatprep.mubr.f32.mxu0 0.0
      %383 = vmatmul.mubr.f32.gmra.mxu0 %v249
      %v384 = vpop.f32.mrf.mxu0
      %v385 = vadd.f32 0.0, %v384
      %v386 = vpop.f32.mrf.mxu0
      %387 = vmatprep.mubr.f32.mxu0 0.0
      %388 = vmatmul.mubr.f32.gmra.mxu0 %v252
      %v389 = vpop.f32.mrf.mxu0
      %v390 = vadd.f32 0.0, %v389
      %v391 = vpop.f32.mrf.mxu0
      %392 = vmatprep.mubr.f32.mxu0 0.0
      %393 = vmatmul.mubr.f32.gmra.mxu0 %v255
      %v394 = vpop.f32.mrf.mxu0
      %v395 = vadd.f32 0.0, %v394
      %v396 = vpop.f32.mrf.mxu0
      %397 = vmatprep.mubr.f32.mxu0 0.0
      %398 = vmatmul.mubr.f32.gmra.mxu0 %v258
      %v399 = vpop.f32.mrf.mxu0
      %v400 = vadd.f32 0.0, %v399
      %v401 = vpop.f32.mrf.mxu0
      %402 = vmatprep.mubr.f32.mxu0 0.0
      %403 = vmatmul.mubr.f32.gmra.mxu0 %v261
      %v404 = vpop.f32.mrf.mxu0
      %v405 = vadd.f32 0.0, %v404
      %v406 = vpop.f32.mrf.mxu0
      %407 = vdwg.mxu0
      %v408 = vld [vmem:[%s188] sm:$0xff]
      %v409 = vld [vmem:[%s188 + $0x8] sm:$0xff]
      %v410 = vld [vmem:[%s188 + $0x10] sm:$0xff]
      %v411 = vld [vmem:[%s188 + $0x18] sm:$0xff]
      %v412 = vld [vmem:[%s188 + $0x20] sm:$0xff]
      %v413 = vld [vmem:[%s188 + $0x28] sm:$0xff]
      %v414 = vld [vmem:[%s188 + $0x30] sm:$0xff]
      %v415 = vld [vmem:[%s188 + $0x38] sm:$0xff]
      %v416 = vld [vmem:[%s188 + $0x40] sm:$0xff]
      %v417 = vld [vmem:[%s188 + $0x48] sm:$0xff]
      %v418 = vld [vmem:[%s188 + $0x50] sm:$0xff]
      %v419 = vld [vmem:[%s188 + $0x58] sm:$0xff]
      %v420 = vld [vmem:[%s188 + $0x60] sm:$0xff]
      %v421 = vld [vmem:[%s188 + $0x68] sm:$0xff]
      %v422 = vld [vmem:[%s188 + $0x70] sm:$0xff]
      %v423 = vld [vmem:[%s188 + $0x78] sm:$0xff]
      %425 = vset.pattern.permute.xlu0 0
      %426 = vperm.xlu0 %425, %v408
      %v427 = vpop.permute.xlu0 %426
      %430 = vset.pattern.permute.xlu0 0
      %431 = vperm.xlu0 %430, %v409
      %v432 = vpop.permute.xlu0 %431
      %435 = vset.pattern.permute.xlu0 0
      %436 = vperm.xlu0 %435, %v410
      %v437 = vpop.permute.xlu0 %436
      %440 = vset.pattern.permute.xlu0 0
      %441 = vperm.xlu0 %440, %v411
      %v442 = vpop.permute.xlu0 %441
      %445 = vset.pattern.permute.xlu0 0
      %446 = vperm.xlu0 %445, %v412
      %v447 = vpop.permute.xlu0 %446
      %450 = vset.pattern.permute.xlu0 0
      %451 = vperm.xlu0 %450, %v413
      %v452 = vpop.permute.xlu0 %451
      %455 = vset.pattern.permute.xlu0 0
      %456 = vperm.xlu0 %455, %v414
      %v457 = vpop.permute.xlu0 %456
      %460 = vset.pattern.permute.xlu0 0
      %461 = vperm.xlu0 %460, %v415
      %v462 = vpop.permute.xlu0 %461
      %465 = vset.pattern.permute.xlu0 0
      %466 = vperm.xlu0 %465, %v416
      %v467 = vpop.permute.xlu0 %466
      %470 = vset.pattern.permute.xlu0 0
      %471 = vperm.xlu0 %470, %v417
      %v472 = vpop.permute.xlu0 %471
      %475 = vset.pattern.permute.xlu0 0
      %476 = vperm.xlu0 %475, %v418
      %v477 = vpop.permute.xlu0 %476
      %480 = vset.pattern.permute.xlu0 0
      %481 = vperm.xlu0 %480, %v419
      %v482 = vpop.permute.xlu0 %481
      %485 = vset.pattern.permute.xlu0 0
      %486 = vperm.xlu0 %485, %v420
      %v487 = vpop.permute.xlu0 %486
      %490 = vset.pattern.permute.xlu0 0
      %491 = vperm.xlu0 %490, %v421
      %v492 = vpop.permute.xlu0 %491
      %495 = vset.pattern.permute.xlu0 0
      %496 = vperm.xlu0 %495, %v422
      %v497 = vpop.permute.xlu0 %496
      %500 = vset.pattern.permute.xlu0 0
      %501 = vperm.xlu0 %500, %v423
      %v502 = vpop.permute.xlu0 %501
      %v504 = vmul.f32 %v427, %v330
      %v505 = vmul.f32 %v432, %v335
      %v506 = vmul.f32 %v437, %v340
      %v507 = vmul.f32 %v442, %v345
      %v508 = vmul.f32 %v447, %v350
      %v509 = vmul.f32 %v452, %v355
      %v510 = vmul.f32 %v457, %v360
      %v511 = vmul.f32 %v462, %v365
      %v512 = vmul.f32 %v467, %v370
      %v513 = vmul.f32 %v472, %v375
      %v514 = vmul.f32 %v477, %v380
      %v515 = vmul.f32 %v482, %v385
      %v516 = vmul.f32 %v487, %v390
      %v517 = vmul.f32 %v492, %v395
      %v518 = vmul.f32 %v497, %v400
      %v519 = vmul.f32 %v502, %v405
      %v520 = vpack.c.bf16 %v505, %v504
      %v521 = vpack.c.bf16 %v507, %v506
      %v522 = vpack.c.bf16 %v509, %v508
      %v523 = vpack.c.bf16 %v511, %v510
      %v524 = vpack.c.bf16 %v513, %v512
      %v525 = vpack.c.bf16 %v515, %v514
      %v526 = vpack.c.bf16 %v517, %v516
      %v527 = vpack.c.bf16 %v519, %v518
      %v536 = vunpack.c.l.b16 %v520
      %v537 = vunpack.c.h.b16 %v520
      %v538 = vunpack.c.l.b16 %v521
      %v539 = vunpack.c.h.b16 %v521
      %v540 = vunpack.c.l.b16 %v522
      %v541 = vunpack.c.h.b16 %v522
      %v542 = vunpack.c.l.b16 %v523
      %v543 = vunpack.c.h.b16 %v523
      %v544 = vunpack.c.l.b16 %v524
      %v545 = vunpack.c.h.b16 %v524
      %v546 = vunpack.c.l.b16 %v525
      %v547 = vunpack.c.h.b16 %v525
      %v548 = vunpack.c.l.b16 %v526
      %v549 = vunpack.c.h.b16 %v526
      %v550 = vunpack.c.l.b16 %v527
      %v551 = vunpack.c.h.b16 %v527
      %v552 = vpack.c.b16 %v536, %v536
      %v553 = vpack.c.b16 %v537, %v537
      %v554 = vpack.c.b16 %v538, %v538
      %v555 = vpack.c.b16 %v539, %v539
      %v556 = vpack.c.b16 %v540, %v540
      %v557 = vpack.c.b16 %v541, %v541
      %v558 = vpack.c.b16 %v542, %v542
      %v559 = vpack.c.b16 %v543, %v543
      %v560 = vpack.c.b16 %v544, %v544
      %v561 = vpack.c.b16 %v545, %v545
      %v562 = vpack.c.b16 %v546, %v546
      %v563 = vpack.c.b16 %v547, %v547
      %v564 = vpack.c.b16 %v548, %v548
      %v565 = vpack.c.b16 %v549, %v549
      %v566 = vpack.c.b16 %v550, %v550
      %v567 = vpack.c.b16 %v551, %v551
      %584 = vst [vmem:[%s194] sm:$0xf] %v552
      %585 = vst [vmem:[%s194 + $0x4] sm:$0xf] %v553
      %586 = vst [vmem:[%s194 + $0x8] sm:$0xf] %v554
      %587 = vst [vmem:[%s194 + $0xc] sm:$0xf] %v555
      %588 = vst [vmem:[%s194 + $0x10] sm:$0xf] %v556
      %589 = vst [vmem:[%s194 + $0x14] sm:$0xf] %v557
      %590 = vst [vmem:[%s194 + $0x18] sm:$0xf] %v558
      %591 = vst [vmem:[%s194 + $0x1c] sm:$0xf] %v559
      %592 = vst [vmem:[%s194 + $0x20] sm:$0xf] %v560
      %593 = vst [vmem:[%s194 + $0x24] sm:$0xf] %v561
      %594 = vst [vmem:[%s194 + $0x28] sm:$0xf] %v562
      %595 = vst [vmem:[%s194 + $0x2c] sm:$0xf] %v563
      %596 = vst [vmem:[%s194 + $0x30] sm:$0xf] %v564
      %597 = vst [vmem:[%s194 + $0x34] sm:$0xf] %v565
      %598 = vst [vmem:[%s194 + $0x38] sm:$0xf] %v566
      %599 = vst [vmem:[%s194 + $0x3c] sm:$0xf] %v567
      %s600 = smul.u32 16, %s14
      %p601 = scmp.lt.s32.totalorder %s600, 63
      %s602 = scalar_select %p601, %s600, 63
      %s603 = smul.addr %s602, 4
      %s604 = scalar_lea.vmem %s3, %s603
      // Predicated region
      $region33: #{gcn_decor_forward.6} parent=31 // pred_check
        %p605 = pneg %p105
      $region34: #{gcn_decor_forward.6} parent=31 // pred_check_branch
        %607 = sbr.rel (%p605) target = $region36
      $region35: #{gcn_decor_forward.6} parent=31 // pred_region
        %s608 = smul.u32 16, %s14
      $region36: #{gcn_decor_forward.6} parent=31 // pred_fallthru
        _
    $region32: #{gcn_decor_forward.6} parent=5 // pred_fallthru
      _
    %p609 = scmp.le.s32.totalorder 2, %s9
    // Predicated region
    $region37: #{gcn_decor_forward.6} parent=5 // pred_check
      %p610 = pneg %p609
    $region38: #{gcn_decor_forward.6} parent=5 // pred_check_branch
      %612 = sbr.rel (%p610) target = $region40
    $region39: #{gcn_decor_forward.6} parent=5 // pred_region
      %s613 = ssub.s32 %s9, 2
      // Predicated region
      $region41: #{gcn_decor_forward.6} parent=39 // pred_check
        %p614 = pneg %p111
      $region42: #{gcn_decor_forward.6} parent=39 // pred_check_branch
        %616 = sbr.rel (%p614) target = $region44
      $region43: #{gcn_decor_forward.6} parent=39 // pred_region
        %s617 = smul.u32 16, %s15
        %p618 = scmp.lt.s32.totalorder %s617, 63
        %s619 = scalar_select %p618, %s617, 63
        %s620 = smul.addr %s619, 4
        %s621 = scalar_lea.vmem %s3, %s620
      $region44: #{gcn_decor_forward.6} parent=39 // pred_fallthru
        _
    $region40: #{gcn_decor_forward.6} parent=5 // pred_fallthru
      _
  $region6: #{gcn_decor_forward.6} parent=0 // loop_footer
    %s13 = sadd.s32 1, %s9
  $region7: #{gcn_decor_forward.6} parent=0 // loop_footer_branch
    %8 = sbr.rel target = $region3
  $region8: #{gcn_decor_forward.6} parent=0 // loop_exit
    _

// kernel: gcn_decor_forward.7
$region0: #{gcn_decor_forward.7}
  #allocation0 [shape = 'u32[]', space=smem, size = 0x4, offset = 0x4, fixed_abs, tag = 'smem constant byte address 0x4 - core index']
  #allocation1 [shape = 'u32[144,128]{1,0:T(1,128)}', space=vmem, size = 0x12000, scoped, tag = 'internal scratch']
  %s0 = inlined_call_operand.vmem [shape: bf16[512,512], index: 0, kind: input, shape index: {}]
  %s1 = inlined_call_operand.vmem [shape: bf16[512,128], index: 1, kind: input, shape index: {}]
  %s2 = inlined_call_operand.vmem [shape: f32[512,1], index: 2, kind: input, shape index: {}]
  %s3 = inlined_call_operand.vmem [shape: f32[512,128], index: 3, kind: output, shape index: {}]
  %s4 = sld [smem:[#allocation0]]
  $region45: #{gcn_decor_forward.7} parent=0
    _
  %s6 = ssub.s32 1, %s4
  %s7 = scalar_select 0, %s6, %s4
  loop: start=0, step=1, limit=6
  $region2: #{gcn_decor_forward.7} parent=0 // loop_pre_header
    _
  $region3: #{gcn_decor_forward.7} parent=0 // loop_header
    %s9 = sphi 0, %s13
    %p10 = scmp.ge.s32.totalorder %s9, 6
    %s19 = sphi 0, %s21
    %s22 = sphi 0, %s19
    %s23 = sphi 0, %s22
    %s39 = sphi 0, %s23
    %s43 = sphi 0, %s43
    %s45 = sphi 0, %s43
    %s46 = sphi 0, %s45
    %s60 = sphi 0, %s46
    %s66 = sphi 0, %s68
    %s69 = sphi 0, %s66
    %s70 = sphi 0, %s69
    %s86 = sphi 0, %s70
    %s92 = sphi 0, %s94
    %s95 = sphi 0, %s92
    %s96 = sphi 0, %s95
    %s112 = sphi 0, %s96
  $region4: #{gcn_decor_forward.7} parent=0 // loop_header_branch
    %12 = sbr.rel (%p10) target = $region8
  $region5: #{gcn_decor_forward.7} parent=0 // loop_body
    %s14 = ssub.s32 %s9, 1
    %s15 = ssub.s32 %s9, 2
    %s16 = sadd.s32 %s9, 1
    %s17 = ssub.s32 %s9, %s16
    %p18 = scmp.eq.s32.totalorder %s17, 0
    %s20 = sadd.s32 %s19, 1
    %s21 = scalar_select %p18, %s19, %s20
    %p24 = pneg %p18
    %p25 = scmp.eq.s32.totalorder %s9, 3
    %p26 = por %p24, %p25
    %p27 = scmp.ne.s32.totalorder %s19, %s22
    %p28 = scmp.eq.s32.totalorder %s9, 0
    %p29 = por %p27, %p28
    %p30 = scmp.ne.s32.totalorder %s19, %s22
    %p31 = scmp.eq.s32.totalorder %s14, 3
    %p32 = por %p30, %p31
    %p33 = scmp.ne.s32.totalorder %s22, %s23
    %p34 = scmp.eq.s32.totalorder %s14, 0
    %p35 = por %p33, %p34
    %p36 = scmp.ne.s32.totalorder %s22, %s23
    %p37 = scmp.eq.s32.totalorder %s15, 3
    %p38 = por %p36, %p37
    %p40 = scmp.ne.s32.totalorder %s23, %s39
    %p41 = scmp.eq.s32.totalorder %s15, 0
    %p42 = por %p40, %p41
    %s44 = sadd.s32 %s43, 1
    %p47 = scmp.eq.s32.totalorder %s9, 3
    %p48 = scmp.ne.s32.totalorder %s43, %s45
    %p49 = scmp.eq.s32.totalorder %s9, 0
    %p50 = por %p48, %p49
    %p51 = scmp.ne.s32.totalorder %s43, %s45
    %p52 = scmp.eq.s32.totalorder %s14, 3
    %p53 = por %p51, %p52
    %p54 = scmp.ne.s32.totalorder %s45, %s46
    %p55 = scmp.eq.s32.totalorder %s14, 0
    %p56 = por %p54, %p55
    %p57 = scmp.ne.s32.totalorder %s45, %s46
    %p58 = scmp.eq.s32.totalorder %s15, 3
    %p59 = por %p57, %p58
    %p61 = scmp.ne.s32.totalorder %s46, %s60
    %p62 = scmp.eq.s32.totalorder %s15, 0
    %p63 = por %p61, %p62
    %s64 = ssub.s32 %s9, %s16
    %p65 = scmp.eq.s32.totalorder %s64, 0
    %s67 = sadd.s32 %s66, 1
    %s68 = scalar_select %p65, %s66, %s67
    %p71 = pneg %p65
    %p72 = scmp.eq.s32.totalorder %s9, 3
    %p73 = por %p71, %p72
    %p74 = scmp.ne.s32.totalorder %s66, %s69
    %p75 = scmp.eq.s32.totalorder %s9, 0
    %p76 = por %p74, %p75
    %p77 = scmp.ne.s32.totalorder %s66, %s69
    %p78 = scmp.eq.s32.totalorder %s14, 3
    %p79 = por %p77, %p78
    %p80 = scmp.ne.s32.totalorder %s69, %s70
    %p81 = scmp.eq.s32.totalorder %s14, 0
    %p82 = por %p80, %p81
    %p83 = scmp.ne.s32.totalorder %s69, %s70
    %p84 = scmp.eq.s32.totalorder %s15, 3
    %p85 = por %p83, %p84
    %p87 = scmp.ne.s32.totalorder %s70, %s86
    %p88 = scmp.eq.s32.totalorder %s15, 0
    %p89 = por %p87, %p88
    %s90 = ssub.s32 %s9, %s16
    %p91 = scmp.eq.s32.totalorder %s90, 0
    %s93 = sadd.s32 %s92, 1
    %s94 = scalar_select %p91, %s92, %s93
    %p97 = pneg %p91
    %p98 = scmp.eq.s32.totalorder %s9, 3
    %p99 = por %p97, %p98
    %p100 = scmp.ne.s32.totalorder %s92, %s95
    %p101 = scmp.eq.s32.totalorder %s9, 0
    %p102 = por %p100, %p101
    %p103 = scmp.ne.s32.totalorder %s92, %s95
    %p104 = scmp.eq.s32.totalorder %s14, 3
    %p105 = por %p103, %p104
    %p106 = scmp.ne.s32.totalorder %s95, %s96
    %p107 = scmp.eq.s32.totalorder %s14, 0
    %p108 = por %p106, %p107
    %p109 = scmp.ne.s32.totalorder %s95, %s96
    %p110 = scmp.eq.s32.totalorder %s15, 3
    %p111 = por %p109, %p110
    %p113 = scmp.ne.s32.totalorder %s96, %s112
    %p114 = scmp.eq.s32.totalorder %s15, 0
    %p115 = por %p113, %p114
    %p116 = scmp.le.s32.totalorder 1, %s9
    %p117 = scmp.lt.s32.totalorder %s9, 5
    %p118 = pnand %p116, %p117
    %p119 = pneg %p118
    // Predicated region
    $region9: #{gcn_decor_forward.7} parent=5 // pred_check
      _
    $region10: #{gcn_decor_forward.7} parent=5 // pred_check_branch
      %121 = sbr.rel (%p118) target = $region12
    $region11: #{gcn_decor_forward.7} parent=5 // pred_region
      %s122 = ssub.s32 %s9, 1
      // Predicated region
      $region13: #{gcn_decor_forward.7} parent=11 // pred_check
        %p123 = pneg %p56
      $region14: #{gcn_decor_forward.7} parent=11 // pred_check_branch
        %125 = sbr.rel (%p123) target = $region16
      $region15: #{gcn_decor_forward.7} parent=11 // pred_region
        _
      $region16: #{gcn_decor_forward.7} parent=11 // pred_fallthru
        _
    $region12: #{gcn_decor_forward.7} parent=5 // pred_fallthru
      _
    %p126 = scmp.lt.s32.totalorder %s9, 4
    // Predicated region
    $region17: #{gcn_decor_forward.7} parent=5 // pred_check
      %p127 = pneg %p126
    $region18: #{gcn_decor_forward.7} parent=5 // pred_check_branch
      %129 = sbr.rel (%p127) target = $region20
    $region19: #{gcn_decor_forward.7} parent=5 // pred_region
      // Predicated region
      $region21: #{gcn_decor_forward.7} parent=19 // pred_check
        %p130 = pneg %p29
      $region22: #{gcn_decor_forward.7} parent=19 // pred_check_branch
        %132 = sbr.rel (%p130) target = $region24
      $region23: #{gcn_decor_forward.7} parent=19 // pred_region
        %s133 = smul.u32 16, %s9
        %p134 = scmp.lt.s32.totalorder %s133, 63
        %s135 = scalar_select %p134, %s133, 63
        %s136 = smul.addr %s135, 4
        %s137 = smul.addr %s136, 4
        %s138 = scalar_lea.vmem %s0, %s137
        %s139 = smul.u32 16, %s9
      $region24: #{gcn_decor_forward.7} parent=19 // pred_fallthru
        _
      // Predicated region
      $region25: #{gcn_decor_forward.7} parent=19 // pred_check
        %p140 = pneg %p76
      $region26: #{gcn_decor_forward.7} parent=19 // pred_check_branch
        %142 = sbr.rel (%p140) target = $region28
      $region27: #{gcn_decor_forward.7} parent=19 // pred_region
        %s143 = smul.u32 16, %s9
        %p144 = scmp.lt.s32.totalorder %s143, 63
        %s145 = scalar_select %p144, %s143, 63
        %s146 = smul.addr %s145, 8
        %s147 = scalar_lea.vmem %s2, %s146
        %s148 = smul.u32 16, %s9
      $region28: #{gcn_decor_forward.7} parent=19 // pred_fallthru
        _
    $region20: #{gcn_decor_forward.7} parent=5 // pred_fallthru
      _
    %p149 = scmp.le.s32.totalorder 1, %s9
    %p150 = scmp.lt.s32.totalorder %s9, 5
    %p151 = pnand %p149, %p150
    %p152 = pneg %p151
    // Predicated region
    $region29: #{gcn_decor_forward.7} parent=5 // pred_check
      _
    $region30: #{gcn_decor_forward.7} parent=5 // pred_check_branch
      %154 = sbr.rel (%p151) target = $region32
    $region31: #{gcn_decor_forward.7} parent=5 // pred_region
      %s155 = ssub.s32 %s9, 1
      %s156 = smul.u32 16, %s14
      %p157 = scmp.lt.s32.totalorder %s156, 63
      %s158 = scalar_select %p157, %s156, 63
      %s159 = smul.addr %s158, 4
      %s160 = smul.addr %s159, 4
      %s161 = scalar_lea.vmem %s0, %s160
      %p162 = pneg %p35
      %p163 = pneg %p32
      %p164 = pneg %p56
      %p165 = pneg %p53
      %s166 = smul.u32 16, %s14
      %p167 = scmp.lt.s32.totalorder %s166, 63
      %s168 = scalar_select %p167, %s166, 63
      %s169 = smul.addr %s168, 8
      %s170 = scalar_lea.vmem %s2, %s169
      %p171 = pneg %p82
      %p172 = pneg %p79
      %p173 = pneg %p108
      %p174 = pneg %p105
      %s175 = smul.u32 16, %s14
      %p176 = scmp.lt.s32.totalorder %s175, 63
      %s177 = scalar_select %p176, %s175, 63
      %s178 = smul.addr %s177, 8
      %s179 = scalar_lea.vmem %s3, %s178
      %s180 = smul.u32 16, %s14
      %p181 = scmp.lt.s32.totalorder %s180, 63
      %s182 = scalar_select %p181, %s180, 63
      %s183 = smul.addr %s182, 4
      %s184 = smul.addr %s183, 4
      %s185 = scalar_lea.vmem %s0, %s184
      %s186 = smul.u32 16, %s14
      %s187 = smul.u32 16, %s14
      %p188 = scmp.lt.s32.totalorder %s187, 63
      %s189 = scalar_select %p188, %s187, 63
      %s190 = smul.addr %s189, 8
      %s191 = scalar_lea.vmem %s2, %s190
      %s192 = smul.u32 16, %s14
      %s193 = smul.u32 16, %s14
      %p194 = scmp.lt.s32.totalorder %s193, 63
      %s195 = scalar_select %p194, %s193, 63
      %s196 = smul.addr %s195, 8
      %s197 = scalar_lea.vmem %s3, %s196
      %s198 = smul.u32 16, %s14
      %v200 = vld [vmem:[%s185] sm:$0xff]
      %v201 = vld [vmem:[%s185 + $0x8] sm:$0xff]
      %v202 = vld [vmem:[%s185 + $0x10] sm:$0xff]
      %v203 = vld [vmem:[%s185 + $0x18] sm:$0xff]
      %v204 = vld [vmem:[%s185 + $0x20] sm:$0xff]
      %v205 = vld [vmem:[%s185 + $0x28] sm:$0xff]
      %v206 = vld [vmem:[%s185 + $0x30] sm:$0xff]
      %v207 = vld [vmem:[%s185 + $0x38] sm:$0xff]
      %v208 = vld [vmem:[%s185 + $0x40] sm:$0xff]
      %v209 = vld [vmem:[%s185 + $0x48] sm:$0xff]
      %v210 = vld [vmem:[%s185 + $0x50] sm:$0xff]
      %v211 = vld [vmem:[%s185 + $0x58] sm:$0xff]
      %v212 = vld [vmem:[%s185 + $0x60] sm:$0xff]
      %v213 = vld [vmem:[%s185 + $0x68] sm:$0xff]
      %v214 = vld [vmem:[%s185 + $0x70] sm:$0xff]
      %v215 = vld [vmem:[%s185 + $0x78] sm:$0xff]
      %v216 = vld [vmem:[%s185 + $0x80] sm:$0xff]
      %v217 = vld [vmem:[%s185 + $0x88] sm:$0xff]
      %v218 = vld [vmem:[%s185 + $0x90] sm:$0xff]
      %v219 = vld [vmem:[%s185 + $0x98] sm:$0xff]
      %v220 = vld [vmem:[%s185 + $0xa0] sm:$0xff]
      %v221 = vld [vmem:[%s185 + $0xa8] sm:$0xff]
      %v222 = vld [vmem:[%s185 + $0xb0] sm:$0xff]
      %v223 = vld [vmem:[%s185 + $0xb8] sm:$0xff]
      %v224 = vld [vmem:[%s185 + $0xc0] sm:$0xff]
      %v225 = vld [vmem:[%s185 + $0xc8] sm:$0xff]
      %v226 = vld [vmem:[%s185 + $0xd0] sm:$0xff]
      %v227 = vld [vmem:[%s185 + $0xd8] sm:$0xff]
      %v228 = vld [vmem:[%s185 + $0xe0] sm:$0xff]
      %v229 = vld [vmem:[%s185 + $0xe8] sm:$0xff]
      %v230 = vld [vmem:[%s185 + $0xf0] sm:$0xff]
      %v231 = vld [vmem:[%s185 + $0xf8] sm:$0xff]
      %v232 = vld [vmem:[%s1] sm:$0xf]
      %v233 = vld [vmem:[%s1 + $0x4] sm:$0xf]
      %v234 = vld [vmem:[%s1 + $0x8] sm:$0xf]
      %v235 = vld [vmem:[%s1 + $0xc] sm:$0xf]
      %v236 = vld [vmem:[%s1 + $0x10] sm:$0xf]
      %v237 = vld [vmem:[%s1 + $0x14] sm:$0xf]
      %v238 = vld [vmem:[%s1 + $0x18] sm:$0xf]
      %v239 = vld [vmem:[%s1 + $0x1c] sm:$0xf]
      %v240 = vld [vmem:[%s1 + $0x20] sm:$0xf]
      %v241 = vld [vmem:[%s1 + $0x24] sm:$0xf]
      %v242 = vld [vmem:[%s1 + $0x28] sm:$0xf]
      %v243 = vld [vmem:[%s1 + $0x2c] sm:$0xf]
      %v244 = vld [vmem:[%s1 + $0x30] sm:$0xf]
      %v245 = vld [vmem:[%s1 + $0x34] sm:$0xf]
      %v246 = vld [vmem:[%s1 + $0x38] sm:$0xf]
      %v247 = vld [vmem:[%s1 + $0x3c] sm:$0xf]
      %v248 = vld [vmem:[%s1 + $0x40] sm:$0xf]
      %v249 = vld [vmem:[%s1 + $0x44] sm:$0xf]
      %v250 = vld [vmem:[%s1 + $0x48] sm:$0xf]
      %v251 = vld [vmem:[%s1 + $0x4c] sm:$0xf]
      %v252 = vld [vmem:[%s1 + $0x50] sm:$0xf]
      %v253 = vld [vmem:[%s1 + $0x54] sm:$0xf]
      %v254 = vld [vmem:[%s1 + $0x58] sm:$0xf]
      %v255 = vld [vmem:[%s1 + $0x5c] sm:$0xf]
      %v256 = vld [vmem:[%s1 + $0x60] sm:$0xf]
      %v257 = vld [vmem:[%s1 + $0x64] sm:$0xf]
      %v258 = vld [vmem:[%s1 + $0x68] sm:$0xf]
      %v259 = vld [vmem:[%s1 + $0x6c] sm:$0xf]
      %v260 = vld [vmem:[%s1 + $0x70] sm:$0xf]
      %v261 = vld [vmem:[%s1 + $0x74] sm:$0xf]
      %v262 = vld [vmem:[%s1 + $0x78] sm:$0xf]
      %v263 = vld [vmem:[%s1 + $0x7c] sm:$0xf]
      %v264 = vld [vmem:[%s1 + $0x80] sm:$0xf]
      %v265 = vld [vmem:[%s1 + $0x84] sm:$0xf]
      %v266 = vld [vmem:[%s1 + $0x88] sm:$0xf]
      %v267 = vld [vmem:[%s1 + $0x8c] sm:$0xf]
      %v268 = vld [vmem:[%s1 + $0x90] sm:$0xf]
      %v269 = vld [vmem:[%s1 + $0x94] sm:$0xf]
      %v270 = vld [vmem:[%s1 + $0x98] sm:$0xf]
      %v271 = vld [vmem:[%s1 + $0x9c] sm:$0xf]
      %v272 = vld [vmem:[%s1 + $0xa0] sm:$0xf]
      %v273 = vld [vmem:[%s1 + $0xa4] sm:$0xf]
      %v274 = vld [vmem:[%s1 + $0xa8] sm:$0xf]
      %v275 = vld [vmem:[%s1 + $0xac] sm:$0xf]
      %v276 = vld [vmem:[%s1 + $0xb0] sm:$0xf]
      %v277 = vld [vmem:[%s1 + $0xb4] sm:$0xf]
      %v278 = vld [vmem:[%s1 + $0xb8] sm:$0xf]
      %v279 = vld [vmem:[%s1 + $0xbc] sm:$0xf]
      %v280 = vld [vmem:[%s1 + $0xc0] sm:$0xf]
      %v281 = vld [vmem:[%s1 + $0xc4] sm:$0xf]
      %v282 = vld [vmem:[%s1 + $0xc8] sm:$0xf]
      %v283 = vld [vmem:[%s1 + $0xcc] sm:$0xf]
      %v284 = vld [vmem:[%s1 + $0xd0] sm:$0xf]
      %v285 = vld [vmem:[%s1 + $0xd4] sm:$0xf]
      %v286 = vld [vmem:[%s1 + $0xd8] sm:$0xf]
      %v287 = vld [vmem:[%s1 + $0xdc] sm:$0xf]
      %v288 = vld [vmem:[%s1 + $0xe0] sm:$0xf]
      %v289 = vld [vmem:[%s1 + $0xe4] sm:$0xf]
      %v290 = vld [vmem:[%s1 + $0xe8] sm:$0xf]
      %v291 = vld [vmem:[%s1 + $0xec] sm:$0xf]
      %v292 = vld [vmem:[%s1 + $0xf0] sm:$0xf]
      %v293 = vld [vmem:[%s1 + $0xf4] sm:$0xf]
      %v294 = vld [vmem:[%s1 + $0xf8] sm:$0xf]
      %v295 = vld [vmem:[%s1 + $0xfc] sm:$0xf]
      %v328 = vunpack.c.l.b16 %v200
      %v329 = vunpack.c.h.b16 %v200
      %v330 = vunpack.c.l.b16 %v201
      %v331 = vunpack.c.h.b16 %v201
      %v332 = vunpack.c.l.b16 %v202
      %v333 = vunpack.c.h.b16 %v202
      %v334 = vunpack.c.l.b16 %v203
      %v335 = vunpack.c.h.b16 %v203
      %v336 = vunpack.c.l.b16 %v204
      %v337 = vunpack.c.h.b16 %v204
      %v338 = vunpack.c.l.b16 %v205
      %v339 = vunpack.c.h.b16 %v205
      %v340 = vunpack.c.l.b16 %v206
      %v341 = vunpack.c.h.b16 %v206
      %v342 = vunpack.c.l.b16 %v207
      %v343 = vunpack.c.h.b16 %v207
      %v344 = vunpack.c.l.b16 %v208
      %v345 = vunpack.c.h.b16 %v208
      %v346 = vunpack.c.l.b16 %v209
      %v347 = vunpack.c.h.b16 %v209
      %v348 = vunpack.c.l.b16 %v210
      %v349 = vunpack.c.h.b16 %v210
      %v350 = vunpack.c.l.b16 %v211
      %v351 = vunpack.c.h.b16 %v211
      %v352 = vunpack.c.l.b16 %v212
      %v353 = vunpack.c.h.b16 %v212
      %v354 = vunpack.c.l.b16 %v213
      %v355 = vunpack.c.h.b16 %v213
      %v356 = vunpack.c.l.b16 %v214
      %v357 = vunpack.c.h.b16 %v214
      %v358 = vunpack.c.l.b16 %v215
      %v359 = vunpack.c.h.b16 %v215
      %v360 = vunpack.c.l.b16 %v216
      %v361 = vunpack.c.h.b16 %v216
      %v362 = vunpack.c.l.b16 %v217
      %v363 = vunpack.c.h.b16 %v217
      %v364 = vunpack.c.l.b16 %v218
      %v365 = vunpack.c.h.b16 %v218
      %v366 = vunpack.c.l.b16 %v219
      %v367 = vunpack.c.h.b16 %v219
      %v368 = vunpack.c.l.b16 %v220
      %v369 = vunpack.c.h.b16 %v220
      %v370 = vunpack.c.l.b16 %v221
      %v371 = vunpack.c.h.b16 %v221
      %v372 = vunpack.c.l.b16 %v222
      %v373 = vunpack.c.h.b16 %v222
      %v374 = vunpack.c.l.b16 %v223
      %v375 = vunpack.c.h.b16 %v223
      %v376 = vunpack.c.l.b16 %v224
      %v377 = vunpack.c.h.b16 %v224
      %v378 = vunpack.c.l.b16 %v225
      %v379 = vunpack.c.h.b16 %v225
      %v380 = vunpack.c.l.b16 %v226
      %v381 = vunpack.c.h.b16 %v226
      %v382 = vunpack.c.l.b16 %v227
      %v383 = vunpack.c.h.b16 %v227
      %v384 = vunpack.c.l.b16 %v228
      %v385 = vunpack.c.h.b16 %v228
      %v386 = vunpack.c.l.b16 %v229
      %v387 = vunpack.c.h.b16 %v229
      %v388 = vunpack.c.l.b16 %v230
      %v389 = vunpack.c.h.b16 %v230
      %v390 = vunpack.c.l.b16 %v231
      %v391 = vunpack.c.h.b16 %v231
      %v392 = vpack.c.b16 %v332, %v328
      %v393 = vpack.c.b16 %v333, %v329
      %v394 = vpack.c.b16 %v334, %v330
      %v395 = vpack.c.b16 %v335, %v331
      %v396 = vpack.c.b16 %v340, %v336
      %v397 = vpack.c.b16 %v341, %v337
      %v398 = vpack.c.b16 %v342, %v338
      %v399 = vpack.c.b16 %v343, %v339
      %v400 = vpack.c.b16 %v348, %v344
      %v401 = vpack.c.b16 %v349, %v345
      %v402 = vpack.c.b16 %v350, %v346
      %v403 = vpack.c.b16 %v351, %v347
      %v404 = vpack.c.b16 %v356, %v352
      %v405 = vpack.c.b16 %v357, %v353
      %v406 = vpack.c.b16 %v358, %v354
      %v407 = vpack.c.b16 %v359, %v355
      %v408 = vpack.c.b16 %v364, %v360
      %v409 = vpack.c.b16 %v365, %v361
      %v410 = vpack.c.b16 %v366, %v362
      %v411 = vpack.c.b16 %v367, %v363
      %v412 = vpack.c.b16 %v372, %v368
      %v413 = vpack.c.b16 %v373, %v369
      %v414 = vpack.c.b16 %v374, %v370
      %v415 = vpack.c.b16 %v375, %v371
      %v416 = vpack.c.b16 %v380, %v376
      %v417 = vpack.c.b16 %v381, %v377
      %v418 = vpack.c.b16 %v382, %v378
      %v419 = vpack.c.b16 %v383, %v379
      %v420 = vpack.c.b16 %v388, %v384
      %v421 = vpack.c.b16 %v389, %v385
      %v422 = vpack.c.b16 %v390, %v386
      %v423 = vpack.c.b16 %v391, %v387
      %v520 = vunpack.c.l.b16 %v232
      %v521 = vunpack.c.l.b16 %v233
      %v522 = vunpack.c.l.b16 %v234
      %v523 = vunpack.c.l.b16 %v235
      %v524 = vunpack.c.l.b16 %v236
      %v525 = vunpack.c.l.b16 %v237
      %v526 = vunpack.c.l.b16 %v238
      %v527 = vunpack.c.l.b16 %v239
      %v528 = vunpack.c.l.b16 %v240
      %v529 = vunpack.c.l.b16 %v241
      %v530 = vunpack.c.l.b16 %v242
      %v531 = vunpack.c.l.b16 %v243
      %v532 = vunpack.c.l.b16 %v244
      %v533 = vunpack.c.l.b16 %v245
      %v534 = vunpack.c.l.b16 %v246
      %v535 = vunpack.c.l.b16 %v247
      %v536 = vunpack.c.l.b16 %v248
      %v537 = vunpack.c.l.b16 %v249
      %v538 = vunpack.c.l.b16 %v250
      %v539 = vunpack.c.l.b16 %v251
      %v540 = vunpack.c.l.b16 %v252
      %v541 = vunpack.c.l.b16 %v253
      %v542 = vunpack.c.l.b16 %v254
      %v543 = vunpack.c.l.b16 %v255
      %v544 = vunpack.c.l.b16 %v256
      %v545 = vunpack.c.l.b16 %v257
      %v546 = vunpack.c.l.b16 %v258
      %v547 = vunpack.c.l.b16 %v259
      %v548 = vunpack.c.l.b16 %v260
      %v549 = vunpack.c.l.b16 %v261
      %v550 = vunpack.c.l.b16 %v262
      %v551 = vunpack.c.l.b16 %v263
      %v552 = vunpack.c.l.b16 %v264
      %v553 = vunpack.c.l.b16 %v265
      %v554 = vunpack.c.l.b16 %v266
      %v555 = vunpack.c.l.b16 %v267
      %v556 = vunpack.c.l.b16 %v268
      %v557 = vunpack.c.l.b16 %v269
      %v558 = vunpack.c.l.b16 %v270
      %v559 = vunpack.c.l.b16 %v271
      %v560 = vunpack.c.l.b16 %v272
      %v561 = vunpack.c.l.b16 %v273
      %v562 = vunpack.c.l.b16 %v274
      %v563 = vunpack.c.l.b16 %v275
      %v564 = vunpack.c.l.b16 %v276
      %v565 = vunpack.c.l.b16 %v277
      %v566 = vunpack.c.l.b16 %v278
      %v567 = vunpack.c.l.b16 %v279
      %v568 = vunpack.c.l.b16 %v280
      %v569 = vunpack.c.l.b16 %v281
      %v570 = vunpack.c.l.b16 %v282
      %v571 = vunpack.c.l.b16 %v283
      %v572 = vunpack.c.l.b16 %v284
      %v573 = vunpack.c.l.b16 %v285
      %v574 = vunpack.c.l.b16 %v286
      %v575 = vunpack.c.l.b16 %v287
      %v576 = vunpack.c.l.b16 %v288
      %v577 = vunpack.c.l.b16 %v289
      %v578 = vunpack.c.l.b16 %v290
      %v579 = vunpack.c.l.b16 %v291
      %v580 = vunpack.c.l.b16 %v292
      %v581 = vunpack.c.l.b16 %v293
      %v582 = vunpack.c.l.b16 %v294
      %v583 = vunpack.c.l.b16 %v295
      %v584 = vpack.c.b16 %v521, %v520
      %v585 = vpack.c.b16 %v523, %v522
      %v586 = vpack.c.b16 %v525, %v524
      %v587 = vpack.c.b16 %v527, %v526
      %v588 = vpack.c.b16 %v529, %v528
      %v589 = vpack.c.b16 %v531, %v530
      %v590 = vpack.c.b16 %v533, %v532
      %v591 = vpack.c.b16 %v535, %v534
      %v592 = vpack.c.b16 %v537, %v536
      %v593 = vpack.c.b16 %v539, %v538
      %v594 = vpack.c.b16 %v541, %v540
      %v595 = vpack.c.b16 %v543, %v542
      %v596 = vpack.c.b16 %v545, %v544
      %v597 = vpack.c.b16 %v547, %v546
      %v598 = vpack.c.b16 %v549, %v548
      %v599 = vpack.c.b16 %v551, %v550
      %v600 = vpack.c.b16 %v553, %v552
      %v601 = vpack.c.b16 %v555, %v554
      %v602 = vpack.c.b16 %v557, %v556
      %v603 = vpack.c.b16 %v559, %v558
      %v604 = vpack.c.b16 %v561, %v560
      %v605 = vpack.c.b16 %v563, %v562
      %v606 = vpack.c.b16 %v565, %v564
      %v607 = vpack.c.b16 %v567, %v566
      %v608 = vpack.c.b16 %v569, %v568
      %v609 = vpack.c.b16 %v571, %v570
      %v610 = vpack.c.b16 %v573, %v572
      %v611 = vpack.c.b16 %v575, %v574
      %v612 = vpack.c.b16 %v577, %v576
      %v613 = vpack.c.b16 %v579, %v578
      %v614 = vpack.c.b16 %v581, %v580
      %v615 = vpack.c.b16 %v583, %v582
      %648 = vmatprep.subr.bf16.mxu0 0
      %649 = vmatpush1.bf16.msra.mxu0 %v591
      %650 = vmatprep.subr.bf16.mxu0 0
      %651 = vmatpush1.bf16.msra.mxu0 %v590
      %652 = vmatprep.subr.bf16.mxu0 0
      %653 = vmatpush1.bf16.msra.mxu0 %v589
      %654 = vmatprep.subr.bf16.mxu0 0
      %655 = vmatpush1.bf16.msra.mxu0 %v588
      %656 = vmatprep.subr.bf16.mxu0 0
      %657 = vmatpush1.bf16.msra.mxu0 %v587
      %658 = vmatprep.subr.bf16.mxu0 0
      %659 = vmatpush1.bf16.msra.mxu0 %v586
      %660 = vmatprep.subr.bf16.mxu0 0
      %661 = vmatpush1.bf16.msra.mxu0 %v585
      %662 = vmatprep.subr.bf16.mxu0 0
      %663 = vmatpush1.bf16.msra.mxu0 %v584
      %664 = vmatprep.subr.bf16.mxu0 0
      %665 = vmatpush2.bf16.msra.mxu0 %v599
      %666 = vmatprep.subr.bf16.mxu0 0
      %667 = vmatpush2.bf16.msra.mxu0 %v598
      %668 = vmatprep.subr.bf16.mxu0 0
      %669 = vmatpush2.bf16.msra.mxu0 %v597
      %670 = vmatprep.subr.bf16.mxu0 0
      %671 = vmatpush2.bf16.msra.mxu0 %v596
      %672 = vmatprep.subr.bf16.mxu0 0
      %673 = vmatpush2.bf16.msra.mxu0 %v595
      %674 = vmatprep.subr.bf16.mxu0 0
      %675 = vmatpush2.bf16.msra.mxu0 %v594
      %676 = vmatprep.subr.bf16.mxu0 0
      %677 = vmatpush2.bf16.msra.mxu0 %v593
      %678 = vmatprep.subr.bf16.mxu0 0
      %679 = vmatpush2.bf16.msra.mxu0 %v592
      %680 = vmatprep.mubr.bf16.mxu0 %v393
      %681 = vmatmul.mubr.bf16.gmra.mxu0 %v392
      %v682 = vpop.f32.mrf.mxu0
      %v683 = vadd.f32 0.0, %v682
      %v684 = vpop.f32.mrf.mxu0
      %v685 = vpop.f32.mrf.mxu0
      %v686 = vadd.f32 0.0, %v685
      %v687 = vpop.f32.mrf.mxu0
      %688 = vmatprep.mubr.bf16.mxu0 %v397
      %689 = vmatmul.mubr.bf16.gmra.mxu0 %v396
      %v690 = vpop.f32.mrf.mxu0
      %v691 = vadd.f32 0.0, %v690
      %v692 = vpop.f32.mrf.mxu0
      %v693 = vpop.f32.mrf.mxu0
      %v694 = vadd.f32 0.0, %v693
      %v695 = vpop.f32.mrf.mxu0
      %696 = vmatprep.mubr.bf16.mxu0 %v401
      %697 = vmatmul.mubr.bf16.gmra.mxu0 %v400
      %v698 = vpop.f32.mrf.mxu0
      %v699 = vadd.f32 0.0, %v698
      %v700 = vpop.f32.mrf.mxu0
      %v701 = vpop.f32.mrf.mxu0
      %v702 = vadd.f32 0.0, %v701
      %v703 = vpop.f32.mrf.mxu0
      %704 = vmatprep.mubr.bf16.mxu0 %v405
      %705 = vmatmul.mubr.bf16.gmra.mxu0 %v404
      %v706 = vpop.f32.mrf.mxu0
      %v707 = vadd.f32 0.0, %v706
      %v708 = vpop.f32.mrf.mxu0
      %v709 = vpop.f32.mrf.mxu0
      %v710 = vadd.f32 0.0, %v709
      %v711 = vpop.f32.mrf.mxu0
      %712 = vmatprep.mubr.bf16.mxu0 %v409
      %713 = vmatmul.mubr.bf16.gmra.mxu0 %v408
      %v714 = vpop.f32.mrf.mxu0
      %v715 = vadd.f32 0.0, %v714
      %v716 = vpop.f32.mrf.mxu0
      %v717 = vpop.f32.mrf.mxu0
      %v718 = vadd.f32 0.0, %v717
      %v719 = vpop.f32.mrf.mxu0
      %720 = vmatprep.mubr.bf16.mxu0 %v413
      %721 = vmatmul.mubr.bf16.gmra.mxu0 %v412
      %v722 = vpop.f32.mrf.mxu0
      %v723 = vadd.f32 0.0, %v722
      %v724 = vpop.f32.mrf.mxu0
      %v725 = vpop.f32.mrf.mxu0
      %v726 = vadd.f32 0.0, %v725
      %v727 = vpop.f32.mrf.mxu0
      %728 = vmatprep.mubr.bf16.mxu0 %v417
      %729 = vmatmul.mubr.bf16.gmra.mxu0 %v416
      %v730 = vpop.f32.mrf.mxu0
      %v731 = vadd.f32 0.0, %v730
      %v732 = vpop.f32.mrf.mxu0
      %v733 = vpop.f32.mrf.mxu0
      %v734 = vadd.f32 0.0, %v733
      %v735 = vpop.f32.mrf.mxu0
      %736 = vmatprep.mubr.bf16.mxu0 %v421
      %737 = vmatmul.mubr.bf16.gmra.mxu0 %v420
      %v738 = vpop.f32.mrf.mxu0
      %v739 = vadd.f32 0.0, %v738
      %v740 = vpop.f32.mrf.mxu0
      %v741 = vpop.f32.mrf.mxu0
      %v742 = vadd.f32 0.0, %v741
      %v743 = vpop.f32.mrf.mxu0
      %744 = vdwg.mxu0
      %745 = vmatprep.subr.bf16.mxu0 0
      %746 = vmatpush1.bf16.msra.mxu0 %v607
      %747 = vmatprep.subr.bf16.mxu0 0
      %748 = vmatpush1.bf16.msra.mxu0 %v606
      %749 = vmatprep.subr.bf16.mxu0 0
      %750 = vmatpush1.bf16.msra.mxu0 %v605
      %751 = vmatprep.subr.bf16.mxu0 0
      %752 = vmatpush1.bf16.msra.mxu0 %v604
      %753 = vmatprep.subr.bf16.mxu0 0
      %754 = vmatpush1.bf16.msra.mxu0 %v603
      %755 = vmatprep.subr.bf16.mxu0 0
      %756 = vmatpush1.bf16.msra.mxu0 %v602
      %757 = vmatprep.subr.bf16.mxu0 0
      %758 = vmatpush1.bf16.msra.mxu0 %v601
      %759 = vmatprep.subr.bf16.mxu0 0
      %760 = vmatpush1.bf16.msra.mxu0 %v600
      %761 = vmatprep.subr.bf16.mxu0 0
      %762 = vmatpush2.bf16.msra.mxu0 %v615
      %763 = vmatprep.subr.bf16.mxu0 0
      %764 = vmatpush2.bf16.msra.mxu0 %v614
      %765 = vmatprep.subr.bf16.mxu0 0
      %766 = vmatpush2.bf16.msra.mxu0 %v613
      %767 = vmatprep.subr.bf16.mxu0 0
      %768 = vmatpush2.bf16.msra.mxu0 %v612
      %769 = vmatprep.subr.bf16.mxu0 0
      %770 = vmatpush2.bf16.msra.mxu0 %v611
      %771 = vmatprep.subr.bf16.mxu0 0
      %772 = vmatpush2.bf16.msra.mxu0 %v610
      %773 = vmatprep.subr.bf16.mxu0 0
      %774 = vmatpush2.bf16.msra.mxu0 %v609
      %775 = vmatprep.subr.bf16.mxu0 0
      %776 = vmatpush2.bf16.msra.mxu0 %v608
      %777 = vmatprep.mubr.bf16.mxu0 %v395
      %778 = vmatmul.mubr.bf16.gmra.mxu0 %v394
      %v779 = vpop.f32.mrf.mxu0
      %v780 = vadd.f32 %v683, %v779
      %v781 = vpop.f32.mrf.mxu0
      %v782 = vpop.f32.mrf.mxu0
      %v783 = vadd.f32 %v686, %v782
      %v784 = vpop.f32.mrf.mxu0
      %785 = vmatprep.mubr.bf16.mxu0 %v399
      %786 = vmatmul.mubr.bf16.gmra.mxu0 %v398
      %v787 = vpop.f32.mrf.mxu0
      %v788 = vadd.f32 %v691, %v787
      %v789 = vpop.f32.mrf.mxu0
      %v790 = vpop.f32.mrf.mxu0
      %v791 = vadd.f32 %v694, %v790
      %v792 = vpop.f32.mrf.mxu0
      %793 = vmatprep.mubr.bf16.mxu0 %v403
      %794 = vmatmul.mubr.bf16.gmra.mxu0 %v402
      %v795 = vpop.f32.mrf.mxu0
      %v796 = vadd.f32 %v699, %v795
      %v797 = vpop.f32.mrf.mxu0
      %v798 = vpop.f32.mrf.mxu0
      %v799 = vadd.f32 %v702, %v798
      %v800 = vpop.f32.mrf.mxu0
      %801 = vmatprep.mubr.bf16.mxu0 %v407
      %802 = vmatmul.mubr.bf16.gmra.mxu0 %v406
      %v803 = vpop.f32.mrf.mxu0
      %v804 = vadd.f32 %v707, %v803
      %v805 = vpop.f32.mrf.mxu0
      %v806 = vpop.f32.mrf.mxu0
      %v807 = vadd.f32 %v710, %v806
      %v808 = vpop.f32.mrf.mxu0
      %809 = vmatprep.mubr.bf16.mxu0 %v411
      %810 = vmatmul.mubr.bf16.gmra.mxu0 %v410
      %v811 = vpop.f32.mrf.mxu0
      %v812 = vadd.f32 %v715, %v811
      %v813 = vpop.f32.mrf.mxu0
      %v814 = vpop.f32.mrf.mxu0
      %v815 = vadd.f32 %v718, %v814
      %v816 = vpop.f32.mrf.mxu0
      %817 = vmatprep.mubr.bf16.mxu0 %v415
      %818 = vmatmul.mubr.bf16.gmra.mxu0 %v414
      %v819 = vpop.f32.mrf.mxu0
      %v820 = vadd.f32 %v723, %v819
      %v821 = vpop.f32.mrf.mxu0
      %v822 = vpop.f32.mrf.mxu0
      %v823 = vadd.f32 %v726, %v822
      %v824 = vpop.f32.mrf.mxu0
      %825 = vmatprep.mubr.bf16.mxu0 %v419
      %826 = vmatmul.mubr.bf16.gmra.mxu0 %v418
      %v827 = vpop.f32.mrf.mxu0
      %v828 = vadd.f32 %v731, %v827
      %v829 = vpop.f32.mrf.mxu0
      %v830 = vpop.f32.mrf.mxu0
      %v831 = vadd.f32 %v734, %v830
      %v832 = vpop.f32.mrf.mxu0
      %833 = vmatprep.mubr.bf16.mxu0 %v423
      %834 = vmatmul.mubr.bf16.gmra.mxu0 %v422
      %v835 = vpop.f32.mrf.mxu0
      %v836 = vadd.f32 %v739, %v835
      %v837 = vpop.f32.mrf.mxu0
      %v838 = vpop.f32.mrf.mxu0
      %v839 = vadd.f32 %v742, %v838
      %v840 = vpop.f32.mrf.mxu0
      %841 = vdwg.mxu0
      %v842 = vld [vmem:[%s191] sm:$0xff]
      %v843 = vld [vmem:[%s191 + $0x8] sm:$0xff]
      %v844 = vld [vmem:[%s191 + $0x10] sm:$0xff]
      %v845 = vld [vmem:[%s191 + $0x18] sm:$0xff]
      %v846 = vld [vmem:[%s191 + $0x20] sm:$0xff]
      %v847 = vld [vmem:[%s191 + $0x28] sm:$0xff]
      %v848 = vld [vmem:[%s191 + $0x30] sm:$0xff]
      %v849 = vld [vmem:[%s191 + $0x38] sm:$0xff]
      %v850 = vld [vmem:[%s191 + $0x40] sm:$0xff]
      %v851 = vld [vmem:[%s191 + $0x48] sm:$0xff]
      %v852 = vld [vmem:[%s191 + $0x50] sm:$0xff]
      %v853 = vld [vmem:[%s191 + $0x58] sm:$0xff]
      %v854 = vld [vmem:[%s191 + $0x60] sm:$0xff]
      %v855 = vld [vmem:[%s191 + $0x68] sm:$0xff]
      %v856 = vld [vmem:[%s191 + $0x70] sm:$0xff]
      %v857 = vld [vmem:[%s191 + $0x78] sm:$0xff]
      %859 = vset.pattern.permute.xlu0 0
      %860 = vperm.xlu0 %859, %v842
      %v861 = vpop.permute.xlu0 %860
      %864 = vset.pattern.permute.xlu0 0
      %865 = vperm.xlu0 %864, %v843
      %v866 = vpop.permute.xlu0 %865
      %869 = vset.pattern.permute.xlu0 0
      %870 = vperm.xlu0 %869, %v844
      %v871 = vpop.permute.xlu0 %870
      %874 = vset.pattern.permute.xlu0 0
      %875 = vperm.xlu0 %874, %v845
      %v876 = vpop.permute.xlu0 %875
      %879 = vset.pattern.permute.xlu0 0
      %880 = vperm.xlu0 %879, %v846
      %v881 = vpop.permute.xlu0 %880
      %884 = vset.pattern.permute.xlu0 0
      %885 = vperm.xlu0 %884, %v847
      %v886 = vpop.permute.xlu0 %885
      %889 = vset.pattern.permute.xlu0 0
      %890 = vperm.xlu0 %889, %v848
      %v891 = vpop.permute.xlu0 %890
      %894 = vset.pattern.permute.xlu0 0
      %895 = vperm.xlu0 %894, %v849
      %v896 = vpop.permute.xlu0 %895
      %899 = vset.pattern.permute.xlu0 0
      %900 = vperm.xlu0 %899, %v850
      %v901 = vpop.permute.xlu0 %900
      %904 = vset.pattern.permute.xlu0 0
      %905 = vperm.xlu0 %904, %v851
      %v906 = vpop.permute.xlu0 %905
      %909 = vset.pattern.permute.xlu0 0
      %910 = vperm.xlu0 %909, %v852
      %v911 = vpop.permute.xlu0 %910
      %914 = vset.pattern.permute.xlu0 0
      %915 = vperm.xlu0 %914, %v853
      %v916 = vpop.permute.xlu0 %915
      %919 = vset.pattern.permute.xlu0 0
      %920 = vperm.xlu0 %919, %v854
      %v921 = vpop.permute.xlu0 %920
      %924 = vset.pattern.permute.xlu0 0
      %925 = vperm.xlu0 %924, %v855
      %v926 = vpop.permute.xlu0 %925
      %929 = vset.pattern.permute.xlu0 0
      %930 = vperm.xlu0 %929, %v856
      %v931 = vpop.permute.xlu0 %930
      %934 = vset.pattern.permute.xlu0 0
      %935 = vperm.xlu0 %934, %v857
      %v936 = vpop.permute.xlu0 %935
      %v938 = vmul.f32 %v861, %v780
      %v939 = vmul.f32 %v866, %v783
      %v940 = vmul.f32 %v871, %v788
      %v941 = vmul.f32 %v876, %v791
      %v942 = vmul.f32 %v881, %v796
      %v943 = vmul.f32 %v886, %v799
      %v944 = vmul.f32 %v891, %v804
      %v945 = vmul.f32 %v896, %v807
      %v946 = vmul.f32 %v901, %v812
      %v947 = vmul.f32 %v906, %v815
      %v948 = vmul.f32 %v911, %v820
      %v949 = vmul.f32 %v916, %v823
      %v950 = vmul.f32 %v921, %v828
      %v951 = vmul.f32 %v926, %v831
      %v952 = vmul.f32 %v931, %v836
      %v953 = vmul.f32 %v936, %v839
      %954 = vst [vmem:[%s197] sm:$0xff] %v938
      %955 = vst [vmem:[%s197 + $0x8] sm:$0xff] %v939
      %956 = vst [vmem:[%s197 + $0x10] sm:$0xff] %v940
      %957 = vst [vmem:[%s197 + $0x18] sm:$0xff] %v941
      %958 = vst [vmem:[%s197 + $0x20] sm:$0xff] %v942
      %959 = vst [vmem:[%s197 + $0x28] sm:$0xff] %v943
      %960 = vst [vmem:[%s197 + $0x30] sm:$0xff] %v944
      %961 = vst [vmem:[%s197 + $0x38] sm:$0xff] %v945
      %962 = vst [vmem:[%s197 + $0x40] sm:$0xff] %v946
      %963 = vst [vmem:[%s197 + $0x48] sm:$0xff] %v947
      %964 = vst [vmem:[%s197 + $0x50] sm:$0xff] %v948
      %965 = vst [vmem:[%s197 + $0x58] sm:$0xff] %v949
      %966 = vst [vmem:[%s197 + $0x60] sm:$0xff] %v950
      %967 = vst [vmem:[%s197 + $0x68] sm:$0xff] %v951
      %968 = vst [vmem:[%s197 + $0x70] sm:$0xff] %v952
      %969 = vst [vmem:[%s197 + $0x78] sm:$0xff] %v953
      %s970 = smul.u32 16, %s14
      %p971 = scmp.lt.s32.totalorder %s970, 63
      %s972 = scalar_select %p971, %s970, 63
      %s973 = smul.addr %s972, 8
      %s974 = scalar_lea.vmem %s3, %s973
      // Predicated region
      $region33: #{gcn_decor_forward.7} parent=31 // pred_check
        %p975 = pneg %p105
      $region34: #{gcn_decor_forward.7} parent=31 // pred_check_branch
        %977 = sbr.rel (%p975) target = $region36
      $region35: #{gcn_decor_forward.7} parent=31 // pred_region
        %s978 = smul.u32 16, %s14
      $region36: #{gcn_decor_forward.7} parent=31 // pred_fallthru
        _
    $region32: #{gcn_decor_forward.7} parent=5 // pred_fallthru
      _
    %p979 = scmp.le.s32.totalorder 2, %s9
    // Predicated region
    $region37: #{gcn_decor_forward.7} parent=5 // pred_check
      %p980 = pneg %p979
    $region38: #{gcn_decor_forward.7} parent=5 // pred_check_branch
      %982 = sbr.rel (%p980) target = $region40
    $region39: #{gcn_decor_forward.7} parent=5 // pred_region
      %s983 = ssub.s32 %s9, 2
      // Predicated region
      $region41: #{gcn_decor_forward.7} parent=39 // pred_check
        %p984 = pneg %p111
      $region42: #{gcn_decor_forward.7} parent=39 // pred_check_branch
        %986 = sbr.rel (%p984) target = $region44
      $region43: #{gcn_decor_forward.7} parent=39 // pred_region
        %s987 = smul.u32 16, %s15
        %p988 = scmp.lt.s32.totalorder %s987, 63
        %s989 = scalar_select %p988, %s987, 63
        %s990 = smul.addr %s989, 8
        %s991 = scalar_lea.vmem %s3, %s990
      $region44: #{gcn_decor_forward.7} parent=39 // pred_fallthru
        _
    $region40: #{gcn_decor_forward.7} parent=5 // pred_fallthru
      _
  $region6: #{gcn_decor_forward.7} parent=0 // loop_footer
    %s13 = sadd.s32 1, %s9
  $region7: #{gcn_decor_forward.7} parent=0 // loop_footer_branch
    %8 = sbr.rel target = $region3
  $region8: #{gcn_decor_forward.7} parent=0 // loop_exit
    _

// kernel: gcn_decor_forward.5
$region0: #{gcn_decor_forward.5}
  #allocation0 [shape = 'u32[]', space=smem, size = 0x4, offset = 0x4, fixed_abs, tag = 'smem constant byte address 0x4 - core index']
  #allocation1 [shape = 'u32[144,128]{1,0:T(1,128)}', space=vmem, size = 0x12000, scoped, tag = 'internal scratch']
  %s0 = inlined_call_operand.hbm [shape: f32[512,512], index: 0, kind: input, shape index: {}]
  %s1 = inlined_call_operand.vmem [shape: bf16[512,512], index: 1, kind: output, shape index: {0}]
  %s2 = inlined_call_operand.vmem [shape: f32[512,1], index: 2, kind: output, shape index: {1}]
  %s3 = inlined_call_operand.vmem [shape: f32[8,512], index: 3, kind: output, shape index: {2}]
  %4 = xla_tuple %s1, %s2, %s3
  %s5 = sld [smem:[#allocation0]]
  $region65: #{gcn_decor_forward.5} parent=0
    _
  %s7 = ssub.s32 1, %s5
  %s8 = scalar_select 0, %s7, %s5
  $region1: #{gcn_decor_forward.5} parent=0
    #allocation2 [shape = 'u8[524288]{0}', space=vmem, size = 0x80000, scoped, tag = 'input window, operand 0']
    #allocation3 [shape = 's32[2]{0}', space=sflag, size = 0x8, scoped, tag = 'scoped memory for gcn_decor_forward.5']
    %9 = vsyncpa [#allocation3], 0
    %s10 = scalar_lea.sflag [#allocation3], 1
    %11 = vsyncpa %s10, 0
    loop: start=0, step=1, limit=6
    $region2: #{gcn_decor_forward.5} parent=1 // loop_pre_header
      _
    $region3: #{gcn_decor_forward.5} parent=1 // loop_header
      %s13 = sphi 0, %s17
      %p14 = scmp.ge.s32.totalorder %s13, 6
      %s23 = sphi 0, %s25
      %s26 = sphi 0, %s23
      %s27 = sphi 0, %s26
      %s43 = sphi 0, %s27
      %s49 = sphi 0, %s51
      %s52 = sphi 0, %s49
      %s53 = sphi 0, %s52
      %s69 = sphi 0, %s53
      %s75 = sphi 0, %s77
      %s78 = sphi 0, %s75
      %s79 = sphi 0, %s78
      %s95 = sphi 0, %s79
      %s99 = sphi 0, %s99
      %s101 = sphi 0, %s99
      %s102 = sphi 0, %s101
      %s116 = sphi 0, %s102
    $region4: #{gcn_decor_forward.5} parent=1 // loop_header_branch
      %16 = sbr.rel (%p14) target = $region8
    $region5: #{gcn_decor_forward.5} parent=1 // loop_body
      %s18 = ssub.s32 %s13, 1
      %s19 = ssub.s32 %s13, 2
      %s20 = sadd.s32 %s13, 1
      %s21 = ssub.s32 %s13, %s20
      %p22 = scmp.eq.s32.totalorder %s21, 0
      %s24 = sadd.s32 %s23, 1
      %s25 = scalar_select %p22, %s23, %s24
      %p28 = pneg %p22
      %p29 = scmp.eq.s32.totalorder %s13, 3
      %p30 = por %p28, %p29
      %p31 = scmp.ne.s32.totalorder %s23, %s26
      %p32 = scmp.eq.s32.totalorder %s13, 0
      %p33 = por %p31, %p32
      %p34 = scmp.ne.s32.totalorder %s23, %s26
      %p35 = scmp.eq.s32.totalorder %s18, 3
      %p36 = por %p34, %p35
      %p37 = scmp.ne.s32.totalorder %s26, %s27
      %p38 = scmp.eq.s32.totalorder %s18, 0
      %p39 = por %p37, %p38
      %p40 = scmp.ne.s32.totalorder %s26, %s27
      %p41 = scmp.eq.s32.totalorder %s19, 3
      %p42 = por %p40, %p41
      %p44 = scmp.ne.s32.totalorder %s27, %s43
      %p45 = scmp.eq.s32.totalorder %s19, 0
      %p46 = por %p44, %p45
      %s47 = ssub.s32 %s13, %s20
      %p48 = scmp.eq.s32.totalorder %s47, 0
      %s50 = sadd.s32 %s49, 1
      %s51 = scalar_select %p48, %s49, %s50
      %p54 = pneg %p48
      %p55 = scmp.eq.s32.totalorder %s13, 3
      %p56 = por %p54, %p55
      %p57 = scmp.ne.s32.totalorder %s49, %s52
      %p58 = scmp.eq.s32.totalorder %s13, 0
      %p59 = por %p57, %p58
      %p60 = scmp.ne.s32.totalorder %s49, %s52
      %p61 = scmp.eq.s32.totalorder %s18, 3
      %p62 = por %p60, %p61
      %p63 = scmp.ne.s32.totalorder %s52, %s53
      %p64 = scmp.eq.s32.totalorder %s18, 0
      %p65 = por %p63, %p64
      %p66 = scmp.ne.s32.totalorder %s52, %s53
      %p67 = scmp.eq.s32.totalorder %s19, 3
      %p68 = por %p66, %p67
      %p70 = scmp.ne.s32.totalorder %s53, %s69
      %p71 = scmp.eq.s32.totalorder %s19, 0
      %p72 = por %p70, %p71
      %s73 = ssub.s32 %s13, %s20
      %p74 = scmp.eq.s32.totalorder %s73, 0
      %s76 = sadd.s32 %s75, 1
      %s77 = scalar_select %p74, %s75, %s76
      %p80 = pneg %p74
      %p81 = scmp.eq.s32.totalorder %s13, 3
      %p82 = por %p80, %p81
      %p83 = scmp.ne.s32.totalorder %s75, %s78
      %p84 = scmp.eq.s32.totalorder %s13, 0
      %p85 = por %p83, %p84
      %p86 = scmp.ne.s32.totalorder %s75, %s78
      %p87 = scmp.eq.s32.totalorder %s18, 3
      %p88 = por %p86, %p87
      %p89 = scmp.ne.s32.totalorder %s78, %s79
      %p90 = scmp.eq.s32.totalorder %s18, 0
      %p91 = por %p89, %p90
      %p92 = scmp.ne.s32.totalorder %s78, %s79
      %p93 = scmp.eq.s32.totalorder %s19, 3
      %p94 = por %p92, %p93
      %p96 = scmp.ne.s32.totalorder %s79, %s95
      %p97 = scmp.eq.s32.totalorder %s19, 0
      %p98 = por %p96, %p97
      %s100 = sadd.s32 %s99, 1
      %p103 = scmp.eq.s32.totalorder %s13, 3
      %p104 = scmp.ne.s32.totalorder %s99, %s101
      %p105 = scmp.eq.s32.totalorder %s13, 0
      %p106 = por %p104, %p105
      %p107 = scmp.ne.s32.totalorder %s99, %s101
      %p108 = scmp.eq.s32.totalorder %s18, 3
      %p109 = por %p107, %p108
      %p110 = scmp.ne.s32.totalorder %s101, %s102
      %p111 = scmp.eq.s32.totalorder %s18, 0
      %p112 = por %p110, %p111
      %p113 = scmp.ne.s32.totalorder %s101, %s102
      %p114 = scmp.eq.s32.totalorder %s19, 3
      %p115 = por %p113, %p114
      %p117 = scmp.ne.s32.totalorder %s102, %s116
      %p118 = scmp.eq.s32.totalorder %s19, 0
      %p119 = por %p117, %p118
      %p120 = scmp.le.s32.totalorder 1, %s13
      %p121 = scmp.lt.s32.totalorder %s13, 5
      %p122 = pnand %p120, %p121
      %p123 = pneg %p122
      // Predicated region
      $region9: #{gcn_decor_forward.5} parent=5 // pred_check
        _
      $region10: #{gcn_decor_forward.5} parent=5 // pred_check_branch
        %125 = sbr.rel (%p122) target = $region12
      $region11: #{gcn_decor_forward.5} parent=5 // pred_region
        %s126 = ssub.s32 %s13, 1
      $region12: #{gcn_decor_forward.5} parent=5 // pred_fallthru
        _
      %p127 = scmp.lt.s32.totalorder %s13, 4
      // Predicated region
      $region13: #{gcn_decor_forward.5} parent=5 // pred_check
        %p128 = pneg %p127
      $region14: #{gcn_decor_forward.5} parent=5 // pred_check_branch
        %130 = sbr.rel (%p128) target = $region16
      $region15: #{gcn_decor_forward.5} parent=5 // pred_region
        // Predicated region
        $region17: #{gcn_decor_forward.5} parent=15 // pred_check
          %p131 = pneg %p33
        $region18: #{gcn_decor_forward.5} parent=15 // pred_check_branch
          %133 = sbr.rel (%p131) target = $region20
        $region19: #{gcn_decor_forward.5} parent=15 // pred_region
          %s134 = sand.u32 %s23, 1
          %s135 = scalar_lea.sflag [#allocation3], %s134
          %s136 = sand.u32 %s23, 1
          %s137 = smul.addr %s136, 512
          %s138 = scalar_lea.vmem [#allocation2], %s137
          %s139 = smul.u32 16, %s13
          %s141 = ssub.s32 8192, 8192
          %142 = vsyncadd %s135, %s141
          %s143 = smul.addr %s139, 4
          %s144 = smul.addr %s143, 128
          %s145 = scalar_lea.hbm %s0, %s144
          %s146 = sshll.u32 %s138, 4
          %s147 = int_to_ptr.vmem [resolvable:$true] %s146
          %152 = dma.hbm_to_vmem [thread:$0]  %s145, 8192, %s147, %s135, 512, 512, 32
        $region20: #{gcn_decor_forward.5} parent=15 // pred_fallthru
          _
      $region16: #{gcn_decor_forward.5} parent=5 // pred_fallthru
        _
      %p153 = scmp.le.s32.totalorder 1, %s13
      %p154 = scmp.lt.s32.totalorder %s13, 5
      %p155 = pnand %p153, %p154
      %p156 = pneg %p155
      // Predicated region
      $region21: #{gcn_decor_forward.5} parent=5 // pred_check
        _
      $region22: #{gcn_decor_forward.5} parent=5 // pred_check_branch
        %158 = sbr.rel (%p155) target = $region24
      $region23: #{gcn_decor_forward.5} parent=5 // pred_region
        %s159 = ssub.s32 %s13, 1
        %s160 = sand.u32 %s26, 1
        %s161 = scalar_lea.sflag [#allocation3], %s160
        %s162 = sand.u32 %s26, 1
        %s163 = smul.addr %s162, 512
        %s164 = scalar_lea.vmem [#allocation2], %s163
        // Predicated region
        $region25: #{gcn_decor_forward.5} parent=23 // pred_check
          %p165 = pneg %p39
        $region26: #{gcn_decor_forward.5} parent=23 // pred_check_branch
          %167 = sbr.rel (%p165) target = $region28
        $region27: #{gcn_decor_forward.5} parent=23 // pred_region
          %168 = dma.done %s161, 8192
        $region28: #{gcn_decor_forward.5} parent=23 // pred_fallthru
          _
        %s169 = sand.u32 %s26, 1
        %s170 = scalar_lea.sflag [#allocation3], %s169
        %s171 = sand.u32 %s26, 1
        %s172 = smul.addr %s171, 512
        %s173 = scalar_lea.vmem [#allocation2], %s172
        %p174 = pneg %p39
        %p175 = pneg %p36
        %p176 = pneg %p65
        %p177 = pneg %p62
        %s178 = smul.u32 16, %s18
        %p179 = scmp.lt.s32.totalorder %s178, 63
        %s180 = scalar_select %p179, %s178, 63
        %s181 = smul.addr %s180, 4
        %s182 = smul.addr %s181, 4
        %s183 = scalar_lea.vmem %s1, %s182
        %p184 = pneg %p91
        %p185 = pneg %p88
        %s186 = smul.u32 16, %s18
        %p187 = scmp.lt.s32.totalorder %s186, 63
        %s188 = scalar_select %p187, %s186, 63
        %s189 = smul.addr %s188, 8
        %s190 = scalar_lea.vmem %s2, %s189
        %p191 = pneg %p112
        %p192 = pneg %p109
        %s193 = smul.u32 16, %s18
        %s194 = smul.u32 16, %s18
        %p195 = scmp.lt.s32.totalorder %s194, 63
        %s196 = scalar_select %p195, %s194, 63
        %s197 = smul.addr %s196, 4
        %s198 = smul.addr %s197, 4
        %s199 = scalar_lea.vmem %s1, %s198
        %s200 = smul.u32 16, %s18
        %s201 = smul.u32 16, %s18
        %p202 = scmp.lt.s32.totalorder %s201, 63
        %s203 = scalar_select %p202, %s201, 63
        %s204 = smul.addr %s203, 8
        %s205 = scalar_lea.vmem %s2, %s204
        %s206 = smul.u32 16, %s18
        %v209 = vld [vmem:[%s164] sm:$0xff]
        %v210 = vld [vmem:[%s164 + $0x8] sm:$0xff]
        %v211 = vld [vmem:[%s164 + $0x10] sm:$0xff]
        %v212 = vld [vmem:[%s164 + $0x18] sm:$0xff]
        %v213 = vld [vmem:[%s164 + $0x20] sm:$0xff]
        %v214 = vld [vmem:[%s164 + $0x28] sm:$0xff]
        %v215 = vld [vmem:[%s164 + $0x30] sm:$0xff]
        %v216 = vld [vmem:[%s164 + $0x38] sm:$0xff]
        %v217 = vld [vmem:[%s164 + $0x40] sm:$0xff]
        %v218 = vld [vmem:[%s164 + $0x48] sm:$0xff]
        %v219 = vld [vmem:[%s164 + $0x50] sm:$0xff]
        %v220 = vld [vmem:[%s164 + $0x58] sm:$0xff]
        %v221 = vld [vmem:[%s164 + $0x60] sm:$0xff]
        %v222 = vld [vmem:[%s164 + $0x68] sm:$0xff]
        %v223 = vld [vmem:[%s164 + $0x70] sm:$0xff]
        %v224 = vld [vmem:[%s164 + $0x78] sm:$0xff]
        %v225 = vld [vmem:[%s164 + $0x80] sm:$0xff]
        %v226 = vld [vmem:[%s164 + $0x88] sm:$0xff]
        %v227 = vld [vmem:[%s164 + $0x90] sm:$0xff]
        %v228 = vld [vmem:[%s164 + $0x98] sm:$0xff]
        %v229 = vld [vmem:[%s164 + $0xa0] sm:$0xff]
        %v230 = vld [vmem:[%s164 + $0xa8] sm:$0xff]
        %v231 = vld [vmem:[%s164 + $0xb0] sm:$0xff]
        %v232 = vld [vmem:[%s164 + $0xb8] sm:$0xff]
        %v233 = vld [vmem:[%s164 + $0xc0] sm:$0xff]
        %v234 = vld [vmem:[%s164 + $0xc8] sm:$0xff]
        %v235 = vld [vmem:[%s164 + $0xd0] sm:$0xff]
        %v236 = vld [vmem:[%s164 + $0xd8] sm:$0xff]
        %v237 = vld [vmem:[%s164 + $0xe0] sm:$0xff]
        %v238 = vld [vmem:[%s164 + $0xe8] sm:$0xff]
        %v239 = vld [vmem:[%s164 + $0xf0] sm:$0xff]
        %v240 = vld [vmem:[%s164 + $0xf8] sm:$0xff]
        %v241 = vld [vmem:[%s164 + $0x100] sm:$0xff]
        %v242 = vld [vmem:[%s164 + $0x108] sm:$0xff]
        %v243 = vld [vmem:[%s164 + $0x110] sm:$0xff]
        %v244 = vld [vmem:[%s164 + $0x118] sm:$0xff]
        %v245 = vld [vmem:[%s164 + $0x120] sm:$0xff]
        %v246 = vld [vmem:[%s164 + $0x128] sm:$0xff]
        %v247 = vld [vmem:[%s164 + $0x130] sm:$0xff]
        %v248 = vld [vmem:[%s164 + $0x138] sm:$0xff]
        %v249 = vld [vmem:[%s164 + $0x140] sm:$0xff]
        %v250 = vld [vmem:[%s164 + $0x148] sm:$0xff]
        %v251 = vld [vmem:[%s164 + $0x150] sm:$0xff]
        %v252 = vld [vmem:[%s164 + $0x158] sm:$0xff]
        %v253 = vld [vmem:[%s164 + $0x160] sm:$0xff]
        %v254 = vld [vmem:[%s164 + $0x168] sm:$0xff]
        %v255 = vld [vmem:[%s164 + $0x170] sm:$0xff]
        %v256 = vld [vmem:[%s164 + $0x178] sm:$0xff]
        %v257 = vld [vmem:[%s164 + $0x180] sm:$0xff]
        %v258 = vld [vmem:[%s164 + $0x188] sm:$0xff]
        %v259 = vld [vmem:[%s164 + $0x190] sm:$0xff]
        %v260 = vld [vmem:[%s164 + $0x198] sm:$0xff]
        %v261 = vld [vmem:[%s164 + $0x1a0] sm:$0xff]
        %v262 = vld [vmem:[%s164 + $0x1a8] sm:$0xff]
        %v263 = vld [vmem:[%s164 + $0x1b0] sm:$0xff]
        %v264 = vld [vmem:[%s164 + $0x1b8] sm:$0xff]
        %v265 = vld [vmem:[%s164 + $0x1c0] sm:$0xff]
        %v266 = vld [vmem:[%s164 + $0x1c8] sm:$0xff]
        %v267 = vld [vmem:[%s164 + $0x1d0] sm:$0xff]
        %v268 = vld [vmem:[%s164 + $0x1d8] sm:$0xff]
        %v269 = vld [vmem:[%s164 + $0x1e0] sm:$0xff]
        %v270 = vld [vmem:[%s164 + $0x1e8] sm:$0xff]
        %v271 = vld [vmem:[%s164 + $0x1f0] sm:$0xff]
        %v272 = vld [vmem:[%s164 + $0x1f8] sm:$0xff]
        %v273 = vlaneseq
        %v274 = vshrl.u32 %v273, 7
        %v275 = vadd.s32 %v274, 8
        %v276 = vadd.s32 %v274, 16
        %v277 = vadd.s32 %v274, 24
        %v278 = vadd.s32 %v274, 32
        %v279 = vadd.s32 %v274, 40
        %v280 = vadd.s32 %v274, 48
        %v281 = vadd.s32 %v274, 56
        %v282 = vadd.s32 %v274, 64
        %v283 = vadd.s32 %v274, 72
        %v284 = vadd.s32 %v274, 80
        %v285 = vadd.s32 %v274, 88
        %v286 = vadd.s32 %v274, 96
        %v287 = vadd.s32 %v274, 104
        %v288 = vadd.s32 %v274, 112
        %v289 = vadd.s32 %v274, 120
        %s290 = smul.u32 %s18, 128
        %v291 = vstv %s290
        %v292 = vadd.s32 %v274, %v291
        %v293 = vadd.s32 %v275, %v291
        %v294 = vadd.s32 %v276, %v291
        %v295 = vadd.s32 %v277, %v291
        %v296 = vadd.s32 %v278, %v291
        %v297 = vadd.s32 %v279, %v291
        %v298 = vadd.s32 %v280, %v291
        %v299 = vadd.s32 %v281, %v291
        %v300 = vadd.s32 %v282, %v291
        %v301 = vadd.s32 %v283, %v291
        %v302 = vadd.s32 %v284, %v291
        %v303 = vadd.s32 %v285, %v291
        %v304 = vadd.s32 %v286, %v291
        %v305 = vadd.s32 %v287, %v291
        %v306 = vadd.s32 %v288, %v291
        %v307 = vadd.s32 %v289, %v291
        %v308 = vlaneseq
        %v309 = vand.u32 %v308, 127
        %v310 = vadd.s32 %v309, 128
        %v311 = vadd.s32 %v309, 256
        %v312 = vadd.s32 %v309, 384
        %vm313 = vcmp.eq.s32.totalorder %v292, %v309
        %vm314 = vcmp.eq.s32.totalorder %v292, %v310
        %vm315 = vcmp.eq.s32.totalorder %v292, %v311
        %vm316 = vcmp.eq.s32.totalorder %v292, %v312
        %vm317 = vcmp.eq.s32.totalorder %v293, %v309
        %vm318 = vcmp.eq.s32.totalorder %v293, %v310
        %vm319 = vcmp.eq.s32.totalorder %v293, %v311
        %vm320 = vcmp.eq.s32.totalorder %v293, %v312
        %vm321 = vcmp.eq.s32.totalorder %v294, %v309
        %vm322 = vcmp.eq.s32.totalorder %v294, %v310
        %vm323 = vcmp.eq.s32.totalorder %v294, %v311
        %vm324 = vcmp.eq.s32.totalorder %v294, %v312
        %vm325 = vcmp.eq.s32.totalorder %v295, %v309
        %vm326 = vcmp.eq.s32.totalorder %v295, %v310
        %vm327 = vcmp.eq.s32.totalorder %v295, %v311
        %vm328 = vcmp.eq.s32.totalorder %v295, %v312
        %vm329 = vcmp.eq.s32.totalorder %v296, %v309
        %vm330 = vcmp.eq.s32.totalorder %v296, %v310
        %vm331 = vcmp.eq.s32.totalorder %v296, %v311
        %vm332 = vcmp.eq.s32.totalorder %v296, %v312
        %vm333 = vcmp.eq.s32.totalorder %v297, %v309
        %vm334 = vcmp.eq.s32.totalorder %v297, %v310
        %vm335 = vcmp.eq.s32.totalorder %v297, %v311
        %vm336 = vcmp.eq.s32.totalorder %v297, %v312
        %vm337 = vcmp.eq.s32.totalorder %v298, %v309
        %vm338 = vcmp.eq.s32.totalorder %v298, %v310
        %vm339 = vcmp.eq.s32.totalorder %v298, %v311
        %vm340 = vcmp.eq.s32.totalorder %v298, %v312
        %vm341 = vcmp.eq.s32.totalorder %v299, %v309
        %vm342 = vcmp.eq.s32.totalorder %v299, %v310
        %vm343 = vcmp.eq.s32.totalorder %v299, %v311
        %vm344 = vcmp.eq.s32.totalorder %v299, %v312
        %vm345 = vcmp.eq.s32.totalorder %v300, %v309
        %vm346 = vcmp.eq.s32.totalorder %v300, %v310
        %vm347 = vcmp.eq.s32.totalorder %v300, %v311
        %vm348 = vcmp.eq.s32.totalorder %v300, %v312
        %vm349 = vcmp.eq.s32.totalorder %v301, %v309
        %vm350 = vcmp.eq.s32.totalorder %v301, %v310
        %vm351 = vcmp.eq.s32.totalorder %v301, %v311
        %vm352 = vcmp.eq.s32.totalorder %v301, %v312
        %vm353 = vcmp.eq.s32.totalorder %v302, %v309
        %vm354 = vcmp.eq.s32.totalorder %v302, %v310
        %vm355 = vcmp.eq.s32.totalorder %v302, %v311
        %vm356 = vcmp.eq.s32.totalorder %v302, %v312
        %vm357 = vcmp.eq.s32.totalorder %v303, %v309
        %vm358 = vcmp.eq.s32.totalorder %v303, %v310
        %vm359 = vcmp.eq.s32.totalorder %v303, %v311
        %vm360 = vcmp.eq.s32.totalorder %v303, %v312
        %vm361 = vcmp.eq.s32.totalorder %v304, %v309
        %vm362 = vcmp.eq.s32.totalorder %v304, %v310
        %vm363 = vcmp.eq.s32.totalorder %v304, %v311
        %vm364 = vcmp.eq.s32.totalorder %v304, %v312
        %vm365 = vcmp.eq.s32.totalorder %v305, %v309
        %vm366 = vcmp.eq.s32.totalorder %v305, %v310
        %vm367 = vcmp.eq.s32.totalorder %v305, %v311
        %vm368 = vcmp.eq.s32.totalorder %v305, %v312
        %vm369 = vcmp.eq.s32.totalorder %v306, %v309
        %vm370 = vcmp.eq.s32.totalorder %v306, %v310
        %vm371 = vcmp.eq.s32.totalorder %v306, %v311
        %vm372 = vcmp.eq.s32.totalorder %v306, %v312
        %vm373 = vcmp.eq.s32.totalorder %v307, %v309
        %vm374 = vcmp.eq.s32.totalorder %v307, %v310
        %vm375 = vcmp.eq.s32.totalorder %v307, %v311
        %vm376 = vcmp.eq.s32.totalorder %v307, %v312
        %v377 = vadd.f32 %v209, 1.0
        %v378 = vadd.f32 %v210, 1.0
        %v379 = vadd.f32 %v211, 1.0
        %v380 = vadd.f32 %v212, 1.0
        %v381 = vadd.f32 %v213, 1.0
        %v382 = vadd.f32 %v214, 1.0
        %v383 = vadd.f32 %v215, 1.0
        %v384 = vadd.f32 %v216, 1.0
        %v385 = vadd.f32 %v217, 1.0
        %v386 = vadd.f32 %v218, 1.0
        %v387 = vadd.f32 %v219, 1.0
        %v388 = vadd.f32 %v220, 1.0
        %v389 = vadd.f32 %v221, 1.0
        %v390 = vadd.f32 %v222, 1.0
        %v391 = vadd.f32 %v223, 1.0
        %v392 = vadd.f32 %v224, 1.0
        %v393 = vadd.f32 %v225, 1.0
        %v394 = vadd.f32 %v226, 1.0
        %v395 = vadd.f32 %v227, 1.0
        %v396 = vadd.f32 %v228, 1.0
        %v397 = vadd.f32 %v229, 1.0
        %v398 = vadd.f32 %v230, 1.0
        %v399 = vadd.f32 %v231, 1.0
        %v400 = vadd.f32 %v232, 1.0
        %v401 = vadd.f32 %v233, 1.0
        %v402 = vadd.f32 %v234, 1.0
        %v403 = vadd.f32 %v235, 1.0
        %v404 = vadd.f32 %v236, 1.0
        %v405 = vadd.f32 %v237, 1.0
        %v406 = vadd.f32 %v238, 1.0
        %v407 = vadd.f32 %v239, 1.0
        %v408 = vadd.f32 %v240, 1.0
        %v409 = vadd.f32 %v241, 1.0
        %v410 = vadd.f32 %v242, 1.0
        %v411 = vadd.f32 %v243, 1.0
        %v412 = vadd.f32 %v244, 1.0
        %v413 = vadd.f32 %v245, 1.0
        %v414 = vadd.f32 %v246, 1.0
        %v415 = vadd.f32 %v247, 1.0
        %v416 = vadd.f32 %v248, 1.0
        %v417 = vadd.f32 %v249, 1.0
        %v418 = vadd.f32 %v250, 1.0
        %v419 = vadd.f32 %v251, 1.0
        %v420 = vadd.f32 %v252, 1.0
        %v421 = vadd.f32 %v253, 1.0
        %v422 = vadd.f32 %v254, 1.0
        %v423 = vadd.f32 %v255, 1.0
        %v424 = vadd.f32 %v256, 1.0
        %v425 = vadd.f32 %v257, 1.0
        %v426 = vadd.f32 %v258, 1.0
        %v427 = vadd.f32 %v259, 1.0
        %v428 = vadd.f32 %v260, 1.0
        %v429 = vadd.f32 %v261, 1.0
        %v430 = vadd.f32 %v262, 1.0
        %v431 = vadd.f32 %v263, 1.0
        %v432 = vadd.f32 %v264, 1.0
        %v433 = vadd.f32 %v265, 1.0
        %v434 = vadd.f32 %v266, 1.0
        %v435 = vadd.f32 %v267, 1.0
        %v436 = vadd.f32 %v268, 1.0
        %v437 = vadd.f32 %v269, 1.0
        %v438 = vadd.f32 %v270, 1.0
        %v439 = vadd.f32 %v271, 1.0
        %v440 = vadd.f32 %v272, 1.0
        %v441 = vsel %vm313, %v377, %v209
        %v442 = vsel %vm314, %v378, %v210
        %v443 = vsel %vm315, %v379, %v211
        %v444 = vsel %vm316, %v380, %v212
        %v445 = vsel %vm317, %v381, %v213
        %v446 = vsel %vm318, %v382, %v214
        %v447 = vsel %vm319, %v383, %v215
        %v448 = vsel %vm320, %v384, %v216
        %v449 = vsel %vm321, %v385, %v217
        %v450 = vsel %vm322, %v386, %v218
        %v451 = vsel %vm323, %v387, %v219
        %v452 = vsel %vm324, %v388, %v220
        %v453 = vsel %vm325, %v389, %v221
        %v454 = vsel %vm326, %v390, %v222
        %v455 = vsel %vm327, %v391, %v223
        %v456 = vsel %vm328, %v392, %v224
        %v457 = vsel %vm329, %v393, %v225
        %v458 = vsel %vm330, %v394, %v226
        %v459 = vsel %vm331, %v395, %v227
        %v460 = vsel %vm332, %v396, %v228
        %v461 = vsel %vm333, %v397, %v229
        %v462 = vsel %vm334, %v398, %v230
        %v463 = vsel %vm335, %v399, %v231
        %v464 = vsel %vm336, %v400, %v232
        %v465 = vsel %vm337, %v401, %v233
        %v466 = vsel %vm338, %v402, %v234
        %v467 = vsel %vm339, %v403, %v235
        %v468 = vsel %vm340, %v404, %v236
        %v469 = vsel %vm341, %v405, %v237
        %v470 = vsel %vm342, %v406, %v238
        %v471 = vsel %vm343, %v407, %v239
        %v472 = vsel %vm344, %v408, %v240
        %v473 = vsel %vm345, %v409, %v241
        %v474 = vsel %vm346, %v410, %v242
        %v475 = vsel %vm347, %v411, %v243
        %v476 = vsel %vm348, %v412, %v244
        %v477 = vsel %vm349, %v413, %v245
        %v478 = vsel %vm350, %v414, %v246
        %v479 = vsel %vm351, %v415, %v247
        %v480 = vsel %vm352, %v416, %v248
        %v481 = vsel %vm353, %v417, %v249
        %v482 = vsel %vm354, %v418, %v250
        %v483 = vsel %vm355, %v419, %v251
        %v484 = vsel %vm356, %v420, %v252
        %v485 = vsel %vm357, %v421, %v253
        %v486 = vsel %vm358, %v422, %v254
        %v487 = vsel %vm359, %v423, %v255
        %v488 = vsel %vm360, %v424, %v256
        %v489 = vsel %vm361, %v425, %v257
        %v490 = vsel %vm362, %v426, %v258
        %v491 = vsel %vm363, %v427, %v259
        %v492 = vsel %vm364, %v428, %v260
        %v493 = vsel %vm365, %v429, %v261
        %v494 = vsel %vm366, %v430, %v262
        %v495 = vsel %vm367, %v431, %v263
        %v496 = vsel %vm368, %v432, %v264
        %v497 = vsel %vm369, %v433, %v265
        %v498 = vsel %vm370, %v434, %v266
        %v499 = vsel %vm371, %v435, %v267
        %v500 = vsel %vm372, %v436, %v268
        %v501 = vsel %vm373, %v437, %v269
        %v502 = vsel %vm374, %v438, %v270
        %v503 = vsel %vm375, %v439, %v271
        %v504 = vsel %vm376, %v440, %v272
        %v505 = vpack.c.bf16 %v445, %v441
        %v506 = vpack.c.bf16 %v446, %v442
        %v507 = vpack.c.bf16 %v447, %v443
        %v508 = vpack.c.bf16 %v448, %v444
        %v509 = vpack.c.bf16 %v453, %v449
        %v510 = vpack.c.bf16 %v454, %v450
        %v511 = vpack.c.bf16 %v455, %v451
        %v512 = vpack.c.bf16 %v456, %v452
        %v513 = vpack.c.bf16 %v461, %v457
        %v514 = vpack.c.bf16 %v462, %v458
        %v515 = vpack.c.bf16 %v463, %v459
        %v516 = vpack.c.bf16 %v464, %v460
        %v517 = vpack.c.bf16 %v469, %v465
        %v518 = vpack.c.bf16 %v470, %v466
        %v519 = vpack.c.bf16 %v471, %v467
        %v520 = vpack.c.bf16 %v472, %v468
        %v521 = vpack.c.bf16 %v477, %v473
        %v522 = vpack.c.bf16 %v478, %v474
        %v523 = vpack.c.bf16 %v479, %v475
        %v524 = vpack.c.bf16 %v480, %v476
        %v525 = vpack.c.bf16 %v485, %v481
        %v526 = vpack.c.bf16 %v486, %v482
        %v527 = vpack.c.bf16 %v487, %v483
        %v528 = vpack.c.bf16 %v488, %v484
        %v529 = vpack.c.bf16 %v493, %v489
        %v530 = vpack.c.bf16 %v494, %v490
        %v531 = vpack.c.bf16 %v495, %v491
        %v532 = vpack.c.bf16 %v496, %v492
        %v533 = vpack.c.bf16 %v501, %v497
        %v534 = vpack.c.bf16 %v502, %v498
        %v535 = vpack.c.bf16 %v503, %v499
        %v536 = vpack.c.bf16 %v504, %v500
        %v569 = vunpack.c.l.b16 %v505
        %v570 = vunpack.c.l.b16 %v506
        %v571 = vunpack.c.l.b16 %v507
        %v572 = vunpack.c.l.b16 %v508
        %v573 = vunpack.c.h.b16 %v505
        %v574 = vunpack.c.h.b16 %v506
        %v575 = vunpack.c.h.b16 %v507
        %v576 = vunpack.c.h.b16 %v508
        %v577 = vunpack.c.l.b16 %v509
        %v578 = vunpack.c.l.b16 %v510
        %v579 = vunpack.c.l.b16 %v511
        %v580 = vunpack.c.l.b16 %v512
        %v581 = vunpack.c.h.b16 %v509
        %v582 = vunpack.c.h.b16 %v510
        %v583 = vunpack.c.h.b16 %v511
        %v584 = vunpack.c.h.b16 %v512
        %v585 = vunpack.c.l.b16 %v513
        %v586 = vunpack.c.l.b16 %v514
        %v587 = vunpack.c.l.b16 %v515
        %v588 = vunpack.c.l.b16 %v516
        %v589 = vunpack.c.h.b16 %v513
        %v590 = vunpack.c.h.b16 %v514
        %v591 = vunpack.c.h.b16 %v515
        %v592 = vunpack.c.h.b16 %v516
        %v593 = vunpack.c.l.b16 %v517
        %v594 = vunpack.c.l.b16 %v518
        %v595 = vunpack.c.l.b16 %v519
        %v596 = vunpack.c.l.b16 %v520
        %v597 = vunpack.c.h.b16 %v517
        %v598 = vunpack.c.h.b16 %v518
        %v599 = vunpack.c.h.b16 %v519
        %v600 = vunpack.c.h.b16 %v520
        %v601 = vunpack.c.l.b16 %v521
        %v602 = vunpack.c.l.b16 %v522
        %v603 = vunpack.c.l.b16 %v523
        %v604 = vunpack.c.l.b16 %v524
        %v605 = vunpack.c.h.b16 %v521
        %v606 = vunpack.c.h.b16 %v522
        %v607 = vunpack.c.h.b16 %v523
        %v608 = vunpack.c.h.b16 %v524
        %v609 = vunpack.c.l.b16 %v525
        %v610 = vunpack.c.l.b16 %v526
        %v611 = vunpack.c.l.b16 %v527
        %v612 = vunpack.c.l.b16 %v528
        %v613 = vunpack.c.h.b16 %v525
        %v614 = vunpack.c.h.b16 %v526
        %v615 = vunpack.c.h.b16 %v527
        %v616 = vunpack.c.h.b16 %v528
        %v617 = vunpack.c.l.b16 %v529
        %v618 = vunpack.c.l.b16 %v530
        %v619 = vunpack.c.l.b16 %v531
        %v620 = vunpack.c.l.b16 %v532
        %v621 = vunpack.c.h.b16 %v529
        %v622 = vunpack.c.h.b16 %v530
        %v623 = vunpack.c.h.b16 %v531
        %v624 = vunpack.c.h.b16 %v532
        %v625 = vunpack.c.l.b16 %v533
        %v626 = vunpack.c.l.b16 %v534
        %v627 = vunpack.c.l.b16 %v535
        %v628 = vunpack.c.l.b16 %v536
        %v629 = vunpack.c.h.b16 %v533
        %v630 = vunpack.c.h.b16 %v534
        %v631 = vunpack.c.h.b16 %v535
        %v632 = vunpack.c.h.b16 %v536
        %v633 = vpack.c.b16 %v570, %v569
        %v634 = vpack.c.b16 %v572, %v571
        %v635 = vpack.c.b16 %v574, %v573
        %v636 = vpack.c.b16 %v576, %v575
        %v637 = vpack.c.b16 %v578, %v577
        %v638 = vpack.c.b16 %v580, %v579
        %v639 = vpack.c.b16 %v582, %v581
        %v640 = vpack.c.b16 %v584, %v583
        %v641 = vpack.c.b16 %v586, %v585
        %v642 = vpack.c.b16 %v588, %v587
        %v643 = vpack.c.b16 %v590, %v589
        %v644 = vpack.c.b16 %v592, %v591
        %v645 = vpack.c.b16 %v594, %v593
        %v646 = vpack.c.b16 %v596, %v595
        %v647 = vpack.c.b16 %v598, %v597
        %v648 = vpack.c.b16 %v600, %v599
        %v649 = vpack.c.b16 %v602, %v601
        %v650 = vpack.c.b16 %v604, %v603
        %v651 = vpack.c.b16 %v606, %v605
        %v652 = vpack.c.b16 %v608, %v607
        %v653 = vpack.c.b16 %v610, %v609
        %v654 = vpack.c.b16 %v612, %v611
        %v655 = vpack.c.b16 %v614, %v613
        %v656 = vpack.c.b16 %v616, %v615
        %v657 = vpack.c.b16 %v618, %v617
        %v658 = vpack.c.b16 %v620, %v619
        %v659 = vpack.c.b16 %v622, %v621
        %v660 = vpack.c.b16 %v624, %v623
        %v661 = vpack.c.b16 %v626, %v625
        %v662 = vpack.c.b16 %v628, %v627
        %v663 = vpack.c.b16 %v630, %v629
        %v664 = vpack.c.b16 %v632, %v631
        %697 = vst [vmem:[%s199] sm:$0xff] %v633
        %698 = vst [vmem:[%s199 + $0x8] sm:$0xff] %v634
        %699 = vst [vmem:[%s199 + $0x10] sm:$0xff] %v635
        %700 = vst [vmem:[%s199 + $0x18] sm:$0xff] %v636
        %701 = vst [vmem:[%s199 + $0x20] sm:$0xff] %v637
        %702 = vst [vmem:[%s199 + $0x28] sm:$0xff] %v638
        %703 = vst [vmem:[%s199 + $0x30] sm:$0xff] %v639
        %704 = vst [vmem:[%s199 + $0x38] sm:$0xff] %v640
        %705 = vst [vmem:[%s199 + $0x40] sm:$0xff] %v641
        %706 = vst [vmem:[%s199 + $0x48] sm:$0xff] %v642
        %707 = vst [vmem:[%s199 + $0x50] sm:$0xff] %v643
        %708 = vst [vmem:[%s199 + $0x58] sm:$0xff] %v644
        %709 = vst [vmem:[%s199 + $0x60] sm:$0xff] %v645
        %710 = vst [vmem:[%s199 + $0x68] sm:$0xff] %v646
        %711 = vst [vmem:[%s199 + $0x70] sm:$0xff] %v647
        %712 = vst [vmem:[%s199 + $0x78] sm:$0xff] %v648
        %713 = vst [vmem:[%s199 + $0x80] sm:$0xff] %v649
        %714 = vst [vmem:[%s199 + $0x88] sm:$0xff] %v650
        %715 = vst [vmem:[%s199 + $0x90] sm:$0xff] %v651
        %716 = vst [vmem:[%s199 + $0x98] sm:$0xff] %v652
        %717 = vst [vmem:[%s199 + $0xa0] sm:$0xff] %v653
        %718 = vst [vmem:[%s199 + $0xa8] sm:$0xff] %v654
        %719 = vst [vmem:[%s199 + $0xb0] sm:$0xff] %v655
        %720 = vst [vmem:[%s199 + $0xb8] sm:$0xff] %v656
        %721 = vst [vmem:[%s199 + $0xc0] sm:$0xff] %v657
        %722 = vst [vmem:[%s199 + $0xc8] sm:$0xff] %v658
        %723 = vst [vmem:[%s199 + $0xd0] sm:$0xff] %v659
        %724 = vst [vmem:[%s199 + $0xd8] sm:$0xff] %v660
        %725 = vst [vmem:[%s199 + $0xe0] sm:$0xff] %v661
        %726 = vst [vmem:[%s199 + $0xe8] sm:$0xff] %v662
        %727 = vst [vmem:[%s199 + $0xf0] sm:$0xff] %v663
        %728 = vst [vmem:[%s199 + $0xf8] sm:$0xff] %v664
        %v729 = vadd.f32 %v441, %v442
        %v730 = vadd.f32 %v729, %v443
        %v731 = vadd.f32 %v730, %v444
        %732 = vadd.xlane.f32.xlu0 %v731
        %v733 = vpop.xlane.xlu0 %732
        %v734 = vadd.f32 %v445, %v446
        %v735 = vadd.f32 %v734, %v447
        %v736 = vadd.f32 %v735, %v448
        %737 = vadd.xlane.f32.xlu0 %v736
        %v738 = vpop.xlane.xlu0 %737
        %v739 = vadd.f32 %v449, %v450
        %v740 = vadd.f32 %v739, %v451
        %v741 = vadd.f32 %v740, %v452
        %742 = vadd.xlane.f32.xlu0 %v741
        %v743 = vpop.xlane.xlu0 %742
        %v744 = vadd.f32 %v453, %v454
        %v745 = vadd.f32 %v744, %v455
        %v746 = vadd.f32 %v745, %v456
        %747 = vadd.xlane.f32.xlu0 %v746
        %v748 = vpop.xlane.xlu0 %747
        %v749 = vadd.f32 %v457, %v458
        %v750 = vadd.f32 %v749, %v459
        %v751 = vadd.f32 %v750, %v460
        %752 = vadd.xlane.f32.xlu0 %v751
        %v753 = vpop.xlane.xlu0 %752
        %v754 = vadd.f32 %v461, %v462
        %v755 = vadd.f32 %v754, %v463
        %v756 = vadd.f32 %v755, %v464
        %757 = vadd.xlane.f32.xlu0 %v756
        %v758 = vpop.xlane.xlu0 %757
        %v759 = vadd.f32 %v465, %v466
        %v760 = vadd.f32 %v759, %v467
        %v761 = vadd.f32 %v760, %v468
        %762 = vadd.xlane.f32.xlu0 %v761
        %v763 = vpop.xlane.xlu0 %762
        %v764 = vadd.f32 %v469, %v470
        %v765 = vadd.f32 %v764, %v471
        %v766 = vadd.f32 %v765, %v472
        %767 = vadd.xlane.f32.xlu0 %v766
        %v768 = vpop.xlane.xlu0 %767
        %v769 = vadd.f32 %v473, %v474
        %v770 = vadd.f32 %v769, %v475
        %v771 = vadd.f32 %v770, %v476
        %772 = vadd.xlane.f32.xlu0 %v771
        %v773 = vpop.xlane.xlu0 %772
        %v774 = vadd.f32 %v477, %v478
        %v775 = vadd.f32 %v774, %v479
        %v776 = vadd.f32 %v775, %v480
        %777 = vadd.xlane.f32.xlu0 %v776
        %v778 = vpop.xlane.xlu0 %777
        %v779 = vadd.f32 %v481, %v482
        %v780 = vadd.f32 %v779, %v483
        %v781 = vadd.f32 %v780, %v484
        %782 = vadd.xlane.f32.xlu0 %v781
        %v783 = vpop.xlane.xlu0 %782
        %v784 = vadd.f32 %v485, %v486
        %v785 = vadd.f32 %v784, %v487
        %v786 = vadd.f32 %v785, %v488
        %787 = vadd.xlane.f32.xlu0 %v786
        %v788 = vpop.xlane.xlu0 %787
        %v789 = vadd.f32 %v489, %v490
        %v790 = vadd.f32 %v789, %v491
        %v791 = vadd.f32 %v790, %v492
        %792 = vadd.xlane.f32.xlu0 %v791
        %v793 = vpop.xlane.xlu0 %792
        %v794 = vadd.f32 %v493, %v494
        %v795 = vadd.f32 %v794, %v495
        %v796 = vadd.f32 %v795, %v496
        %797 = vadd.xlane.f32.xlu0 %v796
        %v798 = vpop.xlane.xlu0 %797
        %v799 = vadd.f32 %v497, %v498
        %v800 = vadd.f32 %v799, %v499
        %v801 = vadd.f32 %v800, %v500
        %802 = vadd.xlane.f32.xlu0 %v801
        %v803 = vpop.xlane.xlu0 %802
        %v804 = vadd.f32 %v501, %v502
        %v805 = vadd.f32 %v804, %v503
        %v806 = vadd.f32 %v805, %v504
        %807 = vadd.xlane.f32.xlu0 %v806
        %v808 = vpop.xlane.xlu0 %807
        %vm809 = vcmp.gt.f32.partialorder %v733, 0.0
        %vm810 = vcmp.gt.f32.partialorder %v738, 0.0
        %vm811 = vcmp.gt.f32.partialorder %v743, 0.0
        %vm812 = vcmp.gt.f32.partialorder %v748, 0.0
        %vm813 = vcmp.gt.f32.partialorder %v753, 0.0
        %vm814 = vcmp.gt.f32.partialorder %v758, 0.0
        %vm815 = vcmp.gt.f32.partialorder %v763, 0.0
        %vm816 = vcmp.gt.f32.partialorder %v768, 0.0
        %vm817 = vcmp.gt.f32.partialorder %v773, 0.0
        %vm818 = vcmp.gt.f32.partialorder %v778, 0.0
        %vm819 = vcmp.gt.f32.partialorder %v783, 0.0
        %vm820 = vcmp.gt.f32.partialorder %v788, 0.0
        %vm821 = vcmp.gt.f32.partialorder %v793, 0.0
        %vm822 = vcmp.gt.f32.partialorder %v798, 0.0
        %vm823 = vcmp.gt.f32.partialorder %v803, 0.0
        %vm824 = vcmp.gt.f32.partialorder %v808, 0.0
        %v825 = vrsqrt.pop %v733
        %v826 = vrsqrt.pop %v738
        %v827 = vrsqrt.pop %v743
        %v828 = vrsqrt.pop %v748
        %v829 = vrsqrt.pop %v753
        %v830 = vrsqrt.pop %v758
        %v831 = vrsqrt.pop %v763
        %v832 = vrsqrt.pop %v768
        %v833 = vrsqrt.pop %v773
        %v834 = vrsqrt.pop %v778
        %v835 = vrsqrt.pop %v783
        %v836 = vrsqrt.pop %v788
        %v837 = vrsqrt.pop %v793
        %v838 = vrsqrt.pop %v798
        %v839 = vrsqrt.pop %v803
        %v840 = vrsqrt.pop %v808
        %v841 = vsel %vm809, %v825, 0.0
        %v842 = vsel %vm810, %v826, 0.0
        %v843 = vsel %vm811, %v827, 0.0
        %v844 = vsel %vm812, %v828, 0.0
        %v845 = vsel %vm813, %v829, 0.0
        %v846 = vsel %vm814, %v830, 0.0
        %v847 = vsel %vm815, %v831, 0.0
        %v848 = vsel %vm816, %v832, 0.0
        %v849 = vsel %vm817, %v833, 0.0
        %v850 = vsel %vm818, %v834, 0.0
        %v851 = vsel %vm819, %v835, 0.0
        %v852 = vsel %vm820, %v836, 0.0
        %v853 = vsel %vm821, %v837, 0.0
        %v854 = vsel %vm822, %v838, 0.0
        %v855 = vsel %vm823, %v839, 0.0
        %v856 = vsel %vm824, %v840, 0.0
        %vm857 = vcmask 7168
        %858 = vst.msk [vmem:[%s205] sm:$0xff] %vm857, %v841
        %859 = vst.msk [vmem:[%s205 + $0x8] sm:$0xff] %vm857, %v842
        %860 = vst.msk [vmem:[%s205 + $0x10] sm:$0xff] %vm857, %v843
        %861 = vst.msk [vmem:[%s205 + $0x18] sm:$0xff] %vm857, %v844
        %862 = vst.msk [vmem:[%s205 + $0x20] sm:$0xff] %vm857, %v845
        %863 = vst.msk [vmem:[%s205 + $0x28] sm:$0xff] %vm857, %v846
        %864 = vst.msk [vmem:[%s205 + $0x30] sm:$0xff] %vm857, %v847
        %865 = vst.msk [vmem:[%s205 + $0x38] sm:$0xff] %vm857, %v848
        %866 = vst.msk [vmem:[%s205 + $0x40] sm:$0xff] %vm857, %v849
        %867 = vst.msk [vmem:[%s205 + $0x48] sm:$0xff] %vm857, %v850
        %868 = vst.msk [vmem:[%s205 + $0x50] sm:$0xff] %vm857, %v851
        %869 = vst.msk [vmem:[%s205 + $0x58] sm:$0xff] %vm857, %v852
        %870 = vst.msk [vmem:[%s205 + $0x60] sm:$0xff] %vm857, %v853
        %871 = vst.msk [vmem:[%s205 + $0x68] sm:$0xff] %vm857, %v854
        %872 = vst.msk [vmem:[%s205 + $0x70] sm:$0xff] %vm857, %v855
        %873 = vst.msk [vmem:[%s205 + $0x78] sm:$0xff] %vm857, %v856
        %p874 = scmp.eq.s32.totalorder %s18, 0
        // Predicated region
        $region29: #{gcn_decor_forward.5} parent=23 // pred_check
          %p875 = pneg %p874
        $region30: #{gcn_decor_forward.5} parent=23 // pred_check_branch
          %877 = sbr.rel (%p875) target = $region32
        $region31: #{gcn_decor_forward.5} parent=23 // pred_region
          %878 = vst [vmem:[%s3] sm:$0xff] 0.0
          %879 = vst [vmem:[%s3 + $0x8] sm:$0xff] 0.0
          %880 = vst [vmem:[%s3 + $0x10] sm:$0xff] 0.0
          %881 = vst [vmem:[%s3 + $0x18] sm:$0xff] 0.0
        $region32: #{gcn_decor_forward.5} parent=23 // pred_fallthru
          _
        %v882 = vld [vmem:[%s3] sm:$0xff]
        %v883 = vld [vmem:[%s3 + $0x8] sm:$0xff]
        %v884 = vld [vmem:[%s3 + $0x10] sm:$0xff]
        %v885 = vld [vmem:[%s3 + $0x18] sm:$0xff]
        %886 = vmatprep.subr.bf16.mxu0 %v534
        %887 = vmatpush1.bf16.msra.mxu0 %v533
        %888 = vmatprep.subr.bf16.mxu0 %v530
        %889 = vmatpush1.bf16.msra.mxu0 %v529
        %890 = vmatprep.subr.bf16.mxu0 %v526
        %891 = vmatpush1.bf16.msra.mxu0 %v525
        %892 = vmatprep.subr.bf16.mxu0 %v522
        %893 = vmatpush1.bf16.msra.mxu0 %v521
        %894 = vmatprep.subr.bf16.mxu0 %v518
        %895 = vmatpush1.bf16.msra.mxu0 %v517
        %896 = vmatprep.subr.bf16.mxu0 %v514
        %897 = vmatpush1.bf16.msra.mxu0 %v513
        %898 = vmatprep.subr.bf16.mxu0 %v510
        %899 = vmatpush1.bf16.msra.mxu0 %v509
        %900 = vmatprep.subr.bf16.mxu0 %v506
        %901 = vmatpush1.bf16.msra.mxu0 %v505
        %902 = vmatprep.subr.bf16.mxu0 0
        %903 = vmatpush2.bf16.msra.mxu0 0
        %904 = vmatprep.subr.bf16.mxu0 0
        %905 = vmatpush2.bf16.msra.mxu0 0
        %906 = vmatprep.subr.bf16.mxu0 0
        %907 = vmatpush2.bf16.msra.mxu0 0
        %908 = vmatprep.subr.bf16.mxu0 0
        %909 = vmatpush2.bf16.msra.mxu0 0
        %910 = vmatprep.subr.bf16.mxu0 0
        %911 = vmatpush2.bf16.msra.mxu0 0
        %912 = vmatprep.subr.bf16.mxu0 0
        %913 = vmatpush2.bf16.msra.mxu0 0
        %914 = vmatprep.subr.bf16.mxu0 0
        %915 = vmatpush2.bf16.msra.mxu0 0
        %916 = vmatprep.subr.bf16.mxu0 0
        %917 = vmatpush2.bf16.msra.mxu0 0
        %918 = vmatprep.mubr.bf16.mxu0 0
        %919 = vmatmul.mubr.bf16.gmra.mxu0 1065369472
        %v920 = vpop.f32.mrf.mxu0
        %v921 = vadd.f32 0.0, %v920
        %v922 = vpop.f32.mrf.mxu0
        %v923 = vadd.f32 0.0, %v922
        %v924 = vpop.f32.mrf.mxu0
        %v925 = vpop.f32.mrf.mxu0
        %926 = vdwg.mxu0
        %927 = vmatprep.subr.bf16.mxu0 %v536
        %928 = vmatpush1.bf16.msra.mxu0 %v535
        %929 = vmatprep.subr.bf16.mxu0 %v532
        %930 = vmatpush1.bf16.msra.mxu0 %v531
        %931 = vmatprep.subr.bf16.mxu0 %v528
        %932 = vmatpush1.bf16.msra.mxu0 %v527
        %933 = vmatprep.subr.bf16.mxu0 %v524
        %934 = vmatpush1.bf16.msra.mxu0 %v523
        %935 = vmatprep.subr.bf16.mxu0 %v520
        %936 = vmatpush1.bf16.msra.mxu0 %v519
        %937 = vmatprep.subr.bf16.mxu0 %v516
        %938 = vmatpush1.bf16.msra.mxu0 %v515
        %939 = vmatprep.subr.bf16.mxu0 %v512
        %940 = vmatpush1.bf16.msra.mxu0 %v511
        %941 = vmatprep.subr.bf16.mxu0 %v508
        %942 = vmatpush1.bf16.msra.mxu0 %v507
        %943 = vmatprep.subr.bf16.mxu0 0
        %944 = vmatpush2.bf16.msra.mxu0 0
        %945 = vmatprep.subr.bf16.mxu0 0
        %946 = vmatpush2.bf16.msra.mxu0 0
        %947 = vmatprep.subr.bf16.mxu0 0
        %948 = vmatpush2.bf16.msra.mxu0 0
        %949 = vmatprep.subr.bf16.mxu0 0
        %950 = vmatpush2.bf16.msra.mxu0 0
        %951 = vmatprep.subr.bf16.mxu0 0
        %952 = vmatpush2.bf16.msra.mxu0 0
        %953 = vmatprep.subr.bf16.mxu0 0
        %954 = vmatpush2.bf16.msra.mxu0 0
        %955 = vmatprep.subr.bf16.mxu0 0
        %956 = vmatpush2.bf16.msra.mxu0 0
        %957 = vmatprep.subr.bf16.mxu0 0
        %958 = vmatpush2.bf16.msra.mxu0 0
        %959 = vmatprep.mubr.bf16.mxu0 0
        %960 = vmatmul.mubr.bf16.gmra.mxu0 1065369472
        %v961 = vpop.f32.mrf.mxu0
        %v962 = vadd.f32 0.0, %v961
        %v963 = vpop.f32.mrf.mxu0
        %v964 = vadd.f32 0.0, %v963
        %v965 = vpop.f32.mrf.mxu0
        %v966 = vpop.f32.mrf.mxu0
        %967 = vdwg.mxu0
        %v968 = vadd.f32 %v882, %v921
        %v969 = vadd.f32 %v883, %v923
        %v970 = vadd.f32 %v884, %v962
        %v971 = vadd.f32 %v885, %v964
        %972 = vst [vmem:[%s3] sm:$0xff] %v968
        %973 = vst [vmem:[%s3 + $0x8] sm:$0xff] %v969
        %974 = vst [vmem:[%s3 + $0x10] sm:$0xff] %v970
        %975 = vst [vmem:[%s3 + $0x18] sm:$0xff] %v971
        %p976 = scmp.eq.s32.totalorder %s18, 3
        // Predicated region
        $region33: #{gcn_decor_forward.5} parent=23 // pred_check
          %p977 = pneg %p976
        $region34: #{gcn_decor_forward.5} parent=23 // pred_check_branch
          %979 = sbr.rel (%p977) target = $region36
        $region35: #{gcn_decor_forward.5} parent=23 // pred_region
          %v980 = vld [vmem:[%s3] sm:$0xff]
          %v981 = vld [vmem:[%s3 + $0x8] sm:$0xff]
          %v982 = vld [vmem:[%s3 + $0x10] sm:$0xff]
          %v983 = vld [vmem:[%s3 + $0x18] sm:$0xff]
          %vm984 = vcmp.gt.f32.partialorder %v980, 0.0
          %vm985 = vcmp.gt.f32.partialorder %v981, 0.0
          %vm986 = vcmp.gt.f32.partialorder %v982, 0.0
          %vm987 = vcmp.gt.f32.partialorder %v983, 0.0
          %v988 = vrsqrt.pop %v980
          %v989 = vrsqrt.pop %v981
          %v990 = vrsqrt.pop %v982
          %v991 = vrsqrt.pop %v983
          %v992 = vsel %vm984, %v988, 0.0
          %v993 = vsel %vm985, %v989, 0.0
          %v994 = vsel %vm986, %v990, 0.0
          %v995 = vsel %vm987, %v991, 0.0
          %996 = vst [vmem:[%s3] sm:$0xff] %v992
          %997 = vst [vmem:[%s3 + $0x8] sm:$0xff] %v993
          %998 = vst [vmem:[%s3 + $0x10] sm:$0xff] %v994
          %999 = vst [vmem:[%s3 + $0x18] sm:$0xff] %v995
        $region36: #{gcn_decor_forward.5} parent=23 // pred_fallthru
          _
        %s1000 = smul.u32 16, %s18
        %p1001 = scmp.lt.s32.totalorder %s1000, 63
        %s1002 = scalar_select %p1001, %s1000, 63
        %s1003 = smul.addr %s1002, 4
        %s1004 = smul.addr %s1003, 4
        %s1005 = scalar_lea.vmem %s1, %s1004
        %s1006 = smul.u32 16, %s18
        %p1007 = scmp.lt.s32.totalorder %s1006, 63
        %s1008 = scalar_select %p1007, %s1006, 63
        %s1009 = smul.addr %s1008, 8
        %s1010 = scalar_lea.vmem %s2, %s1009
        // Predicated region
        $region37: #{gcn_decor_forward.5} parent=23 // pred_check
          %p1011 = pneg %p62
        $region38: #{gcn_decor_forward.5} parent=23 // pred_check_branch
          %1013 = sbr.rel (%p1011) target = $region40
        $region39: #{gcn_decor_forward.5} parent=23 // pred_region
          %s1014 = smul.u32 16, %s18
        $region40: #{gcn_decor_forward.5} parent=23 // pred_fallthru
          _
        // Predicated region
        $region41: #{gcn_decor_forward.5} parent=23 // pred_check
          %p1015 = pneg %p88
        $region42: #{gcn_decor_forward.5} parent=23 // pred_check_branch
          %1017 = sbr.rel (%p1015) target = $region44
        $region43: #{gcn_decor_forward.5} parent=23 // pred_region
          %s1018 = smul.u32 16, %s18
        $region44: #{gcn_decor_forward.5} parent=23 // pred_fallthru
          _
        // Predicated region
        $region45: #{gcn_decor_forward.5} parent=23 // pred_check
          %p1019 = pneg %p109
        $region46: #{gcn_decor_forward.5} parent=23 // pred_check_branch
          %1021 = sbr.rel (%p1019) target = $region48
        $region47: #{gcn_decor_forward.5} parent=23 // pred_region
          _
        $region48: #{gcn_decor_forward.5} parent=23 // pred_fallthru
          _
        // Predicated region
        $region49: #{gcn_decor_forward.5} parent=23 // pred_check
          %p1022 = pneg %p109
        $region50: #{gcn_decor_forward.5} parent=23 // pred_check_branch
          %1024 = sbr.rel (%p1022) target = $region52
        $region51: #{gcn_decor_forward.5} parent=23 // pred_region
          _
        $region52: #{gcn_decor_forward.5} parent=23 // pred_fallthru
          _
      $region24: #{gcn_decor_forward.5} parent=5 // pred_fallthru
        _
      %p1025 = scmp.le.s32.totalorder 2, %s13
      // Predicated region
      $region53: #{gcn_decor_forward.5} parent=5 // pred_check
        %p1026 = pneg %p1025
      $region54: #{gcn_decor_forward.5} parent=5 // pred_check_branch
        %1028 = sbr.rel (%p1026) target = $region56
      $region55: #{gcn_decor_forward.5} parent=5 // pred_region
        %s1029 = ssub.s32 %s13, 2
        // Predicated region
        $region57: #{gcn_decor_forward.5} parent=55 // pred_check
          %p1030 = pneg %p68
        $region58: #{gcn_decor_forward.5} parent=55 // pred_check_branch
          %1032 = sbr.rel (%p1030) target = $region60
        $region59: #{gcn_decor_forward.5} parent=55 // pred_region
          %s1033 = smul.u32 16, %s19
          %p1034 = scmp.lt.s32.totalorder %s1033, 63
          %s1035 = scalar_select %p1034, %s1033, 63
          %s1036 = smul.addr %s1035, 4
          %s1037 = smul.addr %s1036, 4
          %s1038 = scalar_lea.vmem %s1, %s1037
        $region60: #{gcn_decor_forward.5} parent=55 // pred_fallthru
          _
        // Predicated region
        $region61: #{gcn_decor_forward.5} parent=55 // pred_check
          %p1039 = pneg %p94
        $region62: #{gcn_decor_forward.5} parent=55 // pred_check_branch
          %1041 = sbr.rel (%p1039) target = $region64
        $region63: #{gcn_decor_forward.5} parent=55 // pred_region
          %s1042 = smul.u32 16, %s19
          %p1043 = scmp.lt.s32.totalorder %s1042, 63
          %s1044 = scalar_select %p1043, %s1042, 63
          %s1045 = smul.addr %s1044, 8
          %s1046 = scalar_lea.vmem %s2, %s1045
        $region64: #{gcn_decor_forward.5} parent=55 // pred_fallthru
          _
      $region56: #{gcn_decor_forward.5} parent=5 // pred_fallthru
        _
    $region6: #{gcn_decor_forward.5} parent=1 // loop_footer
      %s17 = sadd.s32 1, %s13
    $region7: #{gcn_decor_forward.5} parent=1 // loop_footer_branch
      %12 = sbr.rel target = $region3
    $region8: #{gcn_decor_forward.5} parent=1 // loop_exit
      _
    %1047 = vsyncpa [#allocation3], 1
    %s1048 = scalar_lea.sflag [#allocation3], 1
    %1049 = vsyncpa %s1048, 1

// kernel: gcn_decor_forward.8
$region0: #{gcn_decor_forward.8}
  #allocation0 [shape = 'u32[]', space=smem, size = 0x4, offset = 0x4, fixed_abs, tag = 'smem constant byte address 0x4 - core index']
  #allocation1 [shape = 'u32[144,128]{1,0:T(1,128)}', space=vmem, size = 0x12000, scoped, tag = 'internal scratch']
  %s0 = inlined_call_operand.vmem [shape: f32[512,128], index: 0, kind: input, shape index: {}]
  %s1 = inlined_call_operand.vmem [shape: f32[128,128], index: 1, kind: input, shape index: {}]
  %s2 = inlined_call_operand.vmem [shape: f32[512,1], index: 2, kind: input, shape index: {}]
  %s3 = inlined_call_operand.vmem [shape: bf16[512,128], index: 3, kind: output, shape index: {}]
  %s4 = sld [smem:[#allocation0]]
  $region45: #{gcn_decor_forward.8} parent=0
    _
  %s6 = ssub.s32 1, %s4
  %s7 = scalar_select 0, %s6, %s4
  loop: start=0, step=1, limit=6
  $region2: #{gcn_decor_forward.8} parent=0 // loop_pre_header
    _
  $region3: #{gcn_decor_forward.8} parent=0 // loop_header
    %s9 = sphi 0, %s13
    %p10 = scmp.ge.s32.totalorder %s9, 6
    %s19 = sphi 0, %s21
    %s22 = sphi 0, %s19
    %s23 = sphi 0, %s22
    %s39 = sphi 0, %s23
    %s43 = sphi 0, %s43
    %s45 = sphi 0, %s43
    %s46 = sphi 0, %s45
    %s60 = sphi 0, %s46
    %s66 = sphi 0, %s68
    %s69 = sphi 0, %s66
    %s70 = sphi 0, %s69
    %s86 = sphi 0, %s70
    %s92 = sphi 0, %s94
    %s95 = sphi 0, %s92
    %s96 = sphi 0, %s95
    %s112 = sphi 0, %s96
  $region4: #{gcn_decor_forward.8} parent=0 // loop_header_branch
    %12 = sbr.rel (%p10) target = $region8
  $region5: #{gcn_decor_forward.8} parent=0 // loop_body
    %s14 = ssub.s32 %s9, 1
    %s15 = ssub.s32 %s9, 2
    %s16 = sadd.s32 %s9, 1
    %s17 = ssub.s32 %s9, %s16
    %p18 = scmp.eq.s32.totalorder %s17, 0
    %s20 = sadd.s32 %s19, 1
    %s21 = scalar_select %p18, %s19, %s20
    %p24 = pneg %p18
    %p25 = scmp.eq.s32.totalorder %s9, 3
    %p26 = por %p24, %p25
    %p27 = scmp.ne.s32.totalorder %s19, %s22
    %p28 = scmp.eq.s32.totalorder %s9, 0
    %p29 = por %p27, %p28
    %p30 = scmp.ne.s32.totalorder %s19, %s22
    %p31 = scmp.eq.s32.totalorder %s14, 3
    %p32 = por %p30, %p31
    %p33 = scmp.ne.s32.totalorder %s22, %s23
    %p34 = scmp.eq.s32.totalorder %s14, 0
    %p35 = por %p33, %p34
    %p36 = scmp.ne.s32.totalorder %s22, %s23
    %p37 = scmp.eq.s32.totalorder %s15, 3
    %p38 = por %p36, %p37
    %p40 = scmp.ne.s32.totalorder %s23, %s39
    %p41 = scmp.eq.s32.totalorder %s15, 0
    %p42 = por %p40, %p41
    %s44 = sadd.s32 %s43, 1
    %p47 = scmp.eq.s32.totalorder %s9, 3
    %p48 = scmp.ne.s32.totalorder %s43, %s45
    %p49 = scmp.eq.s32.totalorder %s9, 0
    %p50 = por %p48, %p49
    %p51 = scmp.ne.s32.totalorder %s43, %s45
    %p52 = scmp.eq.s32.totalorder %s14, 3
    %p53 = por %p51, %p52
    %p54 = scmp.ne.s32.totalorder %s45, %s46
    %p55 = scmp.eq.s32.totalorder %s14, 0
    %p56 = por %p54, %p55
    %p57 = scmp.ne.s32.totalorder %s45, %s46
    %p58 = scmp.eq.s32.totalorder %s15, 3
    %p59 = por %p57, %p58
    %p61 = scmp.ne.s32.totalorder %s46, %s60
    %p62 = scmp.eq.s32.totalorder %s15, 0
    %p63 = por %p61, %p62
    %s64 = ssub.s32 %s9, %s16
    %p65 = scmp.eq.s32.totalorder %s64, 0
    %s67 = sadd.s32 %s66, 1
    %s68 = scalar_select %p65, %s66, %s67
    %p71 = pneg %p65
    %p72 = scmp.eq.s32.totalorder %s9, 3
    %p73 = por %p71, %p72
    %p74 = scmp.ne.s32.totalorder %s66, %s69
    %p75 = scmp.eq.s32.totalorder %s9, 0
    %p76 = por %p74, %p75
    %p77 = scmp.ne.s32.totalorder %s66, %s69
    %p78 = scmp.eq.s32.totalorder %s14, 3
    %p79 = por %p77, %p78
    %p80 = scmp.ne.s32.totalorder %s69, %s70
    %p81 = scmp.eq.s32.totalorder %s14, 0
    %p82 = por %p80, %p81
    %p83 = scmp.ne.s32.totalorder %s69, %s70
    %p84 = scmp.eq.s32.totalorder %s15, 3
    %p85 = por %p83, %p84
    %p87 = scmp.ne.s32.totalorder %s70, %s86
    %p88 = scmp.eq.s32.totalorder %s15, 0
    %p89 = por %p87, %p88
    %s90 = ssub.s32 %s9, %s16
    %p91 = scmp.eq.s32.totalorder %s90, 0
    %s93 = sadd.s32 %s92, 1
    %s94 = scalar_select %p91, %s92, %s93
    %p97 = pneg %p91
    %p98 = scmp.eq.s32.totalorder %s9, 3
    %p99 = por %p97, %p98
    %p100 = scmp.ne.s32.totalorder %s92, %s95
    %p101 = scmp.eq.s32.totalorder %s9, 0
    %p102 = por %p100, %p101
    %p103 = scmp.ne.s32.totalorder %s92, %s95
    %p104 = scmp.eq.s32.totalorder %s14, 3
    %p105 = por %p103, %p104
    %p106 = scmp.ne.s32.totalorder %s95, %s96
    %p107 = scmp.eq.s32.totalorder %s14, 0
    %p108 = por %p106, %p107
    %p109 = scmp.ne.s32.totalorder %s95, %s96
    %p110 = scmp.eq.s32.totalorder %s15, 3
    %p111 = por %p109, %p110
    %p113 = scmp.ne.s32.totalorder %s96, %s112
    %p114 = scmp.eq.s32.totalorder %s15, 0
    %p115 = por %p113, %p114
    %p116 = scmp.le.s32.totalorder 1, %s9
    %p117 = scmp.lt.s32.totalorder %s9, 5
    %p118 = pnand %p116, %p117
    %p119 = pneg %p118
    // Predicated region
    $region9: #{gcn_decor_forward.8} parent=5 // pred_check
      _
    $region10: #{gcn_decor_forward.8} parent=5 // pred_check_branch
      %121 = sbr.rel (%p118) target = $region12
    $region11: #{gcn_decor_forward.8} parent=5 // pred_region
      %s122 = ssub.s32 %s9, 1
      // Predicated region
      $region13: #{gcn_decor_forward.8} parent=11 // pred_check
        %p123 = pneg %p56
      $region14: #{gcn_decor_forward.8} parent=11 // pred_check_branch
        %125 = sbr.rel (%p123) target = $region16
      $region15: #{gcn_decor_forward.8} parent=11 // pred_region
        _
      $region16: #{gcn_decor_forward.8} parent=11 // pred_fallthru
        _
    $region12: #{gcn_decor_forward.8} parent=5 // pred_fallthru
      _
    %p126 = scmp.lt.s32.totalorder %s9, 4
    // Predicated region
    $region17: #{gcn_decor_forward.8} parent=5 // pred_check
      %p127 = pneg %p126
    $region18: #{gcn_decor_forward.8} parent=5 // pred_check_branch
      %129 = sbr.rel (%p127) target = $region20
    $region19: #{gcn_decor_forward.8} parent=5 // pred_region
      // Predicated region
      $region21: #{gcn_decor_forward.8} parent=19 // pred_check
        %p130 = pneg %p29
      $region22: #{gcn_decor_forward.8} parent=19 // pred_check_branch
        %132 = sbr.rel (%p130) target = $region24
      $region23: #{gcn_decor_forward.8} parent=19 // pred_region
        %s133 = smul.u32 16, %s9
        %p134 = scmp.lt.s32.totalorder %s133, 63
        %s135 = scalar_select %p134, %s133, 63
        %s136 = smul.addr %s135, 8
        %s137 = scalar_lea.vmem %s0, %s136
        %s138 = smul.u32 16, %s9
      $region24: #{gcn_decor_forward.8} parent=19 // pred_fallthru
        _
      // Predicated region
      $region25: #{gcn_decor_forward.8} parent=19 // pred_check
        %p139 = pneg %p76
      $region26: #{gcn_decor_forward.8} parent=19 // pred_check_branch
        %141 = sbr.rel (%p139) target = $region28
      $region27: #{gcn_decor_forward.8} parent=19 // pred_region
        %s142 = smul.u32 16, %s9
        %p143 = scmp.lt.s32.totalorder %s142, 63
        %s144 = scalar_select %p143, %s142, 63
        %s145 = smul.addr %s144, 8
        %s146 = scalar_lea.vmem %s2, %s145
        %s147 = smul.u32 16, %s9
      $region28: #{gcn_decor_forward.8} parent=19 // pred_fallthru
        _
    $region20: #{gcn_decor_forward.8} parent=5 // pred_fallthru
      _
    %p148 = scmp.le.s32.totalorder 1, %s9
    %p149 = scmp.lt.s32.totalorder %s9, 5
    %p150 = pnand %p148, %p149
    %p151 = pneg %p150
    // Predicated region
    $region29: #{gcn_decor_forward.8} parent=5 // pred_check
      _
    $region30: #{gcn_decor_forward.8} parent=5 // pred_check_branch
      %153 = sbr.rel (%p150) target = $region32
    $region31: #{gcn_decor_forward.8} parent=5 // pred_region
      %s154 = ssub.s32 %s9, 1
      %s155 = smul.u32 16, %s14
      %p156 = scmp.lt.s32.totalorder %s155, 63
      %s157 = scalar_select %p156, %s155, 63
      %s158 = smul.addr %s157, 8
      %s159 = scalar_lea.vmem %s0, %s158
      %p160 = pneg %p35
      %p161 = pneg %p32
      %p162 = pneg %p56
      %p163 = pneg %p53
      %s164 = smul.u32 16, %s14
      %p165 = scmp.lt.s32.totalorder %s164, 63
      %s166 = scalar_select %p165, %s164, 63
      %s167 = smul.addr %s166, 8
      %s168 = scalar_lea.vmem %s2, %s167
      %p169 = pneg %p82
      %p170 = pneg %p79
      %p171 = pneg %p108
      %p172 = pneg %p105
      %s173 = smul.u32 16, %s14
      %p174 = scmp.lt.s32.totalorder %s173, 63
      %s175 = scalar_select %p174, %s173, 63
      %s176 = smul.addr %s175, 4
      %s177 = scalar_lea.vmem %s3, %s176
      %s178 = smul.u32 16, %s14
      %p179 = scmp.lt.s32.totalorder %s178, 63
      %s180 = scalar_select %p179, %s178, 63
      %s181 = smul.addr %s180, 8
      %s182 = scalar_lea.vmem %s0, %s181
      %s183 = smul.u32 16, %s14
      %s184 = smul.u32 16, %s14
      %p185 = scmp.lt.s32.totalorder %s184, 63
      %s186 = scalar_select %p185, %s184, 63
      %s187 = smul.addr %s186, 8
      %s188 = scalar_lea.vmem %s2, %s187
      %s189 = smul.u32 16, %s14
      %s190 = smul.u32 16, %s14
      %p191 = scmp.lt.s32.totalorder %s190, 63
      %s192 = scalar_select %p191, %s190, 63
      %s193 = smul.addr %s192, 4
      %s194 = scalar_lea.vmem %s3, %s193
      %s195 = smul.u32 16, %s14
      %v196 = vld [vmem:[%s182] sm:$0xff]
      %v197 = vld [vmem:[%s182 + $0x8] sm:$0xff]
      %v198 = vld [vmem:[%s182 + $0x10] sm:$0xff]
      %v199 = vld [vmem:[%s182 + $0x18] sm:$0xff]
      %v200 = vld [vmem:[%s182 + $0x20] sm:$0xff]
      %v201 = vld [vmem:[%s182 + $0x28] sm:$0xff]
      %v202 = vld [vmem:[%s182 + $0x30] sm:$0xff]
      %v203 = vld [vmem:[%s182 + $0x38] sm:$0xff]
      %v204 = vld [vmem:[%s182 + $0x40] sm:$0xff]
      %v205 = vld [vmem:[%s182 + $0x48] sm:$0xff]
      %v206 = vld [vmem:[%s182 + $0x50] sm:$0xff]
      %v207 = vld [vmem:[%s182 + $0x58] sm:$0xff]
      %v208 = vld [vmem:[%s182 + $0x60] sm:$0xff]
      %v209 = vld [vmem:[%s182 + $0x68] sm:$0xff]
      %v210 = vld [vmem:[%s182 + $0x70] sm:$0xff]
      %v211 = vld [vmem:[%s182 + $0x78] sm:$0xff]
      %v212 = vld [vmem:[%s1] sm:$0xff]
      %v213 = vld [vmem:[%s1 + $0x8] sm:$0xff]
      %v214 = vld [vmem:[%s1 + $0x10] sm:$0xff]
      %v215 = vld [vmem:[%s1 + $0x18] sm:$0xff]
      %v216 = vld [vmem:[%s1 + $0x20] sm:$0xff]
      %v217 = vld [vmem:[%s1 + $0x28] sm:$0xff]
      %v218 = vld [vmem:[%s1 + $0x30] sm:$0xff]
      %v219 = vld [vmem:[%s1 + $0x38] sm:$0xff]
      %v220 = vld [vmem:[%s1 + $0x40] sm:$0xff]
      %v221 = vld [vmem:[%s1 + $0x48] sm:$0xff]
      %v222 = vld [vmem:[%s1 + $0x50] sm:$0xff]
      %v223 = vld [vmem:[%s1 + $0x58] sm:$0xff]
      %v224 = vld [vmem:[%s1 + $0x60] sm:$0xff]
      %v225 = vld [vmem:[%s1 + $0x68] sm:$0xff]
      %v226 = vld [vmem:[%s1 + $0x70] sm:$0xff]
      %v227 = vld [vmem:[%s1 + $0x78] sm:$0xff]
      %228 = vmatprep.subr.mxu0 0.0
      %229 = vmatpush1.msra.mxu0 %v227
      %230 = vmatprep.subr.mxu0 0.0
      %231 = vmatpush1.msra.mxu0 %v226
      %232 = vmatprep.subr.mxu0 0.0
      %233 = vmatpush1.msra.mxu0 %v225
      %234 = vmatprep.subr.mxu0 0.0
      %235 = vmatpush1.msra.mxu0 %v224
      %236 = vmatprep.subr.mxu0 0.0
      %237 = vmatpush1.msra.mxu0 %v223
      %238 = vmatprep.subr.mxu0 0.0
      %239 = vmatpush1.msra.mxu0 %v222
      %240 = vmatprep.subr.mxu0 0.0
      %241 = vmatpush1.msra.mxu0 %v221
      %242 = vmatprep.subr.mxu0 0.0
      %243 = vmatpush1.msra.mxu0 %v220
      %244 = vmatprep.subr.mxu0 0.0
      %245 = vmatpush1.msra.mxu0 %v219
      %246 = vmatprep.subr.mxu0 0.0
      %247 = vmatpush1.msra.mxu0 %v218
      %248 = vmatprep.subr.mxu0 0.0
      %249 = vmatpush1.msra.mxu0 %v217
      %250 = vmatprep.subr.mxu0 0.0
      %251 = vmatpush1.msra.mxu0 %v216
      %252 = vmatprep.subr.mxu0 0.0
      %253 = vmatpush1.msra.mxu0 %v215
      %254 = vmatprep.subr.mxu0 0.0
      %255 = vmatpush1.msra.mxu0 %v214
      %256 = vmatprep.subr.mxu0 0.0
      %257 = vmatpush1.msra.mxu0 %v213
      %258 = vmatprep.subr.mxu0 0.0
      %259 = vmatpush1.msra.mxu0 %v212
      %260 = vmatprep.subr.mxu0 0.0
      %261 = vmatpush2.msra.mxu0 0.0
      %262 = vmatprep.subr.mxu0 0.0
      %263 = vmatpush2.msra.mxu0 0.0
      %264 = vmatprep.subr.mxu0 0.0
      %265 = vmatpush2.msra.mxu0 0.0
      %266 = vmatprep.subr.mxu0 0.0
      %267 = vmatpush2.msra.mxu0 0.0
      %268 = vmatprep.subr.mxu0 0.0
      %269 = vmatpush2.msra.mxu0 0.0
      %270 = vmatprep.subr.mxu0 0.0
      %271 = vmatpush2.msra.mxu0 0.0
      %272 = vmatprep.subr.mxu0 0.0
      %273 = vmatpush2.msra.mxu0 0.0
      %274 = vmatprep.subr.mxu0 0.0
      %275 = vmatpush2.msra.mxu0 0.0
      %276 = vmatprep.subr.mxu0 0.0
      %277 = vmatpush2.msra.mxu0 0.0
      %278 = vmatprep.subr.mxu0 0.0
      %279 = vmatpush2.msra.mxu0 0.0
      %280 = vmatprep.subr.mxu0 0.0
      %281 = vmatpush2.msra.mxu0 0.0
      %282 = vmatprep.subr.mxu0 0.0
      %283 = vmatpush2.msra.mxu0 0.0
      %284 = vmatprep.subr.mxu0 0.0
      %285 = vmatpush2.msra.mxu0 0.0
      %286 = vmatprep.subr.mxu0 0.0
      %287 = vmatpush2.msra.mxu0 0.0
      %288 = vmatprep.subr.mxu0 0.0
      %289 = vmatpush2.msra.mxu0 0.0
      %290 = vmatprep.subr.mxu0 0.0
      %291 = vmatpush2.msra.mxu0 0.0
      %292 = vmatprep.mubr.f32.mxu0 0.0
      %293 = vmatmul.mubr.f32.gmra.mxu0 %v196
      %v294 = vpop.f32.mrf.mxu0
      %v295 = vadd.f32 0.0, %v294
      %v296 = vpop.f32.mrf.mxu0
      %297 = vmatprep.mubr.f32.mxu0 0.0
      %298 = vmatmul.mubr.f32.gmra.mxu0 %v197
      %v299 = vpop.f32.mrf.mxu0
      %v300 = vadd.f32 0.0, %v299
      %v301 = vpop.f32.mrf.mxu0
      %302 = vmatprep.mubr.f32.mxu0 0.0
      %303 = vmatmul.mubr.f32.gmra.mxu0 %v198
      %v304 = vpop.f32.mrf.mxu0
      %v305 = vadd.f32 0.0, %v304
      %v306 = vpop.f32.mrf.mxu0
      %307 = vmatprep.mubr.f32.mxu0 0.0
      %308 = vmatmul.mubr.f32.gmra.mxu0 %v199
      %v309 = vpop.f32.mrf.mxu0
      %v310 = vadd.f32 0.0, %v309
      %v311 = vpop.f32.mrf.mxu0
      %312 = vmatprep.mubr.f32.mxu0 0.0
      %313 = vmatmul.mubr.f32.gmra.mxu0 %v200
      %v314 = vpop.f32.mrf.mxu0
      %v315 = vadd.f32 0.0, %v314
      %v316 = vpop.f32.mrf.mxu0
      %317 = vmatprep.mubr.f32.mxu0 0.0
      %318 = vmatmul.mubr.f32.gmra.mxu0 %v201
      %v319 = vpop.f32.mrf.mxu0
      %v320 = vadd.f32 0.0, %v319
      %v321 = vpop.f32.mrf.mxu0
      %322 = vmatprep.mubr.f32.mxu0 0.0
      %323 = vmatmul.mubr.f32.gmra.mxu0 %v202
      %v324 = vpop.f32.mrf.mxu0
      %v325 = vadd.f32 0.0, %v324
      %v326 = vpop.f32.mrf.mxu0
      %327 = vmatprep.mubr.f32.mxu0 0.0
      %328 = vmatmul.mubr.f32.gmra.mxu0 %v203
      %v329 = vpop.f32.mrf.mxu0
      %v330 = vadd.f32 0.0, %v329
      %v331 = vpop.f32.mrf.mxu0
      %332 = vmatprep.mubr.f32.mxu0 0.0
      %333 = vmatmul.mubr.f32.gmra.mxu0 %v204
      %v334 = vpop.f32.mrf.mxu0
      %v335 = vadd.f32 0.0, %v334
      %v336 = vpop.f32.mrf.mxu0
      %337 = vmatprep.mubr.f32.mxu0 0.0
      %338 = vmatmul.mubr.f32.gmra.mxu0 %v205
      %v339 = vpop.f32.mrf.mxu0
      %v340 = vadd.f32 0.0, %v339
      %v341 = vpop.f32.mrf.mxu0
      %342 = vmatprep.mubr.f32.mxu0 0.0
      %343 = vmatmul.mubr.f32.gmra.mxu0 %v206
      %v344 = vpop.f32.mrf.mxu0
      %v345 = vadd.f32 0.0, %v344
      %v346 = vpop.f32.mrf.mxu0
      %347 = vmatprep.mubr.f32.mxu0 0.0
      %348 = vmatmul.mubr.f32.gmra.mxu0 %v207
      %v349 = vpop.f32.mrf.mxu0
      %v350 = vadd.f32 0.0, %v349
      %v351 = vpop.f32.mrf.mxu0
      %352 = vmatprep.mubr.f32.mxu0 0.0
      %353 = vmatmul.mubr.f32.gmra.mxu0 %v208
      %v354 = vpop.f32.mrf.mxu0
      %v355 = vadd.f32 0.0, %v354
      %v356 = vpop.f32.mrf.mxu0
      %357 = vmatprep.mubr.f32.mxu0 0.0
      %358 = vmatmul.mubr.f32.gmra.mxu0 %v209
      %v359 = vpop.f32.mrf.mxu0
      %v360 = vadd.f32 0.0, %v359
      %v361 = vpop.f32.mrf.mxu0
      %362 = vmatprep.mubr.f32.mxu0 0.0
      %363 = vmatmul.mubr.f32.gmra.mxu0 %v210
      %v364 = vpop.f32.mrf.mxu0
      %v365 = vadd.f32 0.0, %v364
      %v366 = vpop.f32.mrf.mxu0
      %367 = vmatprep.mubr.f32.mxu0 0.0
      %368 = vmatmul.mubr.f32.gmra.mxu0 %v211
      %v369 = vpop.f32.mrf.mxu0
      %v370 = vadd.f32 0.0, %v369
      %v371 = vpop.f32.mrf.mxu0
      %372 = vdwg.mxu0
      %v373 = vld [vmem:[%s188] sm:$0xff]
      %v374 = vld [vmem:[%s188 + $0x8] sm:$0xff]
      %v375 = vld [vmem:[%s188 + $0x10] sm:$0xff]
      %v376 = vld [vmem:[%s188 + $0x18] sm:$0xff]
      %v377 = vld [vmem:[%s188 + $0x20] sm:$0xff]
      %v378 = vld [vmem:[%s188 + $0x28] sm:$0xff]
      %v379 = vld [vmem:[%s188 + $0x30] sm:$0xff]
      %v380 = vld [vmem:[%s188 + $0x38] sm:$0xff]
      %v381 = vld [vmem:[%s188 + $0x40] sm:$0xff]
      %v382 = vld [vmem:[%s188 + $0x48] sm:$0xff]
      %v383 = vld [vmem:[%s188 + $0x50] sm:$0xff]
      %v384 = vld [vmem:[%s188 + $0x58] sm:$0xff]
      %v385 = vld [vmem:[%s188 + $0x60] sm:$0xff]
      %v386 = vld [vmem:[%s188 + $0x68] sm:$0xff]
      %v387 = vld [vmem:[%s188 + $0x70] sm:$0xff]
      %v388 = vld [vmem:[%s188 + $0x78] sm:$0xff]
      %390 = vset.pattern.permute.xlu0 0
      %391 = vperm.xlu0 %390, %v373
      %v392 = vpop.permute.xlu0 %391
      %395 = vset.pattern.permute.xlu0 0
      %396 = vperm.xlu0 %395, %v374
      %v397 = vpop.permute.xlu0 %396
      %400 = vset.pattern.permute.xlu0 0
      %401 = vperm.xlu0 %400, %v375
      %v402 = vpop.permute.xlu0 %401
      %405 = vset.pattern.permute.xlu0 0
      %406 = vperm.xlu0 %405, %v376
      %v407 = vpop.permute.xlu0 %406
      %410 = vset.pattern.permute.xlu0 0
      %411 = vperm.xlu0 %410, %v377
      %v412 = vpop.permute.xlu0 %411
      %415 = vset.pattern.permute.xlu0 0
      %416 = vperm.xlu0 %415, %v378
      %v417 = vpop.permute.xlu0 %416
      %420 = vset.pattern.permute.xlu0 0
      %421 = vperm.xlu0 %420, %v379
      %v422 = vpop.permute.xlu0 %421
      %425 = vset.pattern.permute.xlu0 0
      %426 = vperm.xlu0 %425, %v380
      %v427 = vpop.permute.xlu0 %426
      %430 = vset.pattern.permute.xlu0 0
      %431 = vperm.xlu0 %430, %v381
      %v432 = vpop.permute.xlu0 %431
      %435 = vset.pattern.permute.xlu0 0
      %436 = vperm.xlu0 %435, %v382
      %v437 = vpop.permute.xlu0 %436
      %440 = vset.pattern.permute.xlu0 0
      %441 = vperm.xlu0 %440, %v383
      %v442 = vpop.permute.xlu0 %441
      %445 = vset.pattern.permute.xlu0 0
      %446 = vperm.xlu0 %445, %v384
      %v447 = vpop.permute.xlu0 %446
      %450 = vset.pattern.permute.xlu0 0
      %451 = vperm.xlu0 %450, %v385
      %v452 = vpop.permute.xlu0 %451
      %455 = vset.pattern.permute.xlu0 0
      %456 = vperm.xlu0 %455, %v386
      %v457 = vpop.permute.xlu0 %456
      %460 = vset.pattern.permute.xlu0 0
      %461 = vperm.xlu0 %460, %v387
      %v462 = vpop.permute.xlu0 %461
      %465 = vset.pattern.permute.xlu0 0
      %466 = vperm.xlu0 %465, %v388
      %v467 = vpop.permute.xlu0 %466
      %v469 = vmul.f32 %v392, %v295
      %v470 = vmul.f32 %v397, %v300
      %v471 = vmul.f32 %v402, %v305
      %v472 = vmul.f32 %v407, %v310
      %v473 = vmul.f32 %v412, %v315
      %v474 = vmul.f32 %v417, %v320
      %v475 = vmul.f32 %v422, %v325
      %v476 = vmul.f32 %v427, %v330
      %v477 = vmul.f32 %v432, %v335
      %v478 = vmul.f32 %v437, %v340
      %v479 = vmul.f32 %v442, %v345
      %v480 = vmul.f32 %v447, %v350
      %v481 = vmul.f32 %v452, %v355
      %v482 = vmul.f32 %v457, %v360
      %v483 = vmul.f32 %v462, %v365
      %v484 = vmul.f32 %v467, %v370
      %v485 = vpack.c.bf16 %v470, %v469
      %v486 = vpack.c.bf16 %v472, %v471
      %v487 = vpack.c.bf16 %v474, %v473
      %v488 = vpack.c.bf16 %v476, %v475
      %v489 = vpack.c.bf16 %v478, %v477
      %v490 = vpack.c.bf16 %v480, %v479
      %v491 = vpack.c.bf16 %v482, %v481
      %v492 = vpack.c.bf16 %v484, %v483
      %v501 = vunpack.c.l.b16 %v485
      %v502 = vunpack.c.h.b16 %v485
      %v503 = vunpack.c.l.b16 %v486
      %v504 = vunpack.c.h.b16 %v486
      %v505 = vunpack.c.l.b16 %v487
      %v506 = vunpack.c.h.b16 %v487
      %v507 = vunpack.c.l.b16 %v488
      %v508 = vunpack.c.h.b16 %v488
      %v509 = vunpack.c.l.b16 %v489
      %v510 = vunpack.c.h.b16 %v489
      %v511 = vunpack.c.l.b16 %v490
      %v512 = vunpack.c.h.b16 %v490
      %v513 = vunpack.c.l.b16 %v491
      %v514 = vunpack.c.h.b16 %v491
      %v515 = vunpack.c.l.b16 %v492
      %v516 = vunpack.c.h.b16 %v492
      %v517 = vpack.c.b16 %v501, %v501
      %v518 = vpack.c.b16 %v502, %v502
      %v519 = vpack.c.b16 %v503, %v503
      %v520 = vpack.c.b16 %v504, %v504
      %v521 = vpack.c.b16 %v505, %v505
      %v522 = vpack.c.b16 %v506, %v506
      %v523 = vpack.c.b16 %v507, %v507
      %v524 = vpack.c.b16 %v508, %v508
      %v525 = vpack.c.b16 %v509, %v509
      %v526 = vpack.c.b16 %v510, %v510
      %v527 = vpack.c.b16 %v511, %v511
      %v528 = vpack.c.b16 %v512, %v512
      %v529 = vpack.c.b16 %v513, %v513
      %v530 = vpack.c.b16 %v514, %v514
      %v531 = vpack.c.b16 %v515, %v515
      %v532 = vpack.c.b16 %v516, %v516
      %549 = vst [vmem:[%s194] sm:$0xf] %v517
      %550 = vst [vmem:[%s194 + $0x4] sm:$0xf] %v518
      %551 = vst [vmem:[%s194 + $0x8] sm:$0xf] %v519
      %552 = vst [vmem:[%s194 + $0xc] sm:$0xf] %v520
      %553 = vst [vmem:[%s194 + $0x10] sm:$0xf] %v521
      %554 = vst [vmem:[%s194 + $0x14] sm:$0xf] %v522
      %555 = vst [vmem:[%s194 + $0x18] sm:$0xf] %v523
      %556 = vst [vmem:[%s194 + $0x1c] sm:$0xf] %v524
      %557 = vst [vmem:[%s194 + $0x20] sm:$0xf] %v525
      %558 = vst [vmem:[%s194 + $0x24] sm:$0xf] %v526
      %559 = vst [vmem:[%s194 + $0x28] sm:$0xf] %v527
      %560 = vst [vmem:[%s194 + $0x2c] sm:$0xf] %v528
      %561 = vst [vmem:[%s194 + $0x30] sm:$0xf] %v529
      %562 = vst [vmem:[%s194 + $0x34] sm:$0xf] %v530
      %563 = vst [vmem:[%s194 + $0x38] sm:$0xf] %v531
      %564 = vst [vmem:[%s194 + $0x3c] sm:$0xf] %v532
      %s565 = smul.u32 16, %s14
      %p566 = scmp.lt.s32.totalorder %s565, 63
      %s567 = scalar_select %p566, %s565, 63
      %s568 = smul.addr %s567, 4
      %s569 = scalar_lea.vmem %s3, %s568
      // Predicated region
      $region33: #{gcn_decor_forward.8} parent=31 // pred_check
        %p570 = pneg %p105
      $region34: #{gcn_decor_forward.8} parent=31 // pred_check_branch
        %572 = sbr.rel (%p570) target = $region36
      $region35: #{gcn_decor_forward.8} parent=31 // pred_region
        %s573 = smul.u32 16, %s14
      $region36: #{gcn_decor_forward.8} parent=31 // pred_fallthru
        _
    $region32: #{gcn_decor_forward.8} parent=5 // pred_fallthru
      _
    %p574 = scmp.le.s32.totalorder 2, %s9
    // Predicated region
    $region37: #{gcn_decor_forward.8} parent=5 // pred_check
      %p575 = pneg %p574
    $region38: #{gcn_decor_forward.8} parent=5 // pred_check_branch
      %577 = sbr.rel (%p575) target = $region40
    $region39: #{gcn_decor_forward.8} parent=5 // pred_region
      %s578 = ssub.s32 %s9, 2
      // Predicated region
      $region41: #{gcn_decor_forward.8} parent=39 // pred_check
        %p579 = pneg %p111
      $region42: #{gcn_decor_forward.8} parent=39 // pred_check_branch
        %581 = sbr.rel (%p579) target = $region44
      $region43: #{gcn_decor_forward.8} parent=39 // pred_region
        %s582 = smul.u32 16, %s15
        %p583 = scmp.lt.s32.totalorder %s582, 63
        %s584 = scalar_select %p583, %s582, 63
        %s585 = smul.addr %s584, 4
        %s586 = scalar_lea.vmem %s3, %s585
      $region44: #{gcn_decor_forward.8} parent=39 // pred_fallthru
        _
    $region40: #{gcn_decor_forward.8} parent=5 // pred_fallthru
      _
  $region6: #{gcn_decor_forward.8} parent=0 // loop_footer
    %s13 = sadd.s32 1, %s9
  $region7: #{gcn_decor_forward.8} parent=0 // loop_footer_branch
    %8 = sbr.rel target = $region3
  $region8: #{gcn_decor_forward.8} parent=0 // loop_exit
    _

</llo_original>
